<compile_context>
chip_gen: v5e
topology: v5e:2x2
jax: 0.10.0
libtpu: 0.0.40
codegen_flags: <defaults>
</compile_context>

<pallas_src>
import numpy as np
import jax
import jax.numpy as jnp
from jax.experimental import pallas as pl
from jax.experimental.pallas import tpu as pltpu


# ----------------------------- fused kernel ---------------------------------

def _make_fused_edsr_kernel(n_resblocks):
    """Builds the fused EDSR forward kernel (one batch element per grid step)."""

    def im2col(pad_ref, act):
        # act: (h, w, f); pad_ref: (h+2, w+2, f) scratch whose halo stays zero.
        h, wd, f = act.shape
        pad_ref[1:h + 1, 1:wd + 1, :] = act          # interior write only
        padded = pad_ref[...]                        # (h+2, w+2, f)
        cols = [padded[dy:dy + h, dx:dx + wd, :].reshape(h * wd, f)
                for dy in range(3) for dx in range(3)]
        return jnp.concatenate(cols, axis=1)         # (h*wd, 9f)

    def conv(pad_ref, act, w, b, relu=False):
        h, wd, f = act.shape
        y = jnp.dot(im2col(pad_ref, act), w, preferred_element_type=jnp.float32) + b
        if relu:
            y = jnp.maximum(y, 0.0)
        return y.reshape(h, wd, f)

    def kernel(x_ref, w_ref, b_ref, wt_ref, bt_ref, o_ref, pad_s):
        # Zero the halo scratch once; interiors are rewritten before every use.
        pad_s[...] = jnp.zeros_like(pad_s)

        x = x_ref[0]                                             # (H, W, F)
        h0 = conv(pad_s, x, w_ref[0], b_ref[0])                  # head
        res = h0
        li = 1
        for _ in range(n_resblocks):
            t = conv(pad_s, res, w_ref[li], b_ref[li], relu=True)       # conv + act
            res = conv(pad_s, t, w_ref[li + 1], b_ref[li + 1]) + res    # conv + skip
            li += 2
        res = conv(pad_s, res, w_ref[li], b_ref[li]) + h0        # body conv + global skip

        # tail = conv3x3(nearest_upsample(res)) folded into ONE phase-major matmul:
        #   (H*W, 9F) @ (9F, scale^2*F)  -> lane-dense output block.
        y = jnp.dot(im2col(pad_s, res), wt_ref[...],
                    preferred_element_type=jnp.float32) + bt_ref[...]
        o_ref[0] = y.astype(o_ref.dtype)                         # (H*W, scale^2*F)

    return kernel


def _fold_tail_through_upsample(w_tail, b_tail, scale):
    """Fold a 3x3 conv applied to a nearest x`scale` upsampled image into
    per-phase effective 3x3 kernels on the low-res grid.

    Returns (w_eff, b_eff) with shapes ((9F, scale^2*F), (1, scale^2*F)),
    phase-major columns: column block p = a*scale + b holds the weights that
    produce output pixel (scale*i + a, scale*j + b) from low-res patches at (i, j).
    """
    F = w_tail.shape[-1]
    s = scale
    sel = np.zeros((s * s, 9, 9), np.float32)     # [phase, low-res tap, hi-res tap]
    for a in range(s):
        for b in range(s):
            p = a * s + b
            for dy in (-1, 0, 1):
                for dx in (-1, 0, 1):
                    oy = (a + dy) // s            # low-res row offset in {-1,0,1}
                    ox = (b + dx) // s            # low-res col offset in {-1,0,1}
                    sel[p, (oy + 1) * 3 + (ox + 1), (dy + 1) * 3 + (dx + 1)] += 1.0
    w9 = w_tail.reshape(9, F, F)                                  # hi-res taps
    k_eff = jnp.einsum("pod,dif->poif", jnp.asarray(sel), w9)     # (s*s, 9, F, F)
    w_eff = jnp.transpose(k_eff.reshape(s * s, 9 * F, F), (1, 0, 2))
    w_eff = w_eff.reshape(9 * F, s * s * F)
    b_eff = jnp.tile(b_tail.reshape(1, F), (1, s * s)).reshape(1, s * s * F)
    return w_eff, b_eff


def _edsr_forward(x_nchw, params, scale=4):
    n_feats = params["head"][0].shape[-1]
    n_resblocks = len(params["blocks"])
    F = n_feats
    s = scale

    x = jnp.transpose(x_nchw, (0, 2, 3, 1)).astype(jnp.float32)  # NCHW -> NHWC
    N, H, W, Cin = x.shape
    if Cin < F:                                                  # inert zero channels
        x = jnp.pad(x, ((0, 0), (0, 0), (0, 0), (0, F - Cin)))

    # Stack head/body conv weights as (n_conv, 9F, F) and biases as (n_conv, 1, F).
    def flat(w, pad_cin_to=None):
        if pad_cin_to is not None and w.shape[2] < pad_cin_to:
            w = jnp.pad(w, ((0, 0), (0, 0), (0, pad_cin_to - w.shape[2]), (0, 0)))
        return w.reshape(9 * F, F)

    ws = [flat(params["head"][0], F)]
    bs = [params["head"][1]]
    for (w1, b1, w2, b2) in params["blocks"]:
        ws += [flat(w1), flat(w2)]
        bs += [b1, b2]
    ws.append(flat(params["body"][0])); bs.append(params["body"][1])
    w_all = jnp.stack(ws, axis=0)                                # (n_conv, 9F, F)
    b_all = jnp.stack(bs, axis=0).reshape(-1, 1, F)              # (n_conv, 1, F)
    n_conv = w_all.shape[0]

    # Tail conv folded through the nearest upsample.
    w_tail, b_tail = _fold_tail_through_upsample(params["tail"][0],
                                                 params["tail"][1], s)

    kernel = _make_fused_edsr_kernel(n_resblocks)

    flops = int(N * 2 * H * W * 9 * F * (F * (2 * n_resblocks + 2) + s * s * F))
    bytes_accessed = int(4 * (x.size + w_all.size + b_all.size
                              + w_tail.size + b_tail.size + N * H * W * s * s * F))

    y = pl.pallas_call(
        kernel,
        out_shape=jax.ShapeDtypeStruct((N, H * W, s * s * F), jnp.float32),
        grid=(N,),
        in_specs=[
            pl.BlockSpec((1, H, W, F), lambda n: (n, 0, 0, 0)),          # activations
            pl.BlockSpec((n_conv, 9 * F, F), lambda n: (0, 0, 0)),       # head/body weights
            pl.BlockSpec((n_conv, 1, F), lambda n: (0, 0, 0)),           # head/body biases
            pl.BlockSpec((9 * F, s * s * F), lambda n: (0, 0)),          # folded tail weights
            pl.BlockSpec((1, s * s * F), lambda n: (0, 0)),              # folded tail bias
        ],
        out_specs=pl.BlockSpec((1, H * W, s * s * F), lambda n: (n, 0, 0)),
        scratch_shapes=[
            pltpu.VMEM((H + 2, W + 2, F), jnp.float32),                  # halo buffer
        ],
        compiler_params=pltpu.CompilerParams(
            dimension_semantics=("parallel",),
            vmem_limit_bytes=64 * 1024 * 1024),
        cost_estimate=pl.CostEstimate(flops=flops, transcendentals=0,
                                      bytes_accessed=bytes_accessed),
    )(x, w_all, b_all, w_tail, b_tail)

    # De-interleave phases (cheap XLA reshuffle on the small output):
    # (N, H*W, s*s*F) -> (N, H, W, s, s, F) -> (N, F, s*H, s*W)  (NCHW)
    y = y.reshape(N, H, W, s, s, F)
    y = jnp.transpose(y, (0, 5, 1, 3, 2, 4)).reshape(N, F, s * H, s * W)
    return y


edsr_forward = jax.jit(_edsr_forward, static_argnames=("scale",))


# ----------------------------- parameters -----------------------------------

def init_edsr_params(key, n_inputs=1, n_feats=32, n_resblocks=2):
    def conv_init(k, cin, cout):
        kw, kb = jax.random.split(k)
        fan_in = 9 * cin
        w = jax.random.normal(kw, (3, 3, cin, cout), jnp.float32) / jnp.sqrt(fan_in)
        b = 0.01 * jax.random.normal(kb, (cout,), jnp.float32)
        return w, b

    keys = jax.random.split(key, 2 * n_resblocks + 3)
    params = {
        "head": conv_init(keys[0], n_inputs, n_feats),
        "blocks": [],
        "body": conv_init(keys[2 * n_resblocks + 1], n_feats, n_feats),
        "tail": conv_init(keys[2 * n_resblocks + 2], n_feats, n_feats),
    }
    for i in range(n_resblocks):
        w1, b1 = conv_init(keys[1 + 2 * i], n_feats, n_feats)
        w2, b2 = conv_init(keys[2 + 2 * i], n_feats, n_feats)
        params["blocks"].append((w1, b1, w2, b2))
    return params


# ----------------------------- pure-JAX reference ----------------------------

def _ref_conv(x, w, b, relu=False, residual=None):
    y = jax.lax.conv_general_dilated(
        x, w, (1, 1), "SAME",
        dimension_numbers=("NHWC", "HWIO", "NHWC"),
        precision=jax.lax.Precision.HIGHEST)
    y = y + b
    if relu:
        y = jnp.maximum(y, 0.0)
    if residual is not None:
        y = y + residual
    return y


def edsr_ref(x_nchw, params, scale=4):
    x = jnp.transpose(x_nchw, (0, 2, 3, 1)).astype(jnp.float32)
    hw, hb = params["head"]
    h = _ref_conv(x, hw, hb)
    res = h
    for (w1, b1, w2, b2) in params["blocks"]:
        t = _ref_conv(res, w1, b1, relu=True)
        res = _ref_conv(t, w2, b2, residual=res)
    bw, bb = params["body"]
    res = _ref_conv(res, bw, bb, residual=h)
    res = jnp.repeat(jnp.repeat(res, scale, axis=1), scale, axis=2)  # nearest
    tw, tb = params["tail"]
    out = _ref_conv(res, tw, tb)
    return jnp.transpose(out, (0, 3, 1, 2))


# ------------------------------------ main -----------------------------------

if __name__ == "__main__":
    key = jax.random.PRNGKey(0)
    kx, kp = jax.random.split(key)

    N, C_IN, H, W = 2, 1, 8, 8          # small, consistent with EDSR(n_inputs=1)
    N_FEATS, N_RESBLOCKS, SCALE = 32, 2, 4

    x = jax.random.normal(kx, (N, C_IN, H, W), jnp.float32)
    params = init_edsr_params(kp, n_inputs=C_IN, n_feats=N_FEATS,
                              n_resblocks=N_RESBLOCKS)

    out = jax.block_until_ready(edsr_forward(x, params, scale=SCALE))
    assert out.shape == (N, N_FEATS, SCALE * H, SCALE * W), out.shape

    ref = jax.block_until_ready(edsr_ref(x, params, scale=SCALE))
    assert bool(jnp.all(jnp.isfinite(out)))
    max_err = float(jnp.max(jnp.abs(out - ref)))
    assert bool(jnp.allclose(out, ref, atol=5e-2, rtol=5e-2)), f"mismatch {max_err}"

    print("KERNEL_OK")
</pallas_src>

<mosaic_0001>
module attributes {stable_mosaic.version = 11 : i64} {
  func.func @kernel(%arg0: i32, %arg1: memref<1x8x8x32xf32, #tpu.memory_space<vmem>>, %arg2: memref<6x288x32xf32, #tpu.memory_space<vmem>>, %arg3: memref<6x1x32xf32, #tpu.memory_space<vmem>>, %arg4: memref<288x512xf32, #tpu.memory_space<vmem>>, %arg5: memref<1x512xf32, #tpu.memory_space<vmem>>, %arg6: memref<1x64x512xf32, #tpu.memory_space<vmem>>, %arg7: memref<10x10x32xf32, #tpu.memory_space<vmem>>) attributes {dimension_semantics = [#tpu.dimension_semantics<parallel>], iteration_bounds = array<i64: 2>, scalar_prefetch = 0 : i64, scratch_operands = 1 : i64, tpu.core_type = #tpu.core_type<tc>, window_params = [{transform_indices = @transform_0, window_bounds = array<i64: 1, 8, 8, 32>}, {pipeline_mode = #tpu.pipeline_mode<synchronous>, transform_indices = @transform_1, window_bounds = array<i64: 6, 288, 32>}, {pipeline_mode = #tpu.pipeline_mode<synchronous>, transform_indices = @transform_2, window_bounds = array<i64: 6, 1, 32>}, {pipeline_mode = #tpu.pipeline_mode<synchronous>, transform_indices = @transform_3, window_bounds = array<i64: 288, 512>}, {pipeline_mode = #tpu.pipeline_mode<synchronous>, transform_indices = @transform_4, window_bounds = array<i64: 1, 512>}, {transform_indices = @transform_5, window_bounds = array<i64: 1, 64, 512>}]} {
    %cst = arith.constant 0.000000e+00 : f32
    %0 = vector.broadcast %cst : f32 to vector<10x10x32xf32>
    %c0 = arith.constant 0 : index
    %c0_0 = arith.constant 0 : index
    %c0_1 = arith.constant 0 : index
    %1 = vector.load %arg7[%c0, %c0_0, %c0_1] : memref<10x10x32xf32, #tpu.memory_space<vmem>>, vector<10x10x32xf32>
    tpu.vector_store %arg7[%c0, %c0_0, %c0_1], %0 {strides = array<i32>} : memref<10x10x32xf32, #tpu.memory_space<vmem>>, vector<10x10x32xf32>,
    %c0_2 = arith.constant 0 : index
    %c0_3 = arith.constant 0 : index
    %c0_4 = arith.constant 0 : index
    %c0_5 = arith.constant 0 : index
    %2 = vector.load %arg1[%c0_2, %c0_3, %c0_4, %c0_5] : memref<1x8x8x32xf32, #tpu.memory_space<vmem>>, vector<1x8x8x32xf32>
    %3 = vector.shape_cast %2 : vector<1x8x8x32xf32> to vector<8x8x32xf32>
    %c0_6 = arith.constant 0 : index
    %c0_7 = arith.constant 0 : index
    %c0_8 = arith.constant 0 : index
    %4 = vector.load %arg2[%c0_6, %c0_7, %c0_8] : memref<6x288x32xf32, #tpu.memory_space<vmem>>, vector<1x288x32xf32>
    %5 = vector.shape_cast %4 : vector<1x288x32xf32> to vector<288x32xf32>
    %c0_9 = arith.constant 0 : index
    %c0_10 = arith.constant 0 : index
    %c0_11 = arith.constant 0 : index
    %6 = vector.load %arg3[%c0_9, %c0_10, %c0_11] : memref<6x1x32xf32, #tpu.memory_space<vmem>>, vector<1x1x32xf32>
    %7 = vector.shape_cast %6 : vector<1x1x32xf32> to vector<1x32xf32>
    %c1 = arith.constant 1 : index
    %c1_12 = arith.constant 1 : index
    %c0_13 = arith.constant 0 : index
    %8 = vector.load %arg7[%c1, %c1_12, %c0_13] : memref<10x10x32xf32, #tpu.memory_space<vmem>>, vector<8x8x32xf32>
    tpu.vector_store %arg7[%c1, %c1_12, %c0_13], %3 {strides = array<i32>} : memref<10x10x32xf32, #tpu.memory_space<vmem>>, vector<8x8x32xf32>,
    %c0_14 = arith.constant 0 : index
    %c0_15 = arith.constant 0 : index
    %c0_16 = arith.constant 0 : index
    %9 = vector.load %arg7[%c0_14, %c0_15, %c0_16] : memref<10x10x32xf32, #tpu.memory_space<vmem>>, vector<10x10x32xf32>
    %10 = vector.extract_strided_slice %9 {offsets = [0, 0, 0], sizes = [8, 8, 32], strides = [1, 1, 1]} : vector<10x10x32xf32> to vector<8x8x32xf32>
    %11 = vector.shape_cast %10 : vector<8x8x32xf32> to vector<64x32xf32>
    %12 = vector.extract_strided_slice %9 {offsets = [0, 1, 0], sizes = [8, 8, 32], strides = [1, 1, 1]} : vector<10x10x32xf32> to vector<8x8x32xf32>
    %13 = vector.shape_cast %12 : vector<8x8x32xf32> to vector<64x32xf32>
    %14 = vector.extract_strided_slice %9 {offsets = [0, 2, 0], sizes = [8, 8, 32], strides = [1, 1, 1]} : vector<10x10x32xf32> to vector<8x8x32xf32>
    %15 = vector.shape_cast %14 : vector<8x8x32xf32> to vector<64x32xf32>
    %16 = vector.extract_strided_slice %9 {offsets = [1, 0, 0], sizes = [8, 8, 32], strides = [1, 1, 1]} : vector<10x10x32xf32> to vector<8x8x32xf32>
    %17 = vector.shape_cast %16 : vector<8x8x32xf32> to vector<64x32xf32>
    %18 = vector.extract_strided_slice %9 {offsets = [1, 1, 0], sizes = [8, 8, 32], strides = [1, 1, 1]} : vector<10x10x32xf32> to vector<8x8x32xf32>
    %19 = vector.shape_cast %18 : vector<8x8x32xf32> to vector<64x32xf32>
    %20 = vector.extract_strided_slice %9 {offsets = [1, 2, 0], sizes = [8, 8, 32], strides = [1, 1, 1]} : vector<10x10x32xf32> to vector<8x8x32xf32>
    %21 = vector.shape_cast %20 : vector<8x8x32xf32> to vector<64x32xf32>
    %22 = vector.extract_strided_slice %9 {offsets = [2, 0, 0], sizes = [8, 8, 32], strides = [1, 1, 1]} : vector<10x10x32xf32> to vector<8x8x32xf32>
    %23 = vector.shape_cast %22 : vector<8x8x32xf32> to vector<64x32xf32>
    %24 = vector.extract_strided_slice %9 {offsets = [2, 1, 0], sizes = [8, 8, 32], strides = [1, 1, 1]} : vector<10x10x32xf32> to vector<8x8x32xf32>
    %25 = vector.shape_cast %24 : vector<8x8x32xf32> to vector<64x32xf32>
    %26 = vector.extract_strided_slice %9 {offsets = [2, 2, 0], sizes = [8, 8, 32], strides = [1, 1, 1]} : vector<10x10x32xf32> to vector<8x8x32xf32>
    %27 = vector.shape_cast %26 : vector<8x8x32xf32> to vector<64x32xf32>
    %28 = tpu.concatenate %11, %13, %15, %17, %19, %21, %23, %25, %27 in 1 : vector<64x32xf32>, vector<64x32xf32>, vector<64x32xf32>, vector<64x32xf32>, vector<64x32xf32>, vector<64x32xf32>, vector<64x32xf32>, vector<64x32xf32>, vector<64x32xf32> -> vector<64x288xf32>
    %cst_17 = arith.constant dense<0.000000e+00> : vector<64x32xf32>
    %29 = tpu.matmul %28, %5, %cst_17 {dimension_numbers = #tpu.dot_dimension_numbers<[1], [0], [0], [1], [0, 0, 1, 1], [], []>} : vector<64x288xf32>, vector<288x32xf32>, vector<64x32xf32> -> vector<64x32xf32>
    %30 = vector.broadcast %7 : vector<1x32xf32> to vector<64x32xf32>
    %31 = arith.addf %29, %30 : vector<64x32xf32>
    %32 = vector.shape_cast %31 : vector<64x32xf32> to vector<8x8x32xf32>
    %c1_18 = arith.constant 1 : index
    %c0_19 = arith.constant 0 : index
    %c0_20 = arith.constant 0 : index
    %33 = vector.load %arg2[%c1_18, %c0_19, %c0_20] : memref<6x288x32xf32, #tpu.memory_space<vmem>>, vector<1x288x32xf32>
    %34 = vector.shape_cast %33 : vector<1x288x32xf32> to vector<288x32xf32>
    %c1_21 = arith.constant 1 : index
    %c0_22 = arith.constant 0 : index
    %c0_23 = arith.constant 0 : index
    %35 = vector.load %arg3[%c1_21, %c0_22, %c0_23] : memref<6x1x32xf32, #tpu.memory_space<vmem>>, vector<1x1x32xf32>
    %36 = vector.shape_cast %35 : vector<1x1x32xf32> to vector<1x32xf32>
    %c1_24 = arith.constant 1 : index
    %c1_25 = arith.constant 1 : index
    %c0_26 = arith.constant 0 : index
    %37 = vector.load %arg7[%c1_24, %c1_25, %c0_26] : memref<10x10x32xf32, #tpu.memory_space<vmem>>, vector<8x8x32xf32>
    tpu.vector_store %arg7[%c1_24, %c1_25, %c0_26], %32 {strides = array<i32>} : memref<10x10x32xf32, #tpu.memory_space<vmem>>, vector<8x8x32xf32>,
    %c0_27 = arith.constant 0 : index
    %c0_28 = arith.constant 0 : index
    %c0_29 = arith.constant 0 : index
    %38 = vector.load %arg7[%c0_27, %c0_28, %c0_29] : memref<10x10x32xf32, #tpu.memory_space<vmem>>, vector<10x10x32xf32>
    %39 = vector.extract_strided_slice %38 {offsets = [0, 0, 0], sizes = [8, 8, 32], strides = [1, 1, 1]} : vector<10x10x32xf32> to vector<8x8x32xf32>
    %40 = vector.shape_cast %39 : vector<8x8x32xf32> to vector<64x32xf32>
    %41 = vector.extract_strided_slice %38 {offsets = [0, 1, 0], sizes = [8, 8, 32], strides = [1, 1, 1]} : vector<10x10x32xf32> to vector<8x8x32xf32>
    %42 = vector.shape_cast %41 : vector<8x8x32xf32> to vector<64x32xf32>
    %43 = vector.extract_strided_slice %38 {offsets = [0, 2, 0], sizes = [8, 8, 32], strides = [1, 1, 1]} : vector<10x10x32xf32> to vector<8x8x32xf32>
    %44 = vector.shape_cast %43 : vector<8x8x32xf32> to vector<64x32xf32>
    %45 = vector.extract_strided_slice %38 {offsets = [1, 0, 0], sizes = [8, 8, 32], strides = [1, 1, 1]} : vector<10x10x32xf32> to vector<8x8x32xf32>
    %46 = vector.shape_cast %45 : vector<8x8x32xf32> to vector<64x32xf32>
    %47 = vector.extract_strided_slice %38 {offsets = [1, 1, 0], sizes = [8, 8, 32], strides = [1, 1, 1]} : vector<10x10x32xf32> to vector<8x8x32xf32>
    %48 = vector.shape_cast %47 : vector<8x8x32xf32> to vector<64x32xf32>
    %49 = vector.extract_strided_slice %38 {offsets = [1, 2, 0], sizes = [8, 8, 32], strides = [1, 1, 1]} : vector<10x10x32xf32> to vector<8x8x32xf32>
    %50 = vector.shape_cast %49 : vector<8x8x32xf32> to vector<64x32xf32>
    %51 = vector.extract_strided_slice %38 {offsets = [2, 0, 0], sizes = [8, 8, 32], strides = [1, 1, 1]} : vector<10x10x32xf32> to vector<8x8x32xf32>
    %52 = vector.shape_cast %51 : vector<8x8x32xf32> to vector<64x32xf32>
    %53 = vector.extract_strided_slice %38 {offsets = [2, 1, 0], sizes = [8, 8, 32], strides = [1, 1, 1]} : vector<10x10x32xf32> to vector<8x8x32xf32>
    %54 = vector.shape_cast %53 : vector<8x8x32xf32> to vector<64x32xf32>
    %55 = vector.extract_strided_slice %38 {offsets = [2, 2, 0], sizes = [8, 8, 32], strides = [1, 1, 1]} : vector<10x10x32xf32> to vector<8x8x32xf32>
    %56 = vector.shape_cast %55 : vector<8x8x32xf32> to vector<64x32xf32>
    %57 = tpu.concatenate %40, %42, %44, %46, %48, %50, %52, %54, %56 in 1 : vector<64x32xf32>, vector<64x32xf32>, vector<64x32xf32>, vector<64x32xf32>, vector<64x32xf32>, vector<64x32xf32>, vector<64x32xf32>, vector<64x32xf32>, vector<64x32xf32> -> vector<64x288xf32>
    %cst_30 = arith.constant dense<0.000000e+00> : vector<64x32xf32>
    %58 = tpu.matmul %57, %34, %cst_30 {dimension_numbers = #tpu.dot_dimension_numbers<[1], [0], [0], [1], [0, 0, 1, 1], [], []>} : vector<64x288xf32>, vector<288x32xf32>, vector<64x32xf32> -> vector<64x32xf32>
    %59 = vector.broadcast %36 : vector<1x32xf32> to vector<64x32xf32>
    %60 = arith.addf %58, %59 : vector<64x32xf32>
    %cst_31 = arith.constant 0.000000e+00 : f32
    %61 = vector.broadcast %cst_31 : f32 to vector<64x32xf32>
    %62 = arith.maximumf %60, %61 : vector<64x32xf32>
    %63 = vector.shape_cast %62 : vector<64x32xf32> to vector<8x8x32xf32>
    %c2 = arith.constant 2 : index
    %c0_32 = arith.constant 0 : index
    %c0_33 = arith.constant 0 : index
    %64 = vector.load %arg2[%c2, %c0_32, %c0_33] : memref<6x288x32xf32, #tpu.memory_space<vmem>>, vector<1x288x32xf32>
    %65 = vector.shape_cast %64 : vector<1x288x32xf32> to vector<288x32xf32>
    %c2_34 = arith.constant 2 : index
    %c0_35 = arith.constant 0 : index
    %c0_36 = arith.constant 0 : index
    %66 = vector.load %arg3[%c2_34, %c0_35, %c0_36] : memref<6x1x32xf32, #tpu.memory_space<vmem>>, vector<1x1x32xf32>
    %67 = vector.shape_cast %66 : vector<1x1x32xf32> to vector<1x32xf32>
    %c1_37 = arith.constant 1 : index
    %c1_38 = arith.constant 1 : index
    %c0_39 = arith.constant 0 : index
    %68 = vector.load %arg7[%c1_37, %c1_38, %c0_39] : memref<10x10x32xf32, #tpu.memory_space<vmem>>, vector<8x8x32xf32>
    tpu.vector_store %arg7[%c1_37, %c1_38, %c0_39], %63 {strides = array<i32>} : memref<10x10x32xf32, #tpu.memory_space<vmem>>, vector<8x8x32xf32>,
    %c0_40 = arith.constant 0 : index
    %c0_41 = arith.constant 0 : index
    %c0_42 = arith.constant 0 : index
    %69 = vector.load %arg7[%c0_40, %c0_41, %c0_42] : memref<10x10x32xf32, #tpu.memory_space<vmem>>, vector<10x10x32xf32>
    %70 = vector.extract_strided_slice %69 {offsets = [0, 0, 0], sizes = [8, 8, 32], strides = [1, 1, 1]} : vector<10x10x32xf32> to vector<8x8x32xf32>
    %71 = vector.shape_cast %70 : vector<8x8x32xf32> to vector<64x32xf32>
    %72 = vector.extract_strided_slice %69 {offsets = [0, 1, 0], sizes = [8, 8, 32], strides = [1, 1, 1]} : vector<10x10x32xf32> to vector<8x8x32xf32>
    %73 = vector.shape_cast %72 : vector<8x8x32xf32> to vector<64x32xf32>
    %74 = vector.extract_strided_slice %69 {offsets = [0, 2, 0], sizes = [8, 8, 32], strides = [1, 1, 1]} : vector<10x10x32xf32> to vector<8x8x32xf32>
    %75 = vector.shape_cast %74 : vector<8x8x32xf32> to vector<64x32xf32>
    %76 = vector.extract_strided_slice %69 {offsets = [1, 0, 0], sizes = [8, 8, 32], strides = [1, 1, 1]} : vector<10x10x32xf32> to vector<8x8x32xf32>
    %77 = vector.shape_cast %76 : vector<8x8x32xf32> to vector<64x32xf32>
    %78 = vector.extract_strided_slice %69 {offsets = [1, 1, 0], sizes = [8, 8, 32], strides = [1, 1, 1]} : vector<10x10x32xf32> to vector<8x8x32xf32>
    %79 = vector.shape_cast %78 : vector<8x8x32xf32> to vector<64x32xf32>
    %80 = vector.extract_strided_slice %69 {offsets = [1, 2, 0], sizes = [8, 8, 32], strides = [1, 1, 1]} : vector<10x10x32xf32> to vector<8x8x32xf32>
    %81 = vector.shape_cast %80 : vector<8x8x32xf32> to vector<64x32xf32>
    %82 = vector.extract_strided_slice %69 {offsets = [2, 0, 0], sizes = [8, 8, 32], strides = [1, 1, 1]} : vector<10x10x32xf32> to vector<8x8x32xf32>
    %83 = vector.shape_cast %82 : vector<8x8x32xf32> to vector<64x32xf32>
    %84 = vector.extract_strided_slice %69 {offsets = [2, 1, 0], sizes = [8, 8, 32], strides = [1, 1, 1]} : vector<10x10x32xf32> to vector<8x8x32xf32>
    %85 = vector.shape_cast %84 : vector<8x8x32xf32> to vector<64x32xf32>
    %86 = vector.extract_strided_slice %69 {offsets = [2, 2, 0], sizes = [8, 8, 32], strides = [1, 1, 1]} : vector<10x10x32xf32> to vector<8x8x32xf32>
    %87 = vector.shape_cast %86 : vector<8x8x32xf32> to vector<64x32xf32>
    %88 = tpu.concatenate %71, %73, %75, %77, %79, %81, %83, %85, %87 in 1 : vector<64x32xf32>, vector<64x32xf32>, vector<64x32xf32>, vector<64x32xf32>, vector<64x32xf32>, vector<64x32xf32>, vector<64x32xf32>, vector<64x32xf32>, vector<64x32xf32> -> vector<64x288xf32>
    %cst_43 = arith.constant dense<0.000000e+00> : vector<64x32xf32>
    %89 = tpu.matmul %88, %65, %cst_43 {dimension_numbers = #tpu.dot_dimension_numbers<[1], [0], [0], [1], [0, 0, 1, 1], [], []>} : vector<64x288xf32>, vector<288x32xf32>, vector<64x32xf32> -> vector<64x32xf32>
    %90 = vector.broadcast %67 : vector<1x32xf32> to vector<64x32xf32>
    %91 = arith.addf %89, %90 : vector<64x32xf32>
    %92 = vector.shape_cast %91 : vector<64x32xf32> to vector<8x8x32xf32>
    %93 = arith.addf %92, %32 : vector<8x8x32xf32>
    %c3 = arith.constant 3 : index
    %c0_44 = arith.constant 0 : index
    %c0_45 = arith.constant 0 : index
    %94 = vector.load %arg2[%c3, %c0_44, %c0_45] : memref<6x288x32xf32, #tpu.memory_space<vmem>>, vector<1x288x32xf32>
    %95 = vector.shape_cast %94 : vector<1x288x32xf32> to vector<288x32xf32>
    %c3_46 = arith.constant 3 : index
    %c0_47 = arith.constant 0 : index
    %c0_48 = arith.constant 0 : index
    %96 = vector.load %arg3[%c3_46, %c0_47, %c0_48] : memref<6x1x32xf32, #tpu.memory_space<vmem>>, vector<1x1x32xf32>
    %97 = vector.shape_cast %96 : vector<1x1x32xf32> to vector<1x32xf32>
    %c1_49 = arith.constant 1 : index
    %c1_50 = arith.constant 1 : index
    %c0_51 = arith.constant 0 : index
    %98 = vector.load %arg7[%c1_49, %c1_50, %c0_51] : memref<10x10x32xf32, #tpu.memory_space<vmem>>, vector<8x8x32xf32>
    tpu.vector_store %arg7[%c1_49, %c1_50, %c0_51], %93 {strides = array<i32>} : memref<10x10x32xf32, #tpu.memory_space<vmem>>, vector<8x8x32xf32>,
    %c0_52 = arith.constant 0 : index
    %c0_53 = arith.constant 0 : index
    %c0_54 = arith.constant 0 : index
    %99 = vector.load %arg7[%c0_52, %c0_53, %c0_54] : memref<10x10x32xf32, #tpu.memory_space<vmem>>, vector<10x10x32xf32>
    %100 = vector.extract_strided_slice %99 {offsets = [0, 0, 0], sizes = [8, 8, 32], strides = [1, 1, 1]} : vector<10x10x32xf32> to vector<8x8x32xf32>
    %101 = vector.shape_cast %100 : vector<8x8x32xf32> to vector<64x32xf32>
    %102 = vector.extract_strided_slice %99 {offsets = [0, 1, 0], sizes = [8, 8, 32], strides = [1, 1, 1]} : vector<10x10x32xf32> to vector<8x8x32xf32>
    %103 = vector.shape_cast %102 : vector<8x8x32xf32> to vector<64x32xf32>
    %104 = vector.extract_strided_slice %99 {offsets = [0, 2, 0], sizes = [8, 8, 32], strides = [1, 1, 1]} : vector<10x10x32xf32> to vector<8x8x32xf32>
    %105 = vector.shape_cast %104 : vector<8x8x32xf32> to vector<64x32xf32>
    %106 = vector.extract_strided_slice %99 {offsets = [1, 0, 0], sizes = [8, 8, 32], strides = [1, 1, 1]} : vector<10x10x32xf32> to vector<8x8x32xf32>
    %107 = vector.shape_cast %106 : vector<8x8x32xf32> to vector<64x32xf32>
    %108 = vector.extract_strided_slice %99 {offsets = [1, 1, 0], sizes = [8, 8, 32], strides = [1, 1, 1]} : vector<10x10x32xf32> to vector<8x8x32xf32>
    %109 = vector.shape_cast %108 : vector<8x8x32xf32> to vector<64x32xf32>
    %110 = vector.extract_strided_slice %99 {offsets = [1, 2, 0], sizes = [8, 8, 32], strides = [1, 1, 1]} : vector<10x10x32xf32> to vector<8x8x32xf32>
    %111 = vector.shape_cast %110 : vector<8x8x32xf32> to vector<64x32xf32>
    %112 = vector.extract_strided_slice %99 {offsets = [2, 0, 0], sizes = [8, 8, 32], strides = [1, 1, 1]} : vector<10x10x32xf32> to vector<8x8x32xf32>
    %113 = vector.shape_cast %112 : vector<8x8x32xf32> to vector<64x32xf32>
    %114 = vector.extract_strided_slice %99 {offsets = [2, 1, 0], sizes = [8, 8, 32], strides = [1, 1, 1]} : vector<10x10x32xf32> to vector<8x8x32xf32>
    %115 = vector.shape_cast %114 : vector<8x8x32xf32> to vector<64x32xf32>
    %116 = vector.extract_strided_slice %99 {offsets = [2, 2, 0], sizes = [8, 8, 32], strides = [1, 1, 1]} : vector<10x10x32xf32> to vector<8x8x32xf32>
    %117 = vector.shape_cast %116 : vector<8x8x32xf32> to vector<64x32xf32>
    %118 = tpu.concatenate %101, %103, %105, %107, %109, %111, %113, %115, %117 in 1 : vector<64x32xf32>, vector<64x32xf32>, vector<64x32xf32>, vector<64x32xf32>, vector<64x32xf32>, vector<64x32xf32>, vector<64x32xf32>, vector<64x32xf32>, vector<64x32xf32> -> vector<64x288xf32>
    %cst_55 = arith.constant dense<0.000000e+00> : vector<64x32xf32>
    %119 = tpu.matmul %118, %95, %cst_55 {dimension_numbers = #tpu.dot_dimension_numbers<[1], [0], [0], [1], [0, 0, 1, 1], [], []>} : vector<64x288xf32>, vector<288x32xf32>, vector<64x32xf32> -> vector<64x32xf32>
    %120 = vector.broadcast %97 : vector<1x32xf32> to vector<64x32xf32>
    %121 = arith.addf %119, %120 : vector<64x32xf32>
    %cst_56 = arith.constant 0.000000e+00 : f32
    %122 = vector.broadcast %cst_56 : f32 to vector<64x32xf32>
    %123 = arith.maximumf %121, %122 : vector<64x32xf32>
    %124 = vector.shape_cast %123 : vector<64x32xf32> to vector<8x8x32xf32>
    %c4 = arith.constant 4 : index
    %c0_57 = arith.constant 0 : index
    %c0_58 = arith.constant 0 : index
    %125 = vector.load %arg2[%c4, %c0_57, %c0_58] : memref<6x288x32xf32, #tpu.memory_space<vmem>>, vector<1x288x32xf32>
    %126 = vector.shape_cast %125 : vector<1x288x32xf32> to vector<288x32xf32>
    %c4_59 = arith.constant 4 : index
    %c0_60 = arith.constant 0 : index
    %c0_61 = arith.constant 0 : index
    %127 = vector.load %arg3[%c4_59, %c0_60, %c0_61] : memref<6x1x32xf32, #tpu.memory_space<vmem>>, vector<1x1x32xf32>
    %128 = vector.shape_cast %127 : vector<1x1x32xf32> to vector<1x32xf32>
    %c1_62 = arith.constant 1 : index
    %c1_63 = arith.constant 1 : index
    %c0_64 = arith.constant 0 : index
    %129 = vector.load %arg7[%c1_62, %c1_63, %c0_64] : memref<10x10x32xf32, #tpu.memory_space<vmem>>, vector<8x8x32xf32>
    tpu.vector_store %arg7[%c1_62, %c1_63, %c0_64], %124 {strides = array<i32>} : memref<10x10x32xf32, #tpu.memory_space<vmem>>, vector<8x8x32xf32>,
    %c0_65 = arith.constant 0 : index
    %c0_66 = arith.constant 0 : index
    %c0_67 = arith.constant 0 : index
    %130 = vector.load %arg7[%c0_65, %c0_66, %c0_67] : memref<10x10x32xf32, #tpu.memory_space<vmem>>, vector<10x10x32xf32>
    %131 = vector.extract_strided_slice %130 {offsets = [0, 0, 0], sizes = [8, 8, 32], strides = [1, 1, 1]} : vector<10x10x32xf32> to vector<8x8x32xf32>
    %132 = vector.shape_cast %131 : vector<8x8x32xf32> to vector<64x32xf32>
    %133 = vector.extract_strided_slice %130 {offsets = [0, 1, 0], sizes = [8, 8, 32], strides = [1, 1, 1]} : vector<10x10x32xf32> to vector<8x8x32xf32>
    %134 = vector.shape_cast %133 : vector<8x8x32xf32> to vector<64x32xf32>
    %135 = vector.extract_strided_slice %130 {offsets = [0, 2, 0], sizes = [8, 8, 32], strides = [1, 1, 1]} : vector<10x10x32xf32> to vector<8x8x32xf32>
    %136 = vector.shape_cast %135 : vector<8x8x32xf32> to vector<64x32xf32>
    %137 = vector.extract_strided_slice %130 {offsets = [1, 0, 0], sizes = [8, 8, 32], strides = [1, 1, 1]} : vector<10x10x32xf32> to vector<8x8x32xf32>
    %138 = vector.shape_cast %137 : vector<8x8x32xf32> to vector<64x32xf32>
    %139 = vector.extract_strided_slice %130 {offsets = [1, 1, 0], sizes = [8, 8, 32], strides = [1, 1, 1]} : vector<10x10x32xf32> to vector<8x8x32xf32>
    %140 = vector.shape_cast %139 : vector<8x8x32xf32> to vector<64x32xf32>
    %141 = vector.extract_strided_slice %130 {offsets = [1, 2, 0], sizes = [8, 8, 32], strides = [1, 1, 1]} : vector<10x10x32xf32> to vector<8x8x32xf32>
    %142 = vector.shape_cast %141 : vector<8x8x32xf32> to vector<64x32xf32>
    %143 = vector.extract_strided_slice %130 {offsets = [2, 0, 0], sizes = [8, 8, 32], strides = [1, 1, 1]} : vector<10x10x32xf32> to vector<8x8x32xf32>
    %144 = vector.shape_cast %143 : vector<8x8x32xf32> to vector<64x32xf32>
    %145 = vector.extract_strided_slice %130 {offsets = [2, 1, 0], sizes = [8, 8, 32], strides = [1, 1, 1]} : vector<10x10x32xf32> to vector<8x8x32xf32>
    %146 = vector.shape_cast %145 : vector<8x8x32xf32> to vector<64x32xf32>
    %147 = vector.extract_strided_slice %130 {offsets = [2, 2, 0], sizes = [8, 8, 32], strides = [1, 1, 1]} : vector<10x10x32xf32> to vector<8x8x32xf32>
    %148 = vector.shape_cast %147 : vector<8x8x32xf32> to vector<64x32xf32>
    %149 = tpu.concatenate %132, %134, %136, %138, %140, %142, %144, %146, %148 in 1 : vector<64x32xf32>, vector<64x32xf32>, vector<64x32xf32>, vector<64x32xf32>, vector<64x32xf32>, vector<64x32xf32>, vector<64x32xf32>, vector<64x32xf32>, vector<64x32xf32> -> vector<64x288xf32>
    %cst_68 = arith.constant dense<0.000000e+00> : vector<64x32xf32>
    %150 = tpu.matmul %149, %126, %cst_68 {dimension_numbers = #tpu.dot_dimension_numbers<[1], [0], [0], [1], [0, 0, 1, 1], [], []>} : vector<64x288xf32>, vector<288x32xf32>, vector<64x32xf32> -> vector<64x32xf32>
    %151 = vector.broadcast %128 : vector<1x32xf32> to vector<64x32xf32>
    %152 = arith.addf %150, %151 : vector<64x32xf32>
    %153 = vector.shape_cast %152 : vector<64x32xf32> to vector<8x8x32xf32>
    %154 = arith.addf %153, %93 : vector<8x8x32xf32>
    %c5 = arith.constant 5 : index
    %c0_69 = arith.constant 0 : index
    %c0_70 = arith.constant 0 : index
    %155 = vector.load %arg2[%c5, %c0_69, %c0_70] : memref<6x288x32xf32, #tpu.memory_space<vmem>>, vector<1x288x32xf32>
    %156 = vector.shape_cast %155 : vector<1x288x32xf32> to vector<288x32xf32>
    %c5_71 = arith.constant 5 : index
    %c0_72 = arith.constant 0 : index
    %c0_73 = arith.constant 0 : index
    %157 = vector.load %arg3[%c5_71, %c0_72, %c0_73] : memref<6x1x32xf32, #tpu.memory_space<vmem>>, vector<1x1x32xf32>
    %158 = vector.shape_cast %157 : vector<1x1x32xf32> to vector<1x32xf32>
    %c1_74 = arith.constant 1 : index
    %c1_75 = arith.constant 1 : index
    %c0_76 = arith.constant 0 : index
    %159 = vector.load %arg7[%c1_74, %c1_75, %c0_76] : memref<10x10x32xf32, #tpu.memory_space<vmem>>, vector<8x8x32xf32>
    tpu.vector_store %arg7[%c1_74, %c1_75, %c0_76], %154 {strides = array<i32>} : memref<10x10x32xf32, #tpu.memory_space<vmem>>, vector<8x8x32xf32>,
    %c0_77 = arith.constant 0 : index
    %c0_78 = arith.constant 0 : index
    %c0_79 = arith.constant 0 : index
    %160 = vector.load %arg7[%c0_77, %c0_78, %c0_79] : memref<10x10x32xf32, #tpu.memory_space<vmem>>, vector<10x10x32xf32>
    %161 = vector.extract_strided_slice %160 {offsets = [0, 0, 0], sizes = [8, 8, 32], strides = [1, 1, 1]} : vector<10x10x32xf32> to vector<8x8x32xf32>
    %162 = vector.shape_cast %161 : vector<8x8x32xf32> to vector<64x32xf32>
    %163 = vector.extract_strided_slice %160 {offsets = [0, 1, 0], sizes = [8, 8, 32], strides = [1, 1, 1]} : vector<10x10x32xf32> to vector<8x8x32xf32>
    %164 = vector.shape_cast %163 : vector<8x8x32xf32> to vector<64x32xf32>
    %165 = vector.extract_strided_slice %160 {offsets = [0, 2, 0], sizes = [8, 8, 32], strides = [1, 1, 1]} : vector<10x10x32xf32> to vector<8x8x32xf32>
    %166 = vector.shape_cast %165 : vector<8x8x32xf32> to vector<64x32xf32>
    %167 = vector.extract_strided_slice %160 {offsets = [1, 0, 0], sizes = [8, 8, 32], strides = [1, 1, 1]} : vector<10x10x32xf32> to vector<8x8x32xf32>
    %168 = vector.shape_cast %167 : vector<8x8x32xf32> to vector<64x32xf32>
    %169 = vector.extract_strided_slice %160 {offsets = [1, 1, 0], sizes = [8, 8, 32], strides = [1, 1, 1]} : vector<10x10x32xf32> to vector<8x8x32xf32>
    %170 = vector.shape_cast %169 : vector<8x8x32xf32> to vector<64x32xf32>
    %171 = vector.extract_strided_slice %160 {offsets = [1, 2, 0], sizes = [8, 8, 32], strides = [1, 1, 1]} : vector<10x10x32xf32> to vector<8x8x32xf32>
    %172 = vector.shape_cast %171 : vector<8x8x32xf32> to vector<64x32xf32>
    %173 = vector.extract_strided_slice %160 {offsets = [2, 0, 0], sizes = [8, 8, 32], strides = [1, 1, 1]} : vector<10x10x32xf32> to vector<8x8x32xf32>
    %174 = vector.shape_cast %173 : vector<8x8x32xf32> to vector<64x32xf32>
    %175 = vector.extract_strided_slice %160 {offsets = [2, 1, 0], sizes = [8, 8, 32], strides = [1, 1, 1]} : vector<10x10x32xf32> to vector<8x8x32xf32>
    %176 = vector.shape_cast %175 : vector<8x8x32xf32> to vector<64x32xf32>
    %177 = vector.extract_strided_slice %160 {offsets = [2, 2, 0], sizes = [8, 8, 32], strides = [1, 1, 1]} : vector<10x10x32xf32> to vector<8x8x32xf32>
    %178 = vector.shape_cast %177 : vector<8x8x32xf32> to vector<64x32xf32>
    %179 = tpu.concatenate %162, %164, %166, %168, %170, %172, %174, %176, %178 in 1 : vector<64x32xf32>, vector<64x32xf32>, vector<64x32xf32>, vector<64x32xf32>, vector<64x32xf32>, vector<64x32xf32>, vector<64x32xf32>, vector<64x32xf32>, vector<64x32xf32> -> vector<64x288xf32>
    %cst_80 = arith.constant dense<0.000000e+00> : vector<64x32xf32>
    %180 = tpu.matmul %179, %156, %cst_80 {dimension_numbers = #tpu.dot_dimension_numbers<[1], [0], [0], [1], [0, 0, 1, 1], [], []>} : vector<64x288xf32>, vector<288x32xf32>, vector<64x32xf32> -> vector<64x32xf32>
    %181 = vector.broadcast %158 : vector<1x32xf32> to vector<64x32xf32>
    %182 = arith.addf %180, %181 : vector<64x32xf32>
    %183 = vector.shape_cast %182 : vector<64x32xf32> to vector<8x8x32xf32>
    %184 = arith.addf %183, %32 : vector<8x8x32xf32>
    %c1_81 = arith.constant 1 : index
    %c1_82 = arith.constant 1 : index
    %c0_83 = arith.constant 0 : index
    %185 = vector.load %arg7[%c1_81, %c1_82, %c0_83] : memref<10x10x32xf32, #tpu.memory_space<vmem>>, vector<8x8x32xf32>
    tpu.vector_store %arg7[%c1_81, %c1_82, %c0_83], %184 {strides = array<i32>} : memref<10x10x32xf32, #tpu.memory_space<vmem>>, vector<8x8x32xf32>,
    %c0_84 = arith.constant 0 : index
    %c0_85 = arith.constant 0 : index
    %c0_86 = arith.constant 0 : index
    %186 = vector.load %arg7[%c0_84, %c0_85, %c0_86] : memref<10x10x32xf32, #tpu.memory_space<vmem>>, vector<10x10x32xf32>
    %187 = vector.extract_strided_slice %186 {offsets = [0, 0, 0], sizes = [8, 8, 32], strides = [1, 1, 1]} : vector<10x10x32xf32> to vector<8x8x32xf32>
    %188 = vector.shape_cast %187 : vector<8x8x32xf32> to vector<64x32xf32>
    %189 = vector.extract_strided_slice %186 {offsets = [0, 1, 0], sizes = [8, 8, 32], strides = [1, 1, 1]} : vector<10x10x32xf32> to vector<8x8x32xf32>
    %190 = vector.shape_cast %189 : vector<8x8x32xf32> to vector<64x32xf32>
    %191 = vector.extract_strided_slice %186 {offsets = [0, 2, 0], sizes = [8, 8, 32], strides = [1, 1, 1]} : vector<10x10x32xf32> to vector<8x8x32xf32>
    %192 = vector.shape_cast %191 : vector<8x8x32xf32> to vector<64x32xf32>
    %193 = vector.extract_strided_slice %186 {offsets = [1, 0, 0], sizes = [8, 8, 32], strides = [1, 1, 1]} : vector<10x10x32xf32> to vector<8x8x32xf32>
    %194 = vector.shape_cast %193 : vector<8x8x32xf32> to vector<64x32xf32>
    %195 = vector.extract_strided_slice %186 {offsets = [1, 1, 0], sizes = [8, 8, 32], strides = [1, 1, 1]} : vector<10x10x32xf32> to vector<8x8x32xf32>
    %196 = vector.shape_cast %195 : vector<8x8x32xf32> to vector<64x32xf32>
    %197 = vector.extract_strided_slice %186 {offsets = [1, 2, 0], sizes = [8, 8, 32], strides = [1, 1, 1]} : vector<10x10x32xf32> to vector<8x8x32xf32>
    %198 = vector.shape_cast %197 : vector<8x8x32xf32> to vector<64x32xf32>
    %199 = vector.extract_strided_slice %186 {offsets = [2, 0, 0], sizes = [8, 8, 32], strides = [1, 1, 1]} : vector<10x10x32xf32> to vector<8x8x32xf32>
    %200 = vector.shape_cast %199 : vector<8x8x32xf32> to vector<64x32xf32>
    %201 = vector.extract_strided_slice %186 {offsets = [2, 1, 0], sizes = [8, 8, 32], strides = [1, 1, 1]} : vector<10x10x32xf32> to vector<8x8x32xf32>
    %202 = vector.shape_cast %201 : vector<8x8x32xf32> to vector<64x32xf32>
    %203 = vector.extract_strided_slice %186 {offsets = [2, 2, 0], sizes = [8, 8, 32], strides = [1, 1, 1]} : vector<10x10x32xf32> to vector<8x8x32xf32>
    %204 = vector.shape_cast %203 : vector<8x8x32xf32> to vector<64x32xf32>
    %205 = tpu.concatenate %188, %190, %192, %194, %196, %198, %200, %202, %204 in 1 : vector<64x32xf32>, vector<64x32xf32>, vector<64x32xf32>, vector<64x32xf32>, vector<64x32xf32>, vector<64x32xf32>, vector<64x32xf32>, vector<64x32xf32>, vector<64x32xf32> -> vector<64x288xf32>
    %c0_87 = arith.constant 0 : index
    %c0_88 = arith.constant 0 : index
    %206 = vector.load %arg4[%c0_87, %c0_88] : memref<288x512xf32, #tpu.memory_space<vmem>>, vector<288x512xf32>
    %cst_89 = arith.constant dense<0.000000e+00> : vector<64x512xf32>
    %207 = tpu.matmul %205, %206, %cst_89 {dimension_numbers = #tpu.dot_dimension_numbers<[1], [0], [0], [1], [0, 0, 1, 1], [], []>} : vector<64x288xf32>, vector<288x512xf32>, vector<64x512xf32> -> vector<64x512xf32>
    %c0_90 = arith.constant 0 : index
    %c0_91 = arith.constant 0 : index
    %208 = vector.load %arg5[%c0_90, %c0_91] : memref<1x512xf32, #tpu.memory_space<vmem>>, vector<1x512xf32>
    %209 = vector.broadcast %208 : vector<1x512xf32> to vector<64x512xf32>
    %210 = arith.addf %207, %209 : vector<64x512xf32>
    %c0_92 = arith.constant 0 : index
    %c0_93 = arith.constant 0 : index
    %c0_94 = arith.constant 0 : index
    %211 = vector.load %arg6[%c0_92, %c0_93, %c0_94] : memref<1x64x512xf32, #tpu.memory_space<vmem>>, vector<1x64x512xf32>
    %212 = vector.shape_cast %211 : vector<1x64x512xf32> to vector<64x512xf32>
    %213 = vector.shape_cast %210 : vector<64x512xf32> to vector<1x64x512xf32>
    tpu.vector_store %arg6[%c0_92, %c0_93, %c0_94], %213 {strides = array<i32>} : memref<1x64x512xf32, #tpu.memory_space<vmem>>, vector<1x64x512xf32>,
    return
  }
  func.func @transform_0(%arg0: i32) -> (i32, i32, i32, i32) {
    %c0_i32 = arith.constant 0 : i32
    %c0_i32_0 = arith.constant 0 : i32
    %c0_i32_1 = arith.constant 0 : i32
    %c0_i32_2 = arith.constant 0 : i32
    return %arg0, %c0_i32, %c0_i32_0, %c0_i32_1 : i32, i32, i32, i32
  }
  func.func @transform_1(%arg0: i32) -> (i32, i32, i32) {
    %c0_i32 = arith.constant 0 : i32
    %c0_i32_0 = arith.constant 0 : i32
    %c0_i32_1 = arith.constant 0 : i32
    %c0_i32_2 = arith.constant 0 : i32
    return %c0_i32, %c0_i32_0, %c0_i32_1 : i32, i32, i32
  }
  func.func @transform_2(%arg0: i32) -> (i32, i32, i32) {
    %c0_i32 = arith.constant 0 : i32
    %c0_i32_0 = arith.constant 0 : i32
    %c0_i32_1 = arith.constant 0 : i32
    %c0_i32_2 = arith.constant 0 : i32
    return %c0_i32, %c0_i32_0, %c0_i32_1 : i32, i32, i32
  }
  func.func @transform_3(%arg0: i32) -> (i32, i32) {
    %c0_i32 = arith.constant 0 : i32
    %c0_i32_0 = arith.constant 0 : i32
    %c0_i32_1 = arith.constant 0 : i32
    return %c0_i32, %c0_i32_0 : i32, i32
  }
  func.func @transform_4(%arg0: i32) -> (i32, i32) {
    %c0_i32 = arith.constant 0 : i32
    %c0_i32_0 = arith.constant 0 : i32
    %c0_i32_1 = arith.constant 0 : i32
    return %c0_i32, %c0_i32_0 : i32, i32
  }
  func.func @transform_5(%arg0: i32) -> (i32, i32, i32) {
    %c0_i32 = arith.constant 0 : i32
    %c0_i32_0 = arith.constant 0 : i32
    %c0_i32_1 = arith.constant 0 : i32
    return %arg0, %c0_i32, %c0_i32_0 : i32, i32, i32
  }
}

</mosaic_0001>

<llo_original>
// kernel: _edsr_forward.1
$region0: #{_edsr_forward.1}
  #allocation0 [shape = 'u32[]', space=smem, size = 0x4, offset = 0x4, fixed_abs, tag = 'smem constant byte address 0x4 - core index']
  #allocation1 [shape = 'u32[72,128]{1,0:T(1,128)}', space=vmem, size = 0x9000, scoped, tag = 'internal scratch']
  #allocation2 [shape = 'f32[10,10,32]{2,1,0:T(8,128)}', space=vmem, size = 0x14000, scoped, tag = 'scratch operand']
  %s0 = inlined_call_operand.vmem [shape: f32[2,8,8,32], index: 0, kind: input, shape index: {}]
  %s1 = inlined_call_operand.vmem [shape: f32[6,288,32], index: 1, kind: input, shape index: {}]
  %s2 = inlined_call_operand.vmem [shape: f32[6,1,32], index: 2, kind: input, shape index: {}]
  %s3 = inlined_call_operand.vmem [shape: f32[288,512], index: 3, kind: input, shape index: {}]
  %s4 = inlined_call_operand.vmem [shape: f32[1,512], index: 4, kind: input, shape index: {}]
  %s5 = inlined_call_operand.vmem [shape: f32[2,64,512], index: 5, kind: output, shape index: {}]
  %s6 = sld [smem:[#allocation0]]
  $region53: #{_edsr_forward.1} parent=0
    _
  %s8 = ssub.s32 1, %s6
  %s9 = scalar_select 0, %s8, %s6
  loop: start=0, step=1, limit=4
  $region2: #{_edsr_forward.1} parent=0 // loop_pre_header
    _
  $region3: #{_edsr_forward.1} parent=0 // loop_header
    %s11 = sphi 0, %s15
    %p12 = scmp.ge.s32.totalorder %s11, 4
    %s21 = sphi 0, %s23
    %s24 = sphi 0, %s21
    %s25 = sphi 0, %s24
    %s41 = sphi 0, %s25
    %s45 = sphi 0, %s45
    %s47 = sphi 0, %s45
    %s48 = sphi 0, %s47
    %s62 = sphi 0, %s48
    %s66 = sphi 0, %s66
    %s68 = sphi 0, %s66
    %s69 = sphi 0, %s68
    %s83 = sphi 0, %s69
    %s87 = sphi 0, %s87
    %s89 = sphi 0, %s87
    %s90 = sphi 0, %s89
    %s104 = sphi 0, %s90
    %s108 = sphi 0, %s108
    %s110 = sphi 0, %s108
    %s111 = sphi 0, %s110
    %s125 = sphi 0, %s111
    %s131 = sphi 0, %s133
    %s134 = sphi 0, %s131
    %s135 = sphi 0, %s134
    %s151 = sphi 0, %s135
  $region4: #{_edsr_forward.1} parent=0 // loop_header_branch
    %14 = sbr.rel (%p12) target = $region8
  $region5: #{_edsr_forward.1} parent=0 // loop_body
    %s16 = ssub.s32 %s11, 1
    %s17 = ssub.s32 %s11, 2
    %s18 = sadd.s32 %s11, 1
    %s19 = ssub.s32 %s11, %s18
    %p20 = scmp.eq.s32.totalorder %s19, 0
    %s22 = sadd.s32 %s21, 1
    %s23 = scalar_select %p20, %s21, %s22
    %p26 = pneg %p20
    %p27 = scmp.eq.s32.totalorder %s11, 1
    %p28 = por %p26, %p27
    %p29 = scmp.ne.s32.totalorder %s21, %s24
    %p30 = scmp.eq.s32.totalorder %s11, 0
    %p31 = por %p29, %p30
    %p32 = scmp.ne.s32.totalorder %s21, %s24
    %p33 = scmp.eq.s32.totalorder %s16, 1
    %p34 = por %p32, %p33
    %p35 = scmp.ne.s32.totalorder %s24, %s25
    %p36 = scmp.eq.s32.totalorder %s16, 0
    %p37 = por %p35, %p36
    %p38 = scmp.ne.s32.totalorder %s24, %s25
    %p39 = scmp.eq.s32.totalorder %s17, 1
    %p40 = por %p38, %p39
    %p42 = scmp.ne.s32.totalorder %s25, %s41
    %p43 = scmp.eq.s32.totalorder %s17, 0
    %p44 = por %p42, %p43
    %s46 = sadd.s32 %s45, 1
    %p49 = scmp.eq.s32.totalorder %s11, 1
    %p50 = scmp.ne.s32.totalorder %s45, %s47
    %p51 = scmp.eq.s32.totalorder %s11, 0
    %p52 = por %p50, %p51
    %p53 = scmp.ne.s32.totalorder %s45, %s47
    %p54 = scmp.eq.s32.totalorder %s16, 1
    %p55 = por %p53, %p54
    %p56 = scmp.ne.s32.totalorder %s47, %s48
    %p57 = scmp.eq.s32.totalorder %s16, 0
    %p58 = por %p56, %p57
    %p59 = scmp.ne.s32.totalorder %s47, %s48
    %p60 = scmp.eq.s32.totalorder %s17, 1
    %p61 = por %p59, %p60
    %p63 = scmp.ne.s32.totalorder %s48, %s62
    %p64 = scmp.eq.s32.totalorder %s17, 0
    %p65 = por %p63, %p64
    %s67 = sadd.s32 %s66, 1
    %p70 = scmp.eq.s32.totalorder %s11, 1
    %p71 = scmp.ne.s32.totalorder %s66, %s68
    %p72 = scmp.eq.s32.totalorder %s11, 0
    %p73 = por %p71, %p72
    %p74 = scmp.ne.s32.totalorder %s66, %s68
    %p75 = scmp.eq.s32.totalorder %s16, 1
    %p76 = por %p74, %p75
    %p77 = scmp.ne.s32.totalorder %s68, %s69
    %p78 = scmp.eq.s32.totalorder %s16, 0
    %p79 = por %p77, %p78
    %p80 = scmp.ne.s32.totalorder %s68, %s69
    %p81 = scmp.eq.s32.totalorder %s17, 1
    %p82 = por %p80, %p81
    %p84 = scmp.ne.s32.totalorder %s69, %s83
    %p85 = scmp.eq.s32.totalorder %s17, 0
    %p86 = por %p84, %p85
    %s88 = sadd.s32 %s87, 1
    %p91 = scmp.eq.s32.totalorder %s11, 1
    %p92 = scmp.ne.s32.totalorder %s87, %s89
    %p93 = scmp.eq.s32.totalorder %s11, 0
    %p94 = por %p92, %p93
    %p95 = scmp.ne.s32.totalorder %s87, %s89
    %p96 = scmp.eq.s32.totalorder %s16, 1
    %p97 = por %p95, %p96
    %p98 = scmp.ne.s32.totalorder %s89, %s90
    %p99 = scmp.eq.s32.totalorder %s16, 0
    %p100 = por %p98, %p99
    %p101 = scmp.ne.s32.totalorder %s89, %s90
    %p102 = scmp.eq.s32.totalorder %s17, 1
    %p103 = por %p101, %p102
    %p105 = scmp.ne.s32.totalorder %s90, %s104
    %p106 = scmp.eq.s32.totalorder %s17, 0
    %p107 = por %p105, %p106
    %s109 = sadd.s32 %s108, 1
    %p112 = scmp.eq.s32.totalorder %s11, 1
    %p113 = scmp.ne.s32.totalorder %s108, %s110
    %p114 = scmp.eq.s32.totalorder %s11, 0
    %p115 = por %p113, %p114
    %p116 = scmp.ne.s32.totalorder %s108, %s110
    %p117 = scmp.eq.s32.totalorder %s16, 1
    %p118 = por %p116, %p117
    %p119 = scmp.ne.s32.totalorder %s110, %s111
    %p120 = scmp.eq.s32.totalorder %s16, 0
    %p121 = por %p119, %p120
    %p122 = scmp.ne.s32.totalorder %s110, %s111
    %p123 = scmp.eq.s32.totalorder %s17, 1
    %p124 = por %p122, %p123
    %p126 = scmp.ne.s32.totalorder %s111, %s125
    %p127 = scmp.eq.s32.totalorder %s17, 0
    %p128 = por %p126, %p127
    %s129 = ssub.s32 %s11, %s18
    %p130 = scmp.eq.s32.totalorder %s129, 0
    %s132 = sadd.s32 %s131, 1
    %s133 = scalar_select %p130, %s131, %s132
    %p136 = pneg %p130
    %p137 = scmp.eq.s32.totalorder %s11, 1
    %p138 = por %p136, %p137
    %p139 = scmp.ne.s32.totalorder %s131, %s134
    %p140 = scmp.eq.s32.totalorder %s11, 0
    %p141 = por %p139, %p140
    %p142 = scmp.ne.s32.totalorder %s131, %s134
    %p143 = scmp.eq.s32.totalorder %s16, 1
    %p144 = por %p142, %p143
    %p145 = scmp.ne.s32.totalorder %s134, %s135
    %p146 = scmp.eq.s32.totalorder %s16, 0
    %p147 = por %p145, %p146
    %p148 = scmp.ne.s32.totalorder %s134, %s135
    %p149 = scmp.eq.s32.totalorder %s17, 1
    %p150 = por %p148, %p149
    %p152 = scmp.ne.s32.totalorder %s135, %s151
    %p153 = scmp.eq.s32.totalorder %s17, 0
    %p154 = por %p152, %p153
    %p155 = scmp.le.s32.totalorder 1, %s11
    %p156 = scmp.lt.s32.totalorder %s11, 3
    %p157 = pnand %p155, %p156
    %p158 = pneg %p157
    // Predicated region
    $region9: #{_edsr_forward.1} parent=5 // pred_check
      _
    $region10: #{_edsr_forward.1} parent=5 // pred_check_branch
      %160 = sbr.rel (%p157) target = $region12
    $region11: #{_edsr_forward.1} parent=5 // pred_region
      %s161 = ssub.s32 %s11, 1
      // Predicated region
      $region13: #{_edsr_forward.1} parent=11 // pred_check
        %p162 = pneg %p58
      $region14: #{_edsr_forward.1} parent=11 // pred_check_branch
        %164 = sbr.rel (%p162) target = $region16
      $region15: #{_edsr_forward.1} parent=11 // pred_region
        _
      $region16: #{_edsr_forward.1} parent=11 // pred_fallthru
        _
      // Predicated region
      $region17: #{_edsr_forward.1} parent=11 // pred_check
        %p165 = pneg %p79
      $region18: #{_edsr_forward.1} parent=11 // pred_check_branch
        %167 = sbr.rel (%p165) target = $region20
      $region19: #{_edsr_forward.1} parent=11 // pred_region
        _
      $region20: #{_edsr_forward.1} parent=11 // pred_fallthru
        _
      // Predicated region
      $region21: #{_edsr_forward.1} parent=11 // pred_check
        %p168 = pneg %p100
      $region22: #{_edsr_forward.1} parent=11 // pred_check_branch
        %170 = sbr.rel (%p168) target = $region24
      $region23: #{_edsr_forward.1} parent=11 // pred_region
        _
      $region24: #{_edsr_forward.1} parent=11 // pred_fallthru
        _
      // Predicated region
      $region25: #{_edsr_forward.1} parent=11 // pred_check
        %p171 = pneg %p121
      $region26: #{_edsr_forward.1} parent=11 // pred_check_branch
        %173 = sbr.rel (%p171) target = $region28
      $region27: #{_edsr_forward.1} parent=11 // pred_region
        _
      $region28: #{_edsr_forward.1} parent=11 // pred_fallthru
        _
    $region12: #{_edsr_forward.1} parent=5 // pred_fallthru
      _
    %p174 = scmp.lt.s32.totalorder %s11, 2
    // Predicated region
    $region29: #{_edsr_forward.1} parent=5 // pred_check
      %p175 = pneg %p174
    $region30: #{_edsr_forward.1} parent=5 // pred_check_branch
      %177 = sbr.rel (%p175) target = $region32
    $region31: #{_edsr_forward.1} parent=5 // pred_region
      // Predicated region
      $region33: #{_edsr_forward.1} parent=31 // pred_check
        %p178 = pneg %p31
      $region34: #{_edsr_forward.1} parent=31 // pred_check_branch
        %180 = sbr.rel (%p178) target = $region36
      $region35: #{_edsr_forward.1} parent=31 // pred_region
        %p181 = scmp.lt.s32.totalorder %s11, 1
        %s182 = scalar_select %p181, %s11, 1
        %s183 = smul.addr %s182, 8
        %s184 = smul.addr %s183, 8
        %s185 = scalar_lea.vmem %s0, %s184
      $region36: #{_edsr_forward.1} parent=31 // pred_fallthru
        _
    $region32: #{_edsr_forward.1} parent=5 // pred_fallthru
      _
    %p186 = scmp.le.s32.totalorder 1, %s11
    %p187 = scmp.lt.s32.totalorder %s11, 3
    %p188 = pnand %p186, %p187
    %p189 = pneg %p188
    // Predicated region
    $region37: #{_edsr_forward.1} parent=5 // pred_check
      _
    $region38: #{_edsr_forward.1} parent=5 // pred_check_branch
      %191 = sbr.rel (%p188) target = $region40
    $region39: #{_edsr_forward.1} parent=5 // pred_region
      %s192 = ssub.s32 %s11, 1
      %p193 = scmp.lt.s32.totalorder %s16, 1
      %s194 = scalar_select %p193, %s16, 1
      %s195 = smul.addr %s194, 8
      %s196 = smul.addr %s195, 8
      %s197 = scalar_lea.vmem %s0, %s196
      %p198 = pneg %p37
      %p199 = pneg %p34
      %p200 = pneg %p58
      %p201 = pneg %p55
      %p202 = pneg %p79
      %p203 = pneg %p76
      %p204 = pneg %p100
      %p205 = pneg %p97
      %p206 = pneg %p121
      %p207 = pneg %p118
      %p208 = pneg %p147
      %p209 = pneg %p144
      %p210 = scmp.lt.s32.totalorder %s16, 1
      %s211 = scalar_select %p210, %s16, 1
      %s212 = smul.addr %s211, 32
      %s213 = smul.addr %s212, 8
      %s214 = scalar_lea.vmem %s5, %s213
      %p215 = scmp.lt.s32.totalorder %s16, 1
      %s216 = scalar_select %p215, %s16, 1
      %s217 = smul.addr %s216, 8
      %s218 = smul.addr %s217, 8
      %s219 = scalar_lea.vmem %s0, %s218
      %p220 = scmp.lt.s32.totalorder %s16, 1
      %s221 = scalar_select %p220, %s16, 1
      %s222 = smul.addr %s221, 32
      %s223 = smul.addr %s222, 8
      %s224 = scalar_lea.vmem %s5, %s223
      %vm225 = vcmask 261120
      %226 = vst.msk [vmem:[#allocation2] sm:$0xff] %vm225, 0.0
      %vm227 = vcmask 254976
      %228 = vst.msk [vmem:[#allocation2 + $0x8] sm:$0x3] %vm227, 0.0
      %229 = vst.msk [vmem:[#allocation2 + $0x10] sm:$0xff] %vm225, 0.0
      %230 = vst.msk [vmem:[#allocation2 + $0x18] sm:$0x3] %vm227, 0.0
      %231 = vst.msk [vmem:[#allocation2 + $0x20] sm:$0xff] %vm225, 0.0
      %232 = vst.msk [vmem:[#allocation2 + $0x28] sm:$0x3] %vm227, 0.0
      %233 = vst.msk [vmem:[#allocation2 + $0x30] sm:$0xff] %vm225, 0.0
      %234 = vst.msk [vmem:[#allocation2 + $0x38] sm:$0x3] %vm227, 0.0
      %235 = vst.msk [vmem:[#allocation2 + $0x40] sm:$0xff] %vm225, 0.0
      %236 = vst.msk [vmem:[#allocation2 + $0x48] sm:$0x3] %vm227, 0.0
      %237 = vst.msk [vmem:[#allocation2 + $0x50] sm:$0xff] %vm225, 0.0
      %238 = vst.msk [vmem:[#allocation2 + $0x58] sm:$0x3] %vm227, 0.0
      %239 = vst.msk [vmem:[#allocation2 + $0x60] sm:$0xff] %vm225, 0.0
      %240 = vst.msk [vmem:[#allocation2 + $0x68] sm:$0x3] %vm227, 0.0
      %241 = vst.msk [vmem:[#allocation2 + $0x70] sm:$0xff] %vm225, 0.0
      %242 = vst.msk [vmem:[#allocation2 + $0x78] sm:$0x3] %vm227, 0.0
      %243 = vst.msk [vmem:[#allocation2 + $0x80] sm:$0xff] %vm225, 0.0
      %244 = vst.msk [vmem:[#allocation2 + $0x88] sm:$0x3] %vm227, 0.0
      %245 = vst.msk [vmem:[#allocation2 + $0x90] sm:$0xff] %vm225, 0.0
      %246 = vst.msk [vmem:[#allocation2 + $0x98] sm:$0x3] %vm227, 0.0
      %v247 = vld [vmem:[%s219] sm:$0xff]
      %v248 = vld [vmem:[%s219 + $0x8] sm:$0xff]
      %v249 = vld [vmem:[%s219 + $0x10] sm:$0xff]
      %v250 = vld [vmem:[%s219 + $0x18] sm:$0xff]
      %v251 = vld [vmem:[%s219 + $0x20] sm:$0xff]
      %v252 = vld [vmem:[%s219 + $0x28] sm:$0xff]
      %v253 = vld [vmem:[%s219 + $0x30] sm:$0xff]
      %v254 = vld [vmem:[%s219 + $0x38] sm:$0xff]
      %v255 = vld [vmem:[%s1] sm:$0xff]
      %v256 = vld [vmem:[%s1 + $0x8] sm:$0xff]
      %v257 = vld [vmem:[%s1 + $0x10] sm:$0xff]
      %v258 = vld [vmem:[%s1 + $0x18] sm:$0xff]
      %v259 = vld [vmem:[%s1 + $0x20] sm:$0xff]
      %v260 = vld [vmem:[%s1 + $0x28] sm:$0xff]
      %v261 = vld [vmem:[%s1 + $0x30] sm:$0xff]
      %v262 = vld [vmem:[%s1 + $0x38] sm:$0xff]
      %v263 = vld [vmem:[%s1 + $0x40] sm:$0xff]
      %v264 = vld [vmem:[%s1 + $0x48] sm:$0xff]
      %v265 = vld [vmem:[%s1 + $0x50] sm:$0xff]
      %v266 = vld [vmem:[%s1 + $0x58] sm:$0xff]
      %v267 = vld [vmem:[%s1 + $0x60] sm:$0xff]
      %v268 = vld [vmem:[%s1 + $0x68] sm:$0xff]
      %v269 = vld [vmem:[%s1 + $0x70] sm:$0xff]
      %v270 = vld [vmem:[%s1 + $0x78] sm:$0xff]
      %v271 = vld [vmem:[%s1 + $0x80] sm:$0xff]
      %v272 = vld [vmem:[%s1 + $0x88] sm:$0xff]
      %v273 = vld [vmem:[%s1 + $0x90] sm:$0xff]
      %v274 = vld [vmem:[%s1 + $0x98] sm:$0xff]
      %v275 = vld [vmem:[%s1 + $0xa0] sm:$0xff]
      %v276 = vld [vmem:[%s1 + $0xa8] sm:$0xff]
      %v277 = vld [vmem:[%s1 + $0xb0] sm:$0xff]
      %v278 = vld [vmem:[%s1 + $0xb8] sm:$0xff]
      %v279 = vld [vmem:[%s1 + $0xc0] sm:$0xff]
      %v280 = vld [vmem:[%s1 + $0xc8] sm:$0xff]
      %v281 = vld [vmem:[%s1 + $0xd0] sm:$0xff]
      %v282 = vld [vmem:[%s1 + $0xd8] sm:$0xff]
      %v283 = vld [vmem:[%s1 + $0xe0] sm:$0xff]
      %v284 = vld [vmem:[%s1 + $0xe8] sm:$0xff]
      %v285 = vld [vmem:[%s1 + $0xf0] sm:$0xff]
      %v286 = vld [vmem:[%s1 + $0xf8] sm:$0xff]
      %v287 = vld [vmem:[%s1 + $0x100] sm:$0xff]
      %v288 = vld [vmem:[%s1 + $0x108] sm:$0xff]
      %v289 = vld [vmem:[%s1 + $0x110] sm:$0xff]
      %v290 = vld [vmem:[%s1 + $0x118] sm:$0xff]
      %v291 = vld [vmem:[%s2] sm:$0x1]
      %s292 = scalar_lea.vmem [#allocation2], 16
      %293 = vst.msk [vmem:[%s292 + $0x1] sm:$0xff] %vm225, %v247
      %294 = vst.msk [vmem:[%s292 + $0x11] sm:$0xff] %vm225, %v248
      %295 = vst.msk [vmem:[%s292 + $0x21] sm:$0xff] %vm225, %v249
      %296 = vst.msk [vmem:[%s292 + $0x31] sm:$0xff] %vm225, %v250
      %297 = vst.msk [vmem:[%s292 + $0x41] sm:$0xff] %vm225, %v251
      %298 = vst.msk [vmem:[%s292 + $0x51] sm:$0xff] %vm225, %v252
      %299 = vst.msk [vmem:[%s292 + $0x61] sm:$0xff] %vm225, %v253
      %300 = vst.msk [vmem:[%s292 + $0x71] sm:$0xff] %vm225, %v254
      %v301 = vld [vmem:[#allocation2] sm:$0xff]
      %v302 = vld [vmem:[#allocation2 + $0x8] sm:$0x3]
      %v303 = vld [vmem:[#allocation2 + $0x10] sm:$0xff]
      %v304 = vld [vmem:[#allocation2 + $0x18] sm:$0x3]
      %v305 = vld [vmem:[#allocation2 + $0x20] sm:$0xff]
      %v306 = vld [vmem:[#allocation2 + $0x28] sm:$0x3]
      %v307 = vld [vmem:[#allocation2 + $0x30] sm:$0xff]
      %v308 = vld [vmem:[#allocation2 + $0x38] sm:$0x3]
      %v309 = vld [vmem:[#allocation2 + $0x40] sm:$0xff]
      %v310 = vld [vmem:[#allocation2 + $0x48] sm:$0x3]
      %v311 = vld [vmem:[#allocation2 + $0x50] sm:$0xff]
      %v312 = vld [vmem:[#allocation2 + $0x58] sm:$0x3]
      %v313 = vld [vmem:[#allocation2 + $0x60] sm:$0xff]
      %v314 = vld [vmem:[#allocation2 + $0x68] sm:$0x3]
      %v315 = vld [vmem:[#allocation2 + $0x70] sm:$0xff]
      %v316 = vld [vmem:[#allocation2 + $0x78] sm:$0x3]
      %v317 = vld [vmem:[#allocation2 + $0x80] sm:$0xff]
      %v318 = vld [vmem:[#allocation2 + $0x88] sm:$0x3]
      %v319 = vld [vmem:[#allocation2 + $0x90] sm:$0xff]
      %v320 = vld [vmem:[#allocation2 + $0x98] sm:$0x3]
      %vm337 = vcmask 1046528
      %v338 = vrot.slane %v301, 1
      %v339 = vrot.slane %v302, 1
      %v340 = vsel %vm337, %v338, %v339
      %v341 = vrot.slane %v303, 1
      %v342 = vrot.slane %v304, 1
      %v343 = vsel %vm337, %v341, %v342
      %v344 = vrot.slane %v305, 1
      %v345 = vrot.slane %v306, 1
      %v346 = vsel %vm337, %v344, %v345
      %v347 = vrot.slane %v307, 1
      %v348 = vrot.slane %v308, 1
      %v349 = vsel %vm337, %v347, %v348
      %v350 = vrot.slane %v309, 1
      %v351 = vrot.slane %v310, 1
      %v352 = vsel %vm337, %v350, %v351
      %v353 = vrot.slane %v311, 1
      %v354 = vrot.slane %v312, 1
      %v355 = vsel %vm337, %v353, %v354
      %v356 = vrot.slane %v313, 1
      %v357 = vrot.slane %v314, 1
      %v358 = vsel %vm337, %v356, %v357
      %v359 = vrot.slane %v315, 1
      %v360 = vrot.slane %v316, 1
      %v361 = vsel %vm337, %v359, %v360
      %vm362 = vcmask 1045504
      %v363 = vrot.slane %v301, 2
      %v364 = vrot.slane %v302, 2
      %v365 = vsel %vm362, %v363, %v364
      %v366 = vrot.slane %v303, 2
      %v367 = vrot.slane %v304, 2
      %v368 = vsel %vm362, %v366, %v367
      %v369 = vrot.slane %v305, 2
      %v370 = vrot.slane %v306, 2
      %v371 = vsel %vm362, %v369, %v370
      %v372 = vrot.slane %v307, 2
      %v373 = vrot.slane %v308, 2
      %v374 = vsel %vm362, %v372, %v373
      %v375 = vrot.slane %v309, 2
      %v376 = vrot.slane %v310, 2
      %v377 = vsel %vm362, %v375, %v376
      %v378 = vrot.slane %v311, 2
      %v379 = vrot.slane %v312, 2
      %v380 = vsel %vm362, %v378, %v379
      %v381 = vrot.slane %v313, 2
      %v382 = vrot.slane %v314, 2
      %v383 = vsel %vm362, %v381, %v382
      %v384 = vrot.slane %v315, 2
      %v385 = vrot.slane %v316, 2
      %v386 = vsel %vm362, %v384, %v385
      %v389 = vrot.slane %v317, 1
      %v390 = vrot.slane %v318, 1
      %v391 = vsel %vm337, %v389, %v390
      %v400 = vrot.slane %v317, 2
      %v401 = vrot.slane %v318, 2
      %v402 = vsel %vm362, %v400, %v401
      %v405 = vrot.slane %v319, 1
      %v406 = vrot.slane %v320, 1
      %v407 = vsel %vm337, %v405, %v406
      %v408 = vrot.slane %v319, 2
      %v409 = vrot.slane %v320, 2
      %v410 = vsel %vm362, %v408, %v409
      %411 = vrot.lane.b32.xlu0 %v340, 32
      %v412 = vpop.permute.xlu0 %411
      %413 = vrot.lane.b32.xlu0 %v343, 32
      %v414 = vpop.permute.xlu0 %413
      %415 = vrot.lane.b32.xlu0 %v346, 32
      %v416 = vpop.permute.xlu0 %415
      %417 = vrot.lane.b32.xlu0 %v349, 32
      %v418 = vpop.permute.xlu0 %417
      %419 = vrot.lane.b32.xlu0 %v352, 32
      %v420 = vpop.permute.xlu0 %419
      %421 = vrot.lane.b32.xlu0 %v355, 32
      %v422 = vpop.permute.xlu0 %421
      %423 = vrot.lane.b32.xlu0 %v358, 32
      %v424 = vpop.permute.xlu0 %423
      %425 = vrot.lane.b32.xlu0 %v361, 32
      %v426 = vpop.permute.xlu0 %425
      %435 = vrot.lane.b32.xlu0 %v365, 64
      %v436 = vpop.permute.xlu0 %435
      %437 = vrot.lane.b32.xlu0 %v368, 64
      %v438 = vpop.permute.xlu0 %437
      %439 = vrot.lane.b32.xlu0 %v371, 64
      %v440 = vpop.permute.xlu0 %439
      %441 = vrot.lane.b32.xlu0 %v374, 64
      %v442 = vpop.permute.xlu0 %441
      %443 = vrot.lane.b32.xlu0 %v377, 64
      %v444 = vpop.permute.xlu0 %443
      %445 = vrot.lane.b32.xlu0 %v380, 64
      %v446 = vpop.permute.xlu0 %445
      %447 = vrot.lane.b32.xlu0 %v383, 64
      %v448 = vpop.permute.xlu0 %447
      %449 = vrot.lane.b32.xlu0 %v386, 64
      %v450 = vpop.permute.xlu0 %449
      %459 = vrot.lane.b32.xlu0 %v303, 96
      %v460 = vpop.permute.xlu0 %459
      %461 = vrot.lane.b32.xlu0 %v305, 96
      %v462 = vpop.permute.xlu0 %461
      %463 = vrot.lane.b32.xlu0 %v307, 96
      %v464 = vpop.permute.xlu0 %463
      %465 = vrot.lane.b32.xlu0 %v309, 96
      %v466 = vpop.permute.xlu0 %465
      %467 = vrot.lane.b32.xlu0 %v311, 96
      %v468 = vpop.permute.xlu0 %467
      %469 = vrot.lane.b32.xlu0 %v313, 96
      %v470 = vpop.permute.xlu0 %469
      %471 = vrot.lane.b32.xlu0 %v315, 96
      %v472 = vpop.permute.xlu0 %471
      %473 = vrot.lane.b32.xlu0 %v317, 96
      %v474 = vpop.permute.xlu0 %473
      %483 = vrot.lane.b32.xlu0 %v368, 32
      %v484 = vpop.permute.xlu0 %483
      %485 = vrot.lane.b32.xlu0 %v371, 32
      %v486 = vpop.permute.xlu0 %485
      %487 = vrot.lane.b32.xlu0 %v374, 32
      %v488 = vpop.permute.xlu0 %487
      %489 = vrot.lane.b32.xlu0 %v377, 32
      %v490 = vpop.permute.xlu0 %489
      %491 = vrot.lane.b32.xlu0 %v380, 32
      %v492 = vpop.permute.xlu0 %491
      %493 = vrot.lane.b32.xlu0 %v383, 32
      %v494 = vpop.permute.xlu0 %493
      %495 = vrot.lane.b32.xlu0 %v386, 32
      %v496 = vpop.permute.xlu0 %495
      %497 = vrot.lane.b32.xlu0 %v402, 32
      %v498 = vpop.permute.xlu0 %497
      %507 = vrot.lane.b32.xlu0 %v305, 64
      %v508 = vpop.permute.xlu0 %507
      %509 = vrot.lane.b32.xlu0 %v307, 64
      %v510 = vpop.permute.xlu0 %509
      %511 = vrot.lane.b32.xlu0 %v309, 64
      %v512 = vpop.permute.xlu0 %511
      %513 = vrot.lane.b32.xlu0 %v311, 64
      %v514 = vpop.permute.xlu0 %513
      %515 = vrot.lane.b32.xlu0 %v313, 64
      %v516 = vpop.permute.xlu0 %515
      %517 = vrot.lane.b32.xlu0 %v315, 64
      %v518 = vpop.permute.xlu0 %517
      %519 = vrot.lane.b32.xlu0 %v317, 64
      %v520 = vpop.permute.xlu0 %519
      %521 = vrot.lane.b32.xlu0 %v319, 64
      %v522 = vpop.permute.xlu0 %521
      %531 = vrot.lane.b32.xlu0 %v346, 96
      %v532 = vpop.permute.xlu0 %531
      %533 = vrot.lane.b32.xlu0 %v349, 96
      %v534 = vpop.permute.xlu0 %533
      %535 = vrot.lane.b32.xlu0 %v352, 96
      %v536 = vpop.permute.xlu0 %535
      %537 = vrot.lane.b32.xlu0 %v355, 96
      %v538 = vpop.permute.xlu0 %537
      %539 = vrot.lane.b32.xlu0 %v358, 96
      %v540 = vpop.permute.xlu0 %539
      %541 = vrot.lane.b32.xlu0 %v361, 96
      %v542 = vpop.permute.xlu0 %541
      %543 = vrot.lane.b32.xlu0 %v391, 96
      %v544 = vpop.permute.xlu0 %543
      %545 = vrot.lane.b32.xlu0 %v407, 96
      %v546 = vpop.permute.xlu0 %545
      %v555 = vsel %vm225, %v301, %v412
      %v556 = vsel %vm225, %v303, %v414
      %v557 = vsel %vm225, %v305, %v416
      %v558 = vsel %vm225, %v307, %v418
      %v559 = vsel %vm225, %v309, %v420
      %v560 = vsel %vm225, %v311, %v422
      %v561 = vsel %vm225, %v313, %v424
      %v562 = vsel %vm225, %v315, %v426
      %vm563 = vcmask 523264
      %v564 = vsel %vm563, %v555, %v436
      %v565 = vsel %vm563, %v556, %v438
      %v566 = vsel %vm563, %v557, %v440
      %v567 = vsel %vm563, %v558, %v442
      %v568 = vsel %vm563, %v559, %v444
      %v569 = vsel %vm563, %v560, %v446
      %v570 = vsel %vm563, %v561, %v448
      %v571 = vsel %vm563, %v562, %v450
      %vm572 = vcmask 785408
      %v573 = vsel %vm572, %v564, %v460
      %v574 = vsel %vm572, %v565, %v462
      %v575 = vsel %vm572, %v566, %v464
      %v576 = vsel %vm572, %v567, %v466
      %v577 = vsel %vm572, %v568, %v468
      %v578 = vsel %vm572, %v569, %v470
      %v579 = vsel %vm572, %v570, %v472
      %v580 = vsel %vm572, %v571, %v474
      %v581 = vsel %vm225, %v343, %v484
      %v582 = vsel %vm225, %v346, %v486
      %v583 = vsel %vm225, %v349, %v488
      %v584 = vsel %vm225, %v352, %v490
      %v585 = vsel %vm225, %v355, %v492
      %v586 = vsel %vm225, %v358, %v494
      %v587 = vsel %vm225, %v361, %v496
      %v588 = vsel %vm225, %v391, %v498
      %v589 = vsel %vm563, %v581, %v508
      %v590 = vsel %vm563, %v582, %v510
      %v591 = vsel %vm563, %v583, %v512
      %v592 = vsel %vm563, %v584, %v514
      %v593 = vsel %vm563, %v585, %v516
      %v594 = vsel %vm563, %v586, %v518
      %v595 = vsel %vm563, %v587, %v520
      %v596 = vsel %vm563, %v588, %v522
      %v597 = vsel %vm572, %v589, %v532
      %v598 = vsel %vm572, %v590, %v534
      %v599 = vsel %vm572, %v591, %v536
      %v600 = vsel %vm572, %v592, %v538
      %v601 = vsel %vm572, %v593, %v540
      %v602 = vsel %vm572, %v594, %v542
      %v603 = vsel %vm572, %v595, %v544
      %v604 = vsel %vm572, %v596, %v546
      %v606 = vperm.slane %v291, 0
      %v608 = vsel %vm225, %v371, 0
      %v610 = vsel %vm225, %v374, 0
      %v612 = vsel %vm225, %v377, 0
      %v614 = vsel %vm225, %v380, 0
      %v616 = vsel %vm225, %v383, 0
      %v618 = vsel %vm225, %v386, 0
      %v620 = vsel %vm225, %v402, 0
      %v622 = vsel %vm225, %v410, 0
      %624 = vmatpush.msra.mxu0 %v270
      %625 = vmatpush.msra.mxu0 %v269
      %626 = vmatpush.msra.mxu0 %v268
      %627 = vmatpush.msra.mxu0 %v267
      %628 = vmatpush.msra.mxu0 %v266
      %629 = vmatpush.msra.mxu0 %v265
      %630 = vmatpush.msra.mxu0 %v264
      %631 = vmatpush.msra.mxu0 %v263
      %632 = vmatpush.msra.mxu0 %v262
      %633 = vmatpush.msra.mxu0 %v261
      %634 = vmatpush.msra.mxu0 %v260
      %635 = vmatpush.msra.mxu0 %v259
      %636 = vmatpush.msra.mxu0 %v258
      %637 = vmatpush.msra.mxu0 %v257
      %638 = vmatpush.msra.mxu0 %v256
      %639 = vmatpush.msra.mxu0 %v255
      %640 = vmatmul.f32.gmra.mxu0 %v573
      %v641 = vpop.f32.mrf.mxu0
      %v642 = vadd.f32 %v606, %v641
      %643 = vmatmul.f32.gmra.mxu0 %v574
      %v644 = vpop.f32.mrf.mxu0
      %v645 = vadd.f32 %v606, %v644
      %646 = vmatmul.f32.gmra.mxu0 %v575
      %v647 = vpop.f32.mrf.mxu0
      %v648 = vadd.f32 %v606, %v647
      %649 = vmatmul.f32.gmra.mxu0 %v576
      %v650 = vpop.f32.mrf.mxu0
      %v651 = vadd.f32 %v606, %v650
      %652 = vmatmul.f32.gmra.mxu0 %v577
      %v653 = vpop.f32.mrf.mxu0
      %v654 = vadd.f32 %v606, %v653
      %655 = vmatmul.f32.gmra.mxu0 %v578
      %v656 = vpop.f32.mrf.mxu0
      %v657 = vadd.f32 %v606, %v656
      %658 = vmatmul.f32.gmra.mxu0 %v579
      %v659 = vpop.f32.mrf.mxu0
      %v660 = vadd.f32 %v606, %v659
      %661 = vmatmul.f32.gmra.mxu0 %v580
      %v662 = vpop.f32.mrf.mxu0
      %v663 = vadd.f32 %v606, %v662
      %664 = vdwg.mxu0
      %665 = vmatpush.msra.mxu0 %v286
      %666 = vmatpush.msra.mxu0 %v285
      %667 = vmatpush.msra.mxu0 %v284
      %668 = vmatpush.msra.mxu0 %v283
      %669 = vmatpush.msra.mxu0 %v282
      %670 = vmatpush.msra.mxu0 %v281
      %671 = vmatpush.msra.mxu0 %v280
      %672 = vmatpush.msra.mxu0 %v279
      %673 = vmatpush.msra.mxu0 %v278
      %674 = vmatpush.msra.mxu0 %v277
      %675 = vmatpush.msra.mxu0 %v276
      %676 = vmatpush.msra.mxu0 %v275
      %677 = vmatpush.msra.mxu0 %v274
      %678 = vmatpush.msra.mxu0 %v273
      %679 = vmatpush.msra.mxu0 %v272
      %680 = vmatpush.msra.mxu0 %v271
      %681 = vmatmul.f32.gmra.mxu0 %v597
      %v682 = vpop.f32.mrf.mxu0
      %v683 = vadd.f32 %v642, %v682
      %684 = vmatmul.f32.gmra.mxu0 %v598
      %v685 = vpop.f32.mrf.mxu0
      %v686 = vadd.f32 %v645, %v685
      %687 = vmatmul.f32.gmra.mxu0 %v599
      %v688 = vpop.f32.mrf.mxu0
      %v689 = vadd.f32 %v648, %v688
      %690 = vmatmul.f32.gmra.mxu0 %v600
      %v691 = vpop.f32.mrf.mxu0
      %v692 = vadd.f32 %v651, %v691
      %693 = vmatmul.f32.gmra.mxu0 %v601
      %v694 = vpop.f32.mrf.mxu0
      %v695 = vadd.f32 %v654, %v694
      %696 = vmatmul.f32.gmra.mxu0 %v602
      %v697 = vpop.f32.mrf.mxu0
      %v698 = vadd.f32 %v657, %v697
      %699 = vmatmul.f32.gmra.mxu0 %v603
      %v700 = vpop.f32.mrf.mxu0
      %v701 = vadd.f32 %v660, %v700
      %702 = vmatmul.f32.gmra.mxu0 %v604
      %v703 = vpop.f32.mrf.mxu0
      %v704 = vadd.f32 %v663, %v703
      %705 = vdwg.mxu0
      %706 = vmatpush.msra.mxu0 0.0
      %707 = vmatpush.msra.mxu0 0.0
      %708 = vmatpush.msra.mxu0 0.0
      %709 = vmatpush.msra.mxu0 0.0
      %710 = vmatpush.msra.mxu0 0.0
      %711 = vmatpush.msra.mxu0 0.0
      %712 = vmatpush.msra.mxu0 0.0
      %713 = vmatpush.msra.mxu0 0.0
      %714 = vmatpush.msra.mxu0 0.0
      %715 = vmatpush.msra.mxu0 0.0
      %716 = vmatpush.msra.mxu0 0.0
      %717 = vmatpush.msra.mxu0 0.0
      %718 = vmatpush.msra.mxu0 %v290
      %719 = vmatpush.msra.mxu0 %v289
      %720 = vmatpush.msra.mxu0 %v288
      %721 = vmatpush.msra.mxu0 %v287
      %722 = vmatmul.f32.gmra.mxu0 %v608
      %v723 = vpop.f32.mrf.mxu0
      %v724 = vadd.f32 %v683, %v723
      %725 = vmatmul.f32.gmra.mxu0 %v610
      %v726 = vpop.f32.mrf.mxu0
      %v727 = vadd.f32 %v686, %v726
      %728 = vmatmul.f32.gmra.mxu0 %v612
      %v729 = vpop.f32.mrf.mxu0
      %v730 = vadd.f32 %v689, %v729
      %731 = vmatmul.f32.gmra.mxu0 %v614
      %v732 = vpop.f32.mrf.mxu0
      %v733 = vadd.f32 %v692, %v732
      %734 = vmatmul.f32.gmra.mxu0 %v616
      %v735 = vpop.f32.mrf.mxu0
      %v736 = vadd.f32 %v695, %v735
      %737 = vmatmul.f32.gmra.mxu0 %v618
      %v738 = vpop.f32.mrf.mxu0
      %v739 = vadd.f32 %v698, %v738
      %740 = vmatmul.f32.gmra.mxu0 %v620
      %v741 = vpop.f32.mrf.mxu0
      %v742 = vadd.f32 %v701, %v741
      %743 = vmatmul.f32.gmra.mxu0 %v622
      %v744 = vpop.f32.mrf.mxu0
      %v745 = vadd.f32 %v704, %v744
      %746 = vdwg.mxu0
      %s747 = scalar_lea.vmem %s1, 288
      %v748 = vld [vmem:[%s747] sm:$0xff]
      %v749 = vld [vmem:[%s747 + $0x8] sm:$0xff]
      %v750 = vld [vmem:[%s747 + $0x10] sm:$0xff]
      %v751 = vld [vmem:[%s747 + $0x18] sm:$0xff]
      %v752 = vld [vmem:[%s747 + $0x20] sm:$0xff]
      %v753 = vld [vmem:[%s747 + $0x28] sm:$0xff]
      %v754 = vld [vmem:[%s747 + $0x30] sm:$0xff]
      %v755 = vld [vmem:[%s747 + $0x38] sm:$0xff]
      %v756 = vld [vmem:[%s747 + $0x40] sm:$0xff]
      %v757 = vld [vmem:[%s747 + $0x48] sm:$0xff]
      %v758 = vld [vmem:[%s747 + $0x50] sm:$0xff]
      %v759 = vld [vmem:[%s747 + $0x58] sm:$0xff]
      %v760 = vld [vmem:[%s747 + $0x60] sm:$0xff]
      %v761 = vld [vmem:[%s747 + $0x68] sm:$0xff]
      %v762 = vld [vmem:[%s747 + $0x70] sm:$0xff]
      %v763 = vld [vmem:[%s747 + $0x78] sm:$0xff]
      %v764 = vld [vmem:[%s747 + $0x80] sm:$0xff]
      %v765 = vld [vmem:[%s747 + $0x88] sm:$0xff]
      %v766 = vld [vmem:[%s747 + $0x90] sm:$0xff]
      %v767 = vld [vmem:[%s747 + $0x98] sm:$0xff]
      %v768 = vld [vmem:[%s747 + $0xa0] sm:$0xff]
      %v769 = vld [vmem:[%s747 + $0xa8] sm:$0xff]
      %v770 = vld [vmem:[%s747 + $0xb0] sm:$0xff]
      %v771 = vld [vmem:[%s747 + $0xb8] sm:$0xff]
      %v772 = vld [vmem:[%s747 + $0xc0] sm:$0xff]
      %v773 = vld [vmem:[%s747 + $0xc8] sm:$0xff]
      %v774 = vld [vmem:[%s747 + $0xd0] sm:$0xff]
      %v775 = vld [vmem:[%s747 + $0xd8] sm:$0xff]
      %v776 = vld [vmem:[%s747 + $0xe0] sm:$0xff]
      %v777 = vld [vmem:[%s747 + $0xe8] sm:$0xff]
      %v778 = vld [vmem:[%s747 + $0xf0] sm:$0xff]
      %v779 = vld [vmem:[%s747 + $0xf8] sm:$0xff]
      %v780 = vld [vmem:[%s747 + $0x100] sm:$0xff]
      %v781 = vld [vmem:[%s747 + $0x108] sm:$0xff]
      %v782 = vld [vmem:[%s747 + $0x110] sm:$0xff]
      %v783 = vld [vmem:[%s747 + $0x118] sm:$0xff]
      %s784 = scalar_lea.vmem %s2, 1
      %v785 = vld [vmem:[%s784] sm:$0x1]
      %786 = vst.msk [vmem:[%s292 + $0x1] sm:$0xff] %vm225, %v724
      %787 = vst.msk [vmem:[%s292 + $0x11] sm:$0xff] %vm225, %v727
      %788 = vst.msk [vmem:[%s292 + $0x21] sm:$0xff] %vm225, %v730
      %789 = vst.msk [vmem:[%s292 + $0x31] sm:$0xff] %vm225, %v733
      %790 = vst.msk [vmem:[%s292 + $0x41] sm:$0xff] %vm225, %v736
      %791 = vst.msk [vmem:[%s292 + $0x51] sm:$0xff] %vm225, %v739
      %792 = vst.msk [vmem:[%s292 + $0x61] sm:$0xff] %vm225, %v742
      %793 = vst.msk [vmem:[%s292 + $0x71] sm:$0xff] %vm225, %v745
      %v794 = vld [vmem:[#allocation2] sm:$0xff]
      %v795 = vld [vmem:[#allocation2 + $0x8] sm:$0x3]
      %v796 = vld [vmem:[#allocation2 + $0x10] sm:$0xff]
      %v797 = vld [vmem:[#allocation2 + $0x18] sm:$0x3]
      %v798 = vld [vmem:[#allocation2 + $0x20] sm:$0xff]
      %v799 = vld [vmem:[#allocation2 + $0x28] sm:$0x3]
      %v800 = vld [vmem:[#allocation2 + $0x30] sm:$0xff]
      %v801 = vld [vmem:[#allocation2 + $0x38] sm:$0x3]
      %v802 = vld [vmem:[#allocation2 + $0x40] sm:$0xff]
      %v803 = vld [vmem:[#allocation2 + $0x48] sm:$0x3]
      %v804 = vld [vmem:[#allocation2 + $0x50] sm:$0xff]
      %v805 = vld [vmem:[#allocation2 + $0x58] sm:$0x3]
      %v806 = vld [vmem:[#allocation2 + $0x60] sm:$0xff]
      %v807 = vld [vmem:[#allocation2 + $0x68] sm:$0x3]
      %v808 = vld [vmem:[#allocation2 + $0x70] sm:$0xff]
      %v809 = vld [vmem:[#allocation2 + $0x78] sm:$0x3]
      %v810 = vld [vmem:[#allocation2 + $0x80] sm:$0xff]
      %v811 = vld [vmem:[#allocation2 + $0x88] sm:$0x3]
      %v812 = vld [vmem:[#allocation2 + $0x90] sm:$0xff]
      %v813 = vld [vmem:[#allocation2 + $0x98] sm:$0x3]
      %v830 = vrot.slane %v794, 1
      %v831 = vrot.slane %v795, 1
      %v832 = vsel %vm337, %v830, %v831
      %v833 = vrot.slane %v796, 1
      %v834 = vrot.slane %v797, 1
      %v835 = vsel %vm337, %v833, %v834
      %v836 = vrot.slane %v798, 1
      %v837 = vrot.slane %v799, 1
      %v838 = vsel %vm337, %v836, %v837
      %v839 = vrot.slane %v800, 1
      %v840 = vrot.slane %v801, 1
      %v841 = vsel %vm337, %v839, %v840
      %v842 = vrot.slane %v802, 1
      %v843 = vrot.slane %v803, 1
      %v844 = vsel %vm337, %v842, %v843
      %v845 = vrot.slane %v804, 1
      %v846 = vrot.slane %v805, 1
      %v847 = vsel %vm337, %v845, %v846
      %v848 = vrot.slane %v806, 1
      %v849 = vrot.slane %v807, 1
      %v850 = vsel %vm337, %v848, %v849
      %v851 = vrot.slane %v808, 1
      %v852 = vrot.slane %v809, 1
      %v853 = vsel %vm337, %v851, %v852
      %v854 = vrot.slane %v794, 2
      %v855 = vrot.slane %v795, 2
      %v856 = vsel %vm362, %v854, %v855
      %v857 = vrot.slane %v796, 2
      %v858 = vrot.slane %v797, 2
      %v859 = vsel %vm362, %v857, %v858
      %v860 = vrot.slane %v798, 2
      %v861 = vrot.slane %v799, 2
      %v862 = vsel %vm362, %v860, %v861
      %v863 = vrot.slane %v800, 2
      %v864 = vrot.slane %v801, 2
      %v865 = vsel %vm362, %v863, %v864
      %v866 = vrot.slane %v802, 2
      %v867 = vrot.slane %v803, 2
      %v868 = vsel %vm362, %v866, %v867
      %v869 = vrot.slane %v804, 2
      %v870 = vrot.slane %v805, 2
      %v871 = vsel %vm362, %v869, %v870
      %v872 = vrot.slane %v806, 2
      %v873 = vrot.slane %v807, 2
      %v874 = vsel %vm362, %v872, %v873
      %v875 = vrot.slane %v808, 2
      %v876 = vrot.slane %v809, 2
      %v877 = vsel %vm362, %v875, %v876
      %v880 = vrot.slane %v810, 1
      %v881 = vrot.slane %v811, 1
      %v882 = vsel %vm337, %v880, %v881
      %v891 = vrot.slane %v810, 2
      %v892 = vrot.slane %v811, 2
      %v893 = vsel %vm362, %v891, %v892
      %v896 = vrot.slane %v812, 1
      %v897 = vrot.slane %v813, 1
      %v898 = vsel %vm337, %v896, %v897
      %v899 = vrot.slane %v812, 2
      %v900 = vrot.slane %v813, 2
      %v901 = vsel %vm362, %v899, %v900
      %902 = vrot.lane.b32.xlu0 %v832, 32
      %v903 = vpop.permute.xlu0 %902
      %904 = vrot.lane.b32.xlu0 %v835, 32
      %v905 = vpop.permute.xlu0 %904
      %906 = vrot.lane.b32.xlu0 %v838, 32
      %v907 = vpop.permute.xlu0 %906
      %908 = vrot.lane.b32.xlu0 %v841, 32
      %v909 = vpop.permute.xlu0 %908
      %910 = vrot.lane.b32.xlu0 %v844, 32
      %v911 = vpop.permute.xlu0 %910
      %912 = vrot.lane.b32.xlu0 %v847, 32
      %v913 = vpop.permute.xlu0 %912
      %914 = vrot.lane.b32.xlu0 %v850, 32
      %v915 = vpop.permute.xlu0 %914
      %916 = vrot.lane.b32.xlu0 %v853, 32
      %v917 = vpop.permute.xlu0 %916
      %926 = vrot.lane.b32.xlu0 %v856, 64
      %v927 = vpop.permute.xlu0 %926
      %928 = vrot.lane.b32.xlu0 %v859, 64
      %v929 = vpop.permute.xlu0 %928
      %930 = vrot.lane.b32.xlu0 %v862, 64
      %v931 = vpop.permute.xlu0 %930
      %932 = vrot.lane.b32.xlu0 %v865, 64
      %v933 = vpop.permute.xlu0 %932
      %934 = vrot.lane.b32.xlu0 %v868, 64
      %v935 = vpop.permute.xlu0 %934
      %936 = vrot.lane.b32.xlu0 %v871, 64
      %v937 = vpop.permute.xlu0 %936
      %938 = vrot.lane.b32.xlu0 %v874, 64
      %v939 = vpop.permute.xlu0 %938
      %940 = vrot.lane.b32.xlu0 %v877, 64
      %v941 = vpop.permute.xlu0 %940
      %950 = vrot.lane.b32.xlu0 %v796, 96
      %v951 = vpop.permute.xlu0 %950
      %952 = vrot.lane.b32.xlu0 %v798, 96
      %v953 = vpop.permute.xlu0 %952
      %954 = vrot.lane.b32.xlu0 %v800, 96
      %v955 = vpop.permute.xlu0 %954
      %956 = vrot.lane.b32.xlu0 %v802, 96
      %v957 = vpop.permute.xlu0 %956
      %958 = vrot.lane.b32.xlu0 %v804, 96
      %v959 = vpop.permute.xlu0 %958
      %960 = vrot.lane.b32.xlu0 %v806, 96
      %v961 = vpop.permute.xlu0 %960
      %962 = vrot.lane.b32.xlu0 %v808, 96
      %v963 = vpop.permute.xlu0 %962
      %964 = vrot.lane.b32.xlu0 %v810, 96
      %v965 = vpop.permute.xlu0 %964
      %974 = vrot.lane.b32.xlu0 %v859, 32
      %v975 = vpop.permute.xlu0 %974
      %976 = vrot.lane.b32.xlu0 %v862, 32
      %v977 = vpop.permute.xlu0 %976
      %978 = vrot.lane.b32.xlu0 %v865, 32
      %v979 = vpop.permute.xlu0 %978
      %980 = vrot.lane.b32.xlu0 %v868, 32
      %v981 = vpop.permute.xlu0 %980
      %982 = vrot.lane.b32.xlu0 %v871, 32
      %v983 = vpop.permute.xlu0 %982
      %984 = vrot.lane.b32.xlu0 %v874, 32
      %v985 = vpop.permute.xlu0 %984
      %986 = vrot.lane.b32.xlu0 %v877, 32
      %v987 = vpop.permute.xlu0 %986
      %988 = vrot.lane.b32.xlu0 %v893, 32
      %v989 = vpop.permute.xlu0 %988
      %998 = vrot.lane.b32.xlu0 %v798, 64
      %v999 = vpop.permute.xlu0 %998
      %1000 = vrot.lane.b32.xlu0 %v800, 64
      %v1001 = vpop.permute.xlu0 %1000
      %1002 = vrot.lane.b32.xlu0 %v802, 64
      %v1003 = vpop.permute.xlu0 %1002
      %1004 = vrot.lane.b32.xlu0 %v804, 64
      %v1005 = vpop.permute.xlu0 %1004
      %1006 = vrot.lane.b32.xlu0 %v806, 64
      %v1007 = vpop.permute.xlu0 %1006
      %1008 = vrot.lane.b32.xlu0 %v808, 64
      %v1009 = vpop.permute.xlu0 %1008
      %1010 = vrot.lane.b32.xlu0 %v810, 64
      %v1011 = vpop.permute.xlu0 %1010
      %1012 = vrot.lane.b32.xlu0 %v812, 64
      %v1013 = vpop.permute.xlu0 %1012
      %1022 = vrot.lane.b32.xlu0 %v838, 96
      %v1023 = vpop.permute.xlu0 %1022
      %1024 = vrot.lane.b32.xlu0 %v841, 96
      %v1025 = vpop.permute.xlu0 %1024
      %1026 = vrot.lane.b32.xlu0 %v844, 96
      %v1027 = vpop.permute.xlu0 %1026
      %1028 = vrot.lane.b32.xlu0 %v847, 96
      %v1029 = vpop.permute.xlu0 %1028
      %1030 = vrot.lane.b32.xlu0 %v850, 96
      %v1031 = vpop.permute.xlu0 %1030
      %1032 = vrot.lane.b32.xlu0 %v853, 96
      %v1033 = vpop.permute.xlu0 %1032
      %1034 = vrot.lane.b32.xlu0 %v882, 96
      %v1035 = vpop.permute.xlu0 %1034
      %1036 = vrot.lane.b32.xlu0 %v898, 96
      %v1037 = vpop.permute.xlu0 %1036
      %v1046 = vsel %vm225, %v794, %v903
      %v1047 = vsel %vm225, %v796, %v905
      %v1048 = vsel %vm225, %v798, %v907
      %v1049 = vsel %vm225, %v800, %v909
      %v1050 = vsel %vm225, %v802, %v911
      %v1051 = vsel %vm225, %v804, %v913
      %v1052 = vsel %vm225, %v806, %v915
      %v1053 = vsel %vm225, %v808, %v917
      %v1054 = vsel %vm563, %v1046, %v927
      %v1055 = vsel %vm563, %v1047, %v929
      %v1056 = vsel %vm563, %v1048, %v931
      %v1057 = vsel %vm563, %v1049, %v933
      %v1058 = vsel %vm563, %v1050, %v935
      %v1059 = vsel %vm563, %v1051, %v937
      %v1060 = vsel %vm563, %v1052, %v939
      %v1061 = vsel %vm563, %v1053, %v941
      %v1062 = vsel %vm572, %v1054, %v951
      %v1063 = vsel %vm572, %v1055, %v953
      %v1064 = vsel %vm572, %v1056, %v955
      %v1065 = vsel %vm572, %v1057, %v957
      %v1066 = vsel %vm572, %v1058, %v959
      %v1067 = vsel %vm572, %v1059, %v961
      %v1068 = vsel %vm572, %v1060, %v963
      %v1069 = vsel %vm572, %v1061, %v965
      %v1070 = vsel %vm225, %v835, %v975
      %v1071 = vsel %vm225, %v838, %v977
      %v1072 = vsel %vm225, %v841, %v979
      %v1073 = vsel %vm225, %v844, %v981
      %v1074 = vsel %vm225, %v847, %v983
      %v1075 = vsel %vm225, %v850, %v985
      %v1076 = vsel %vm225, %v853, %v987
      %v1077 = vsel %vm225, %v882, %v989
      %v1078 = vsel %vm563, %v1070, %v999
      %v1079 = vsel %vm563, %v1071, %v1001
      %v1080 = vsel %vm563, %v1072, %v1003
      %v1081 = vsel %vm563, %v1073, %v1005
      %v1082 = vsel %vm563, %v1074, %v1007
      %v1083 = vsel %vm563, %v1075, %v1009
      %v1084 = vsel %vm563, %v1076, %v1011
      %v1085 = vsel %vm563, %v1077, %v1013
      %v1086 = vsel %vm572, %v1078, %v1023
      %v1087 = vsel %vm572, %v1079, %v1025
      %v1088 = vsel %vm572, %v1080, %v1027
      %v1089 = vsel %vm572, %v1081, %v1029
      %v1090 = vsel %vm572, %v1082, %v1031
      %v1091 = vsel %vm572, %v1083, %v1033
      %v1092 = vsel %vm572, %v1084, %v1035
      %v1093 = vsel %vm572, %v1085, %v1037
      %v1095 = vperm.slane %v785, 0
      %v1097 = vsel %vm225, %v862, 0
      %v1099 = vsel %vm225, %v865, 0
      %v1101 = vsel %vm225, %v868, 0
      %v1103 = vsel %vm225, %v871, 0
      %v1105 = vsel %vm225, %v874, 0
      %v1107 = vsel %vm225, %v877, 0
      %v1109 = vsel %vm225, %v893, 0
      %v1111 = vsel %vm225, %v901, 0
      %1113 = vmatpush.msra.mxu0 %v763
      %1114 = vmatpush.msra.mxu0 %v762
      %1115 = vmatpush.msra.mxu0 %v761
      %1116 = vmatpush.msra.mxu0 %v760
      %1117 = vmatpush.msra.mxu0 %v759
      %1118 = vmatpush.msra.mxu0 %v758
      %1119 = vmatpush.msra.mxu0 %v757
      %1120 = vmatpush.msra.mxu0 %v756
      %1121 = vmatpush.msra.mxu0 %v755
      %1122 = vmatpush.msra.mxu0 %v754
      %1123 = vmatpush.msra.mxu0 %v753
      %1124 = vmatpush.msra.mxu0 %v752
      %1125 = vmatpush.msra.mxu0 %v751
      %1126 = vmatpush.msra.mxu0 %v750
      %1127 = vmatpush.msra.mxu0 %v749
      %1128 = vmatpush.msra.mxu0 %v748
      %1129 = vmatmul.f32.gmra.mxu0 %v1062
      %v1130 = vpop.f32.mrf.mxu0
      %v1131 = vadd.f32 %v1095, %v1130
      %1132 = vmatmul.f32.gmra.mxu0 %v1063
      %v1133 = vpop.f32.mrf.mxu0
      %v1134 = vadd.f32 %v1095, %v1133
      %1135 = vmatmul.f32.gmra.mxu0 %v1064
      %v1136 = vpop.f32.mrf.mxu0
      %v1137 = vadd.f32 %v1095, %v1136
      %1138 = vmatmul.f32.gmra.mxu0 %v1065
      %v1139 = vpop.f32.mrf.mxu0
      %v1140 = vadd.f32 %v1095, %v1139
      %1141 = vmatmul.f32.gmra.mxu0 %v1066
      %v1142 = vpop.f32.mrf.mxu0
      %v1143 = vadd.f32 %v1095, %v1142
      %1144 = vmatmul.f32.gmra.mxu0 %v1067
      %v1145 = vpop.f32.mrf.mxu0
      %v1146 = vadd.f32 %v1095, %v1145
      %1147 = vmatmul.f32.gmra.mxu0 %v1068
      %v1148 = vpop.f32.mrf.mxu0
      %v1149 = vadd.f32 %v1095, %v1148
      %1150 = vmatmul.f32.gmra.mxu0 %v1069
      %v1151 = vpop.f32.mrf.mxu0
      %v1152 = vadd.f32 %v1095, %v1151
      %1153 = vdwg.mxu0
      %1154 = vmatpush.msra.mxu0 %v779
      %1155 = vmatpush.msra.mxu0 %v778
      %1156 = vmatpush.msra.mxu0 %v777
      %1157 = vmatpush.msra.mxu0 %v776
      %1158 = vmatpush.msra.mxu0 %v775
      %1159 = vmatpush.msra.mxu0 %v774
      %1160 = vmatpush.msra.mxu0 %v773
      %1161 = vmatpush.msra.mxu0 %v772
      %1162 = vmatpush.msra.mxu0 %v771
      %1163 = vmatpush.msra.mxu0 %v770
      %1164 = vmatpush.msra.mxu0 %v769
      %1165 = vmatpush.msra.mxu0 %v768
      %1166 = vmatpush.msra.mxu0 %v767
      %1167 = vmatpush.msra.mxu0 %v766
      %1168 = vmatpush.msra.mxu0 %v765
      %1169 = vmatpush.msra.mxu0 %v764
      %1170 = vmatmul.f32.gmra.mxu0 %v1086
      %v1171 = vpop.f32.mrf.mxu0
      %v1172 = vadd.f32 %v1131, %v1171
      %1173 = vmatmul.f32.gmra.mxu0 %v1087
      %v1174 = vpop.f32.mrf.mxu0
      %v1175 = vadd.f32 %v1134, %v1174
      %1176 = vmatmul.f32.gmra.mxu0 %v1088
      %v1177 = vpop.f32.mrf.mxu0
      %v1178 = vadd.f32 %v1137, %v1177
      %1179 = vmatmul.f32.gmra.mxu0 %v1089
      %v1180 = vpop.f32.mrf.mxu0
      %v1181 = vadd.f32 %v1140, %v1180
      %1182 = vmatmul.f32.gmra.mxu0 %v1090
      %v1183 = vpop.f32.mrf.mxu0
      %v1184 = vadd.f32 %v1143, %v1183
      %1185 = vmatmul.f32.gmra.mxu0 %v1091
      %v1186 = vpop.f32.mrf.mxu0
      %v1187 = vadd.f32 %v1146, %v1186
      %1188 = vmatmul.f32.gmra.mxu0 %v1092
      %v1189 = vpop.f32.mrf.mxu0
      %v1190 = vadd.f32 %v1149, %v1189
      %1191 = vmatmul.f32.gmra.mxu0 %v1093
      %v1192 = vpop.f32.mrf.mxu0
      %v1193 = vadd.f32 %v1152, %v1192
      %1194 = vdwg.mxu0
      %1195 = vmatpush.msra.mxu0 0.0
      %1196 = vmatpush.msra.mxu0 0.0
      %1197 = vmatpush.msra.mxu0 0.0
      %1198 = vmatpush.msra.mxu0 0.0
      %1199 = vmatpush.msra.mxu0 0.0
      %1200 = vmatpush.msra.mxu0 0.0
      %1201 = vmatpush.msra.mxu0 0.0
      %1202 = vmatpush.msra.mxu0 0.0
      %1203 = vmatpush.msra.mxu0 0.0
      %1204 = vmatpush.msra.mxu0 0.0
      %1205 = vmatpush.msra.mxu0 0.0
      %1206 = vmatpush.msra.mxu0 0.0
      %1207 = vmatpush.msra.mxu0 %v783
      %1208 = vmatpush.msra.mxu0 %v782
      %1209 = vmatpush.msra.mxu0 %v781
      %1210 = vmatpush.msra.mxu0 %v780
      %1211 = vmatmul.f32.gmra.mxu0 %v1097
      %v1212 = vpop.f32.mrf.mxu0
      %v1213 = vadd.f32 %v1172, %v1212
      %1214 = vmatmul.f32.gmra.mxu0 %v1099
      %v1215 = vpop.f32.mrf.mxu0
      %v1216 = vadd.f32 %v1175, %v1215
      %1217 = vmatmul.f32.gmra.mxu0 %v1101
      %v1218 = vpop.f32.mrf.mxu0
      %v1219 = vadd.f32 %v1178, %v1218
      %1220 = vmatmul.f32.gmra.mxu0 %v1103
      %v1221 = vpop.f32.mrf.mxu0
      %v1222 = vadd.f32 %v1181, %v1221
      %1223 = vmatmul.f32.gmra.mxu0 %v1105
      %v1224 = vpop.f32.mrf.mxu0
      %v1225 = vadd.f32 %v1184, %v1224
      %1226 = vmatmul.f32.gmra.mxu0 %v1107
      %v1227 = vpop.f32.mrf.mxu0
      %v1228 = vadd.f32 %v1187, %v1227
      %1229 = vmatmul.f32.gmra.mxu0 %v1109
      %v1230 = vpop.f32.mrf.mxu0
      %v1231 = vadd.f32 %v1190, %v1230
      %1232 = vmatmul.f32.gmra.mxu0 %v1111
      %v1233 = vpop.f32.mrf.mxu0
      %v1234 = vadd.f32 %v1193, %v1233
      %1235 = vdwg.mxu0
      %v1236 = vmax.f32 %v1213, 0.0
      %v1237 = vmax.f32 %v1216, 0.0
      %v1238 = vmax.f32 %v1219, 0.0
      %v1239 = vmax.f32 %v1222, 0.0
      %v1240 = vmax.f32 %v1225, 0.0
      %v1241 = vmax.f32 %v1228, 0.0
      %v1242 = vmax.f32 %v1231, 0.0
      %v1243 = vmax.f32 %v1234, 0.0
      %s1244 = scalar_lea.vmem %s1, 576
      %v1245 = vld [vmem:[%s1244] sm:$0xff]
      %v1246 = vld [vmem:[%s1244 + $0x8] sm:$0xff]
      %v1247 = vld [vmem:[%s1244 + $0x10] sm:$0xff]
      %v1248 = vld [vmem:[%s1244 + $0x18] sm:$0xff]
      %v1249 = vld [vmem:[%s1244 + $0x20] sm:$0xff]
      %v1250 = vld [vmem:[%s1244 + $0x28] sm:$0xff]
      %v1251 = vld [vmem:[%s1244 + $0x30] sm:$0xff]
      %v1252 = vld [vmem:[%s1244 + $0x38] sm:$0xff]
      %v1253 = vld [vmem:[%s1244 + $0x40] sm:$0xff]
      %v1254 = vld [vmem:[%s1244 + $0x48] sm:$0xff]
      %v1255 = vld [vmem:[%s1244 + $0x50] sm:$0xff]
      %v1256 = vld [vmem:[%s1244 + $0x58] sm:$0xff]
      %v1257 = vld [vmem:[%s1244 + $0x60] sm:$0xff]
      %v1258 = vld [vmem:[%s1244 + $0x68] sm:$0xff]
      %v1259 = vld [vmem:[%s1244 + $0x70] sm:$0xff]
      %v1260 = vld [vmem:[%s1244 + $0x78] sm:$0xff]
      %v1261 = vld [vmem:[%s1244 + $0x80] sm:$0xff]
      %v1262 = vld [vmem:[%s1244 + $0x88] sm:$0xff]
      %v1263 = vld [vmem:[%s1244 + $0x90] sm:$0xff]
      %v1264 = vld [vmem:[%s1244 + $0x98] sm:$0xff]
      %v1265 = vld [vmem:[%s1244 + $0xa0] sm:$0xff]
      %v1266 = vld [vmem:[%s1244 + $0xa8] sm:$0xff]
      %v1267 = vld [vmem:[%s1244 + $0xb0] sm:$0xff]
      %v1268 = vld [vmem:[%s1244 + $0xb8] sm:$0xff]
      %v1269 = vld [vmem:[%s1244 + $0xc0] sm:$0xff]
      %v1270 = vld [vmem:[%s1244 + $0xc8] sm:$0xff]
      %v1271 = vld [vmem:[%s1244 + $0xd0] sm:$0xff]
      %v1272 = vld [vmem:[%s1244 + $0xd8] sm:$0xff]
      %v1273 = vld [vmem:[%s1244 + $0xe0] sm:$0xff]
      %v1274 = vld [vmem:[%s1244 + $0xe8] sm:$0xff]
      %v1275 = vld [vmem:[%s1244 + $0xf0] sm:$0xff]
      %v1276 = vld [vmem:[%s1244 + $0xf8] sm:$0xff]
      %v1277 = vld [vmem:[%s1244 + $0x100] sm:$0xff]
      %v1278 = vld [vmem:[%s1244 + $0x108] sm:$0xff]
      %v1279 = vld [vmem:[%s1244 + $0x110] sm:$0xff]
      %v1280 = vld [vmem:[%s1244 + $0x118] sm:$0xff]
      %s1281 = scalar_lea.vmem %s2, 2
      %v1282 = vld [vmem:[%s1281] sm:$0x1]
      %1283 = vst.msk [vmem:[%s292 + $0x1] sm:$0xff] %vm225, %v1236
      %1284 = vst.msk [vmem:[%s292 + $0x11] sm:$0xff] %vm225, %v1237
      %1285 = vst.msk [vmem:[%s292 + $0x21] sm:$0xff] %vm225, %v1238
      %1286 = vst.msk [vmem:[%s292 + $0x31] sm:$0xff] %vm225, %v1239
      %1287 = vst.msk [vmem:[%s292 + $0x41] sm:$0xff] %vm225, %v1240
      %1288 = vst.msk [vmem:[%s292 + $0x51] sm:$0xff] %vm225, %v1241
      %1289 = vst.msk [vmem:[%s292 + $0x61] sm:$0xff] %vm225, %v1242
      %1290 = vst.msk [vmem:[%s292 + $0x71] sm:$0xff] %vm225, %v1243
      %v1291 = vld [vmem:[#allocation2] sm:$0xff]
      %v1292 = vld [vmem:[#allocation2 + $0x8] sm:$0x3]
      %v1293 = vld [vmem:[#allocation2 + $0x10] sm:$0xff]
      %v1294 = vld [vmem:[#allocation2 + $0x18] sm:$0x3]
      %v1295 = vld [vmem:[#allocation2 + $0x20] sm:$0xff]
      %v1296 = vld [vmem:[#allocation2 + $0x28] sm:$0x3]
      %v1297 = vld [vmem:[#allocation2 + $0x30] sm:$0xff]
      %v1298 = vld [vmem:[#allocation2 + $0x38] sm:$0x3]
      %v1299 = vld [vmem:[#allocation2 + $0x40] sm:$0xff]
      %v1300 = vld [vmem:[#allocation2 + $0x48] sm:$0x3]
      %v1301 = vld [vmem:[#allocation2 + $0x50] sm:$0xff]
      %v1302 = vld [vmem:[#allocation2 + $0x58] sm:$0x3]
      %v1303 = vld [vmem:[#allocation2 + $0x60] sm:$0xff]
      %v1304 = vld [vmem:[#allocation2 + $0x68] sm:$0x3]
      %v1305 = vld [vmem:[#allocation2 + $0x70] sm:$0xff]
      %v1306 = vld [vmem:[#allocation2 + $0x78] sm:$0x3]
      %v1307 = vld [vmem:[#allocation2 + $0x80] sm:$0xff]
      %v1308 = vld [vmem:[#allocation2 + $0x88] sm:$0x3]
      %v1309 = vld [vmem:[#allocation2 + $0x90] sm:$0xff]
      %v1310 = vld [vmem:[#allocation2 + $0x98] sm:$0x3]
      %v1327 = vrot.slane %v1291, 1
      %v1328 = vrot.slane %v1292, 1
      %v1329 = vsel %vm337, %v1327, %v1328
      %v1330 = vrot.slane %v1293, 1
      %v1331 = vrot.slane %v1294, 1
      %v1332 = vsel %vm337, %v1330, %v1331
      %v1333 = vrot.slane %v1295, 1
      %v1334 = vrot.slane %v1296, 1
      %v1335 = vsel %vm337, %v1333, %v1334
      %v1336 = vrot.slane %v1297, 1
      %v1337 = vrot.slane %v1298, 1
      %v1338 = vsel %vm337, %v1336, %v1337
      %v1339 = vrot.slane %v1299, 1
      %v1340 = vrot.slane %v1300, 1
      %v1341 = vsel %vm337, %v1339, %v1340
      %v1342 = vrot.slane %v1301, 1
      %v1343 = vrot.slane %v1302, 1
      %v1344 = vsel %vm337, %v1342, %v1343
      %v1345 = vrot.slane %v1303, 1
      %v1346 = vrot.slane %v1304, 1
      %v1347 = vsel %vm337, %v1345, %v1346
      %v1348 = vrot.slane %v1305, 1
      %v1349 = vrot.slane %v1306, 1
      %v1350 = vsel %vm337, %v1348, %v1349
      %v1351 = vrot.slane %v1291, 2
      %v1352 = vrot.slane %v1292, 2
      %v1353 = vsel %vm362, %v1351, %v1352
      %v1354 = vrot.slane %v1293, 2
      %v1355 = vrot.slane %v1294, 2
      %v1356 = vsel %vm362, %v1354, %v1355
      %v1357 = vrot.slane %v1295, 2
      %v1358 = vrot.slane %v1296, 2
      %v1359 = vsel %vm362, %v1357, %v1358
      %v1360 = vrot.slane %v1297, 2
      %v1361 = vrot.slane %v1298, 2
      %v1362 = vsel %vm362, %v1360, %v1361
      %v1363 = vrot.slane %v1299, 2
      %v1364 = vrot.slane %v1300, 2
      %v1365 = vsel %vm362, %v1363, %v1364
      %v1366 = vrot.slane %v1301, 2
      %v1367 = vrot.slane %v1302, 2
      %v1368 = vsel %vm362, %v1366, %v1367
      %v1369 = vrot.slane %v1303, 2
      %v1370 = vrot.slane %v1304, 2
      %v1371 = vsel %vm362, %v1369, %v1370
      %v1372 = vrot.slane %v1305, 2
      %v1373 = vrot.slane %v1306, 2
      %v1374 = vsel %vm362, %v1372, %v1373
      %v1377 = vrot.slane %v1307, 1
      %v1378 = vrot.slane %v1308, 1
      %v1379 = vsel %vm337, %v1377, %v1378
      %v1388 = vrot.slane %v1307, 2
      %v1389 = vrot.slane %v1308, 2
      %v1390 = vsel %vm362, %v1388, %v1389
      %v1393 = vrot.slane %v1309, 1
      %v1394 = vrot.slane %v1310, 1
      %v1395 = vsel %vm337, %v1393, %v1394
      %v1396 = vrot.slane %v1309, 2
      %v1397 = vrot.slane %v1310, 2
      %v1398 = vsel %vm362, %v1396, %v1397
      %1399 = vrot.lane.b32.xlu0 %v1329, 32
      %v1400 = vpop.permute.xlu0 %1399
      %1401 = vrot.lane.b32.xlu0 %v1332, 32
      %v1402 = vpop.permute.xlu0 %1401
      %1403 = vrot.lane.b32.xlu0 %v1335, 32
      %v1404 = vpop.permute.xlu0 %1403
      %1405 = vrot.lane.b32.xlu0 %v1338, 32
      %v1406 = vpop.permute.xlu0 %1405
      %1407 = vrot.lane.b32.xlu0 %v1341, 32
      %v1408 = vpop.permute.xlu0 %1407
      %1409 = vrot.lane.b32.xlu0 %v1344, 32
      %v1410 = vpop.permute.xlu0 %1409
      %1411 = vrot.lane.b32.xlu0 %v1347, 32
      %v1412 = vpop.permute.xlu0 %1411
      %1413 = vrot.lane.b32.xlu0 %v1350, 32
      %v1414 = vpop.permute.xlu0 %1413
      %1423 = vrot.lane.b32.xlu0 %v1353, 64
      %v1424 = vpop.permute.xlu0 %1423
      %1425 = vrot.lane.b32.xlu0 %v1356, 64
      %v1426 = vpop.permute.xlu0 %1425
      %1427 = vrot.lane.b32.xlu0 %v1359, 64
      %v1428 = vpop.permute.xlu0 %1427
      %1429 = vrot.lane.b32.xlu0 %v1362, 64
      %v1430 = vpop.permute.xlu0 %1429
      %1431 = vrot.lane.b32.xlu0 %v1365, 64
      %v1432 = vpop.permute.xlu0 %1431
      %1433 = vrot.lane.b32.xlu0 %v1368, 64
      %v1434 = vpop.permute.xlu0 %1433
      %1435 = vrot.lane.b32.xlu0 %v1371, 64
      %v1436 = vpop.permute.xlu0 %1435
      %1437 = vrot.lane.b32.xlu0 %v1374, 64
      %v1438 = vpop.permute.xlu0 %1437
      %1447 = vrot.lane.b32.xlu0 %v1293, 96
      %v1448 = vpop.permute.xlu0 %1447
      %1449 = vrot.lane.b32.xlu0 %v1295, 96
      %v1450 = vpop.permute.xlu0 %1449
      %1451 = vrot.lane.b32.xlu0 %v1297, 96
      %v1452 = vpop.permute.xlu0 %1451
      %1453 = vrot.lane.b32.xlu0 %v1299, 96
      %v1454 = vpop.permute.xlu0 %1453
      %1455 = vrot.lane.b32.xlu0 %v1301, 96
      %v1456 = vpop.permute.xlu0 %1455
      %1457 = vrot.lane.b32.xlu0 %v1303, 96
      %v1458 = vpop.permute.xlu0 %1457
      %1459 = vrot.lane.b32.xlu0 %v1305, 96
      %v1460 = vpop.permute.xlu0 %1459
      %1461 = vrot.lane.b32.xlu0 %v1307, 96
      %v1462 = vpop.permute.xlu0 %1461
      %1471 = vrot.lane.b32.xlu0 %v1356, 32
      %v1472 = vpop.permute.xlu0 %1471
      %1473 = vrot.lane.b32.xlu0 %v1359, 32
      %v1474 = vpop.permute.xlu0 %1473
      %1475 = vrot.lane.b32.xlu0 %v1362, 32
      %v1476 = vpop.permute.xlu0 %1475
      %1477 = vrot.lane.b32.xlu0 %v1365, 32
      %v1478 = vpop.permute.xlu0 %1477
      %1479 = vrot.lane.b32.xlu0 %v1368, 32
      %v1480 = vpop.permute.xlu0 %1479
      %1481 = vrot.lane.b32.xlu0 %v1371, 32
      %v1482 = vpop.permute.xlu0 %1481
      %1483 = vrot.lane.b32.xlu0 %v1374, 32
      %v1484 = vpop.permute.xlu0 %1483
      %1485 = vrot.lane.b32.xlu0 %v1390, 32
      %v1486 = vpop.permute.xlu0 %1485
      %1495 = vrot.lane.b32.xlu0 %v1295, 64
      %v1496 = vpop.permute.xlu0 %1495
      %1497 = vrot.lane.b32.xlu0 %v1297, 64
      %v1498 = vpop.permute.xlu0 %1497
      %1499 = vrot.lane.b32.xlu0 %v1299, 64
      %v1500 = vpop.permute.xlu0 %1499
      %1501 = vrot.lane.b32.xlu0 %v1301, 64
      %v1502 = vpop.permute.xlu0 %1501
      %1503 = vrot.lane.b32.xlu0 %v1303, 64
      %v1504 = vpop.permute.xlu0 %1503
      %1505 = vrot.lane.b32.xlu0 %v1305, 64
      %v1506 = vpop.permute.xlu0 %1505
      %1507 = vrot.lane.b32.xlu0 %v1307, 64
      %v1508 = vpop.permute.xlu0 %1507
      %1509 = vrot.lane.b32.xlu0 %v1309, 64
      %v1510 = vpop.permute.xlu0 %1509
      %1519 = vrot.lane.b32.xlu0 %v1335, 96
      %v1520 = vpop.permute.xlu0 %1519
      %1521 = vrot.lane.b32.xlu0 %v1338, 96
      %v1522 = vpop.permute.xlu0 %1521
      %1523 = vrot.lane.b32.xlu0 %v1341, 96
      %v1524 = vpop.permute.xlu0 %1523
      %1525 = vrot.lane.b32.xlu0 %v1344, 96
      %v1526 = vpop.permute.xlu0 %1525
      %1527 = vrot.lane.b32.xlu0 %v1347, 96
      %v1528 = vpop.permute.xlu0 %1527
      %1529 = vrot.lane.b32.xlu0 %v1350, 96
      %v1530 = vpop.permute.xlu0 %1529
      %1531 = vrot.lane.b32.xlu0 %v1379, 96
      %v1532 = vpop.permute.xlu0 %1531
      %1533 = vrot.lane.b32.xlu0 %v1395, 96
      %v1534 = vpop.permute.xlu0 %1533
      %v1543 = vsel %vm225, %v1291, %v1400
      %v1544 = vsel %vm225, %v1293, %v1402
      %v1545 = vsel %vm225, %v1295, %v1404
      %v1546 = vsel %vm225, %v1297, %v1406
      %v1547 = vsel %vm225, %v1299, %v1408
      %v1548 = vsel %vm225, %v1301, %v1410
      %v1549 = vsel %vm225, %v1303, %v1412
      %v1550 = vsel %vm225, %v1305, %v1414
      %v1551 = vsel %vm563, %v1543, %v1424
      %v1552 = vsel %vm563, %v1544, %v1426
      %v1553 = vsel %vm563, %v1545, %v1428
      %v1554 = vsel %vm563, %v1546, %v1430
      %v1555 = vsel %vm563, %v1547, %v1432
      %v1556 = vsel %vm563, %v1548, %v1434
      %v1557 = vsel %vm563, %v1549, %v1436
      %v1558 = vsel %vm563, %v1550, %v1438
      %v1559 = vsel %vm572, %v1551, %v1448
      %v1560 = vsel %vm572, %v1552, %v1450
      %v1561 = vsel %vm572, %v1553, %v1452
      %v1562 = vsel %vm572, %v1554, %v1454
      %v1563 = vsel %vm572, %v1555, %v1456
      %v1564 = vsel %vm572, %v1556, %v1458
      %v1565 = vsel %vm572, %v1557, %v1460
      %v1566 = vsel %vm572, %v1558, %v1462
      %v1567 = vsel %vm225, %v1332, %v1472
      %v1568 = vsel %vm225, %v1335, %v1474
      %v1569 = vsel %vm225, %v1338, %v1476
      %v1570 = vsel %vm225, %v1341, %v1478
      %v1571 = vsel %vm225, %v1344, %v1480
      %v1572 = vsel %vm225, %v1347, %v1482
      %v1573 = vsel %vm225, %v1350, %v1484
      %v1574 = vsel %vm225, %v1379, %v1486
      %v1575 = vsel %vm563, %v1567, %v1496
      %v1576 = vsel %vm563, %v1568, %v1498
      %v1577 = vsel %vm563, %v1569, %v1500
      %v1578 = vsel %vm563, %v1570, %v1502
      %v1579 = vsel %vm563, %v1571, %v1504
      %v1580 = vsel %vm563, %v1572, %v1506
      %v1581 = vsel %vm563, %v1573, %v1508
      %v1582 = vsel %vm563, %v1574, %v1510
      %v1583 = vsel %vm572, %v1575, %v1520
      %v1584 = vsel %vm572, %v1576, %v1522
      %v1585 = vsel %vm572, %v1577, %v1524
      %v1586 = vsel %vm572, %v1578, %v1526
      %v1587 = vsel %vm572, %v1579, %v1528
      %v1588 = vsel %vm572, %v1580, %v1530
      %v1589 = vsel %vm572, %v1581, %v1532
      %v1590 = vsel %vm572, %v1582, %v1534
      %v1592 = vperm.slane %v1282, 0
      %v1594 = vsel %vm225, %v1359, 0
      %v1596 = vsel %vm225, %v1362, 0
      %v1598 = vsel %vm225, %v1365, 0
      %v1600 = vsel %vm225, %v1368, 0
      %v1602 = vsel %vm225, %v1371, 0
      %v1604 = vsel %vm225, %v1374, 0
      %v1606 = vsel %vm225, %v1390, 0
      %v1608 = vsel %vm225, %v1398, 0
      %1610 = vmatpush.msra.mxu0 %v1260
      %1611 = vmatpush.msra.mxu0 %v1259
      %1612 = vmatpush.msra.mxu0 %v1258
      %1613 = vmatpush.msra.mxu0 %v1257
      %1614 = vmatpush.msra.mxu0 %v1256
      %1615 = vmatpush.msra.mxu0 %v1255
      %1616 = vmatpush.msra.mxu0 %v1254
      %1617 = vmatpush.msra.mxu0 %v1253
      %1618 = vmatpush.msra.mxu0 %v1252
      %1619 = vmatpush.msra.mxu0 %v1251
      %1620 = vmatpush.msra.mxu0 %v1250
      %1621 = vmatpush.msra.mxu0 %v1249
      %1622 = vmatpush.msra.mxu0 %v1248
      %1623 = vmatpush.msra.mxu0 %v1247
      %1624 = vmatpush.msra.mxu0 %v1246
      %1625 = vmatpush.msra.mxu0 %v1245
      %1626 = vmatmul.f32.gmra.mxu0 %v1559
      %v1627 = vpop.f32.mrf.mxu0
      %v1628 = vadd.f32 %v1592, %v1627
      %1629 = vmatmul.f32.gmra.mxu0 %v1560
      %v1630 = vpop.f32.mrf.mxu0
      %v1631 = vadd.f32 %v1592, %v1630
      %1632 = vmatmul.f32.gmra.mxu0 %v1561
      %v1633 = vpop.f32.mrf.mxu0
      %v1634 = vadd.f32 %v1592, %v1633
      %1635 = vmatmul.f32.gmra.mxu0 %v1562
      %v1636 = vpop.f32.mrf.mxu0
      %v1637 = vadd.f32 %v1592, %v1636
      %1638 = vmatmul.f32.gmra.mxu0 %v1563
      %v1639 = vpop.f32.mrf.mxu0
      %v1640 = vadd.f32 %v1592, %v1639
      %1641 = vmatmul.f32.gmra.mxu0 %v1564
      %v1642 = vpop.f32.mrf.mxu0
      %v1643 = vadd.f32 %v1592, %v1642
      %1644 = vmatmul.f32.gmra.mxu0 %v1565
      %v1645 = vpop.f32.mrf.mxu0
      %v1646 = vadd.f32 %v1592, %v1645
      %1647 = vmatmul.f32.gmra.mxu0 %v1566
      %v1648 = vpop.f32.mrf.mxu0
      %v1649 = vadd.f32 %v1592, %v1648
      %1650 = vdwg.mxu0
      %1651 = vmatpush.msra.mxu0 %v1276
      %1652 = vmatpush.msra.mxu0 %v1275
      %1653 = vmatpush.msra.mxu0 %v1274
      %1654 = vmatpush.msra.mxu0 %v1273
      %1655 = vmatpush.msra.mxu0 %v1272
      %1656 = vmatpush.msra.mxu0 %v1271
      %1657 = vmatpush.msra.mxu0 %v1270
      %1658 = vmatpush.msra.mxu0 %v1269
      %1659 = vmatpush.msra.mxu0 %v1268
      %1660 = vmatpush.msra.mxu0 %v1267
      %1661 = vmatpush.msra.mxu0 %v1266
      %1662 = vmatpush.msra.mxu0 %v1265
      %1663 = vmatpush.msra.mxu0 %v1264
      %1664 = vmatpush.msra.mxu0 %v1263
      %1665 = vmatpush.msra.mxu0 %v1262
      %1666 = vmatpush.msra.mxu0 %v1261
      %1667 = vmatmul.f32.gmra.mxu0 %v1583
      %v1668 = vpop.f32.mrf.mxu0
      %v1669 = vadd.f32 %v1628, %v1668
      %1670 = vmatmul.f32.gmra.mxu0 %v1584
      %v1671 = vpop.f32.mrf.mxu0
      %v1672 = vadd.f32 %v1631, %v1671
      %1673 = vmatmul.f32.gmra.mxu0 %v1585
      %v1674 = vpop.f32.mrf.mxu0
      %v1675 = vadd.f32 %v1634, %v1674
      %1676 = vmatmul.f32.gmra.mxu0 %v1586
      %v1677 = vpop.f32.mrf.mxu0
      %v1678 = vadd.f32 %v1637, %v1677
      %1679 = vmatmul.f32.gmra.mxu0 %v1587
      %v1680 = vpop.f32.mrf.mxu0
      %v1681 = vadd.f32 %v1640, %v1680
      %1682 = vmatmul.f32.gmra.mxu0 %v1588
      %v1683 = vpop.f32.mrf.mxu0
      %v1684 = vadd.f32 %v1643, %v1683
      %1685 = vmatmul.f32.gmra.mxu0 %v1589
      %v1686 = vpop.f32.mrf.mxu0
      %v1687 = vadd.f32 %v1646, %v1686
      %1688 = vmatmul.f32.gmra.mxu0 %v1590
      %v1689 = vpop.f32.mrf.mxu0
      %v1690 = vadd.f32 %v1649, %v1689
      %1691 = vdwg.mxu0
      %1692 = vmatpush.msra.mxu0 0.0
      %1693 = vmatpush.msra.mxu0 0.0
      %1694 = vmatpush.msra.mxu0 0.0
      %1695 = vmatpush.msra.mxu0 0.0
      %1696 = vmatpush.msra.mxu0 0.0
      %1697 = vmatpush.msra.mxu0 0.0
      %1698 = vmatpush.msra.mxu0 0.0
      %1699 = vmatpush.msra.mxu0 0.0
      %1700 = vmatpush.msra.mxu0 0.0
      %1701 = vmatpush.msra.mxu0 0.0
      %1702 = vmatpush.msra.mxu0 0.0
      %1703 = vmatpush.msra.mxu0 0.0
      %1704 = vmatpush.msra.mxu0 %v1280
      %1705 = vmatpush.msra.mxu0 %v1279
      %1706 = vmatpush.msra.mxu0 %v1278
      %1707 = vmatpush.msra.mxu0 %v1277
      %1708 = vmatmul.f32.gmra.mxu0 %v1594
      %v1709 = vpop.f32.mrf.mxu0
      %v1710 = vadd.f32 %v1669, %v1709
      %1711 = vmatmul.f32.gmra.mxu0 %v1596
      %v1712 = vpop.f32.mrf.mxu0
      %v1713 = vadd.f32 %v1672, %v1712
      %1714 = vmatmul.f32.gmra.mxu0 %v1598
      %v1715 = vpop.f32.mrf.mxu0
      %v1716 = vadd.f32 %v1675, %v1715
      %1717 = vmatmul.f32.gmra.mxu0 %v1600
      %v1718 = vpop.f32.mrf.mxu0
      %v1719 = vadd.f32 %v1678, %v1718
      %1720 = vmatmul.f32.gmra.mxu0 %v1602
      %v1721 = vpop.f32.mrf.mxu0
      %v1722 = vadd.f32 %v1681, %v1721
      %1723 = vmatmul.f32.gmra.mxu0 %v1604
      %v1724 = vpop.f32.mrf.mxu0
      %v1725 = vadd.f32 %v1684, %v1724
      %1726 = vmatmul.f32.gmra.mxu0 %v1606
      %v1727 = vpop.f32.mrf.mxu0
      %v1728 = vadd.f32 %v1687, %v1727
      %1729 = vmatmul.f32.gmra.mxu0 %v1608
      %v1730 = vpop.f32.mrf.mxu0
      %v1731 = vadd.f32 %v1690, %v1730
      %1732 = vdwg.mxu0
      %v1733 = vadd.f32 %v1710, %v724
      %v1734 = vadd.f32 %v1713, %v727
      %v1735 = vadd.f32 %v1716, %v730
      %v1736 = vadd.f32 %v1719, %v733
      %v1737 = vadd.f32 %v1722, %v736
      %v1738 = vadd.f32 %v1725, %v739
      %v1739 = vadd.f32 %v1728, %v742
      %v1740 = vadd.f32 %v1731, %v745
      %s1741 = scalar_lea.vmem %s1, 864
      %v1742 = vld [vmem:[%s1741] sm:$0xff]
      %v1743 = vld [vmem:[%s1741 + $0x8] sm:$0xff]
      %v1744 = vld [vmem:[%s1741 + $0x10] sm:$0xff]
      %v1745 = vld [vmem:[%s1741 + $0x18] sm:$0xff]
      %v1746 = vld [vmem:[%s1741 + $0x20] sm:$0xff]
      %v1747 = vld [vmem:[%s1741 + $0x28] sm:$0xff]
      %v1748 = vld [vmem:[%s1741 + $0x30] sm:$0xff]
      %v1749 = vld [vmem:[%s1741 + $0x38] sm:$0xff]
      %v1750 = vld [vmem:[%s1741 + $0x40] sm:$0xff]
      %v1751 = vld [vmem:[%s1741 + $0x48] sm:$0xff]
      %v1752 = vld [vmem:[%s1741 + $0x50] sm:$0xff]
      %v1753 = vld [vmem:[%s1741 + $0x58] sm:$0xff]
      %v1754 = vld [vmem:[%s1741 + $0x60] sm:$0xff]
      %v1755 = vld [vmem:[%s1741 + $0x68] sm:$0xff]
      %v1756 = vld [vmem:[%s1741 + $0x70] sm:$0xff]
      %v1757 = vld [vmem:[%s1741 + $0x78] sm:$0xff]
      %v1758 = vld [vmem:[%s1741 + $0x80] sm:$0xff]
      %v1759 = vld [vmem:[%s1741 + $0x88] sm:$0xff]
      %v1760 = vld [vmem:[%s1741 + $0x90] sm:$0xff]
      %v1761 = vld [vmem:[%s1741 + $0x98] sm:$0xff]
      %v1762 = vld [vmem:[%s1741 + $0xa0] sm:$0xff]
      %v1763 = vld [vmem:[%s1741 + $0xa8] sm:$0xff]
      %v1764 = vld [vmem:[%s1741 + $0xb0] sm:$0xff]
      %v1765 = vld [vmem:[%s1741 + $0xb8] sm:$0xff]
      %v1766 = vld [vmem:[%s1741 + $0xc0] sm:$0xff]
      %v1767 = vld [vmem:[%s1741 + $0xc8] sm:$0xff]
      %v1768 = vld [vmem:[%s1741 + $0xd0] sm:$0xff]
      %v1769 = vld [vmem:[%s1741 + $0xd8] sm:$0xff]
      %v1770 = vld [vmem:[%s1741 + $0xe0] sm:$0xff]
      %v1771 = vld [vmem:[%s1741 + $0xe8] sm:$0xff]
      %v1772 = vld [vmem:[%s1741 + $0xf0] sm:$0xff]
      %v1773 = vld [vmem:[%s1741 + $0xf8] sm:$0xff]
      %v1774 = vld [vmem:[%s1741 + $0x100] sm:$0xff]
      %v1775 = vld [vmem:[%s1741 + $0x108] sm:$0xff]
      %v1776 = vld [vmem:[%s1741 + $0x110] sm:$0xff]
      %v1777 = vld [vmem:[%s1741 + $0x118] sm:$0xff]
      %s1778 = scalar_lea.vmem %s2, 3
      %v1779 = vld [vmem:[%s1778] sm:$0x1]
      %1780 = vst.msk [vmem:[%s292 + $0x1] sm:$0xff] %vm225, %v1733
      %1781 = vst.msk [vmem:[%s292 + $0x11] sm:$0xff] %vm225, %v1734
      %1782 = vst.msk [vmem:[%s292 + $0x21] sm:$0xff] %vm225, %v1735
      %1783 = vst.msk [vmem:[%s292 + $0x31] sm:$0xff] %vm225, %v1736
      %1784 = vst.msk [vmem:[%s292 + $0x41] sm:$0xff] %vm225, %v1737
      %1785 = vst.msk [vmem:[%s292 + $0x51] sm:$0xff] %vm225, %v1738
      %1786 = vst.msk [vmem:[%s292 + $0x61] sm:$0xff] %vm225, %v1739
      %1787 = vst.msk [vmem:[%s292 + $0x71] sm:$0xff] %vm225, %v1740
      %v1788 = vld [vmem:[#allocation2] sm:$0xff]
      %v1789 = vld [vmem:[#allocation2 + $0x8] sm:$0x3]
      %v1790 = vld [vmem:[#allocation2 + $0x10] sm:$0xff]
      %v1791 = vld [vmem:[#allocation2 + $0x18] sm:$0x3]
      %v1792 = vld [vmem:[#allocation2 + $0x20] sm:$0xff]
      %v1793 = vld [vmem:[#allocation2 + $0x28] sm:$0x3]
      %v1794 = vld [vmem:[#allocation2 + $0x30] sm:$0xff]
      %v1795 = vld [vmem:[#allocation2 + $0x38] sm:$0x3]
      %v1796 = vld [vmem:[#allocation2 + $0x40] sm:$0xff]
      %v1797 = vld [vmem:[#allocation2 + $0x48] sm:$0x3]
      %v1798 = vld [vmem:[#allocation2 + $0x50] sm:$0xff]
      %v1799 = vld [vmem:[#allocation2 + $0x58] sm:$0x3]
      %v1800 = vld [vmem:[#allocation2 + $0x60] sm:$0xff]
      %v1801 = vld [vmem:[#allocation2 + $0x68] sm:$0x3]
      %v1802 = vld [vmem:[#allocation2 + $0x70] sm:$0xff]
      %v1803 = vld [vmem:[#allocation2 + $0x78] sm:$0x3]
      %v1804 = vld [vmem:[#allocation2 + $0x80] sm:$0xff]
      %v1805 = vld [vmem:[#allocation2 + $0x88] sm:$0x3]
      %v1806 = vld [vmem:[#allocation2 + $0x90] sm:$0xff]
      %v1807 = vld [vmem:[#allocation2 + $0x98] sm:$0x3]
      %v1824 = vrot.slane %v1788, 1
      %v1825 = vrot.slane %v1789, 1
      %v1826 = vsel %vm337, %v1824, %v1825
      %v1827 = vrot.slane %v1790, 1
      %v1828 = vrot.slane %v1791, 1
      %v1829 = vsel %vm337, %v1827, %v1828
      %v1830 = vrot.slane %v1792, 1
      %v1831 = vrot.slane %v1793, 1
      %v1832 = vsel %vm337, %v1830, %v1831
      %v1833 = vrot.slane %v1794, 1
      %v1834 = vrot.slane %v1795, 1
      %v1835 = vsel %vm337, %v1833, %v1834
      %v1836 = vrot.slane %v1796, 1
      %v1837 = vrot.slane %v1797, 1
      %v1838 = vsel %vm337, %v1836, %v1837
      %v1839 = vrot.slane %v1798, 1
      %v1840 = vrot.slane %v1799, 1
      %v1841 = vsel %vm337, %v1839, %v1840
      %v1842 = vrot.slane %v1800, 1
      %v1843 = vrot.slane %v1801, 1
      %v1844 = vsel %vm337, %v1842, %v1843
      %v1845 = vrot.slane %v1802, 1
      %v1846 = vrot.slane %v1803, 1
      %v1847 = vsel %vm337, %v1845, %v1846
      %v1848 = vrot.slane %v1788, 2
      %v1849 = vrot.slane %v1789, 2
      %v1850 = vsel %vm362, %v1848, %v1849
      %v1851 = vrot.slane %v1790, 2
      %v1852 = vrot.slane %v1791, 2
      %v1853 = vsel %vm362, %v1851, %v1852
      %v1854 = vrot.slane %v1792, 2
      %v1855 = vrot.slane %v1793, 2
      %v1856 = vsel %vm362, %v1854, %v1855
      %v1857 = vrot.slane %v1794, 2
      %v1858 = vrot.slane %v1795, 2
      %v1859 = vsel %vm362, %v1857, %v1858
      %v1860 = vrot.slane %v1796, 2
      %v1861 = vrot.slane %v1797, 2
      %v1862 = vsel %vm362, %v1860, %v1861
      %v1863 = vrot.slane %v1798, 2
      %v1864 = vrot.slane %v1799, 2
      %v1865 = vsel %vm362, %v1863, %v1864
      %v1866 = vrot.slane %v1800, 2
      %v1867 = vrot.slane %v1801, 2
      %v1868 = vsel %vm362, %v1866, %v1867
      %v1869 = vrot.slane %v1802, 2
      %v1870 = vrot.slane %v1803, 2
      %v1871 = vsel %vm362, %v1869, %v1870
      %v1874 = vrot.slane %v1804, 1
      %v1875 = vrot.slane %v1805, 1
      %v1876 = vsel %vm337, %v1874, %v1875
      %v1885 = vrot.slane %v1804, 2
      %v1886 = vrot.slane %v1805, 2
      %v1887 = vsel %vm362, %v1885, %v1886
      %v1890 = vrot.slane %v1806, 1
      %v1891 = vrot.slane %v1807, 1
      %v1892 = vsel %vm337, %v1890, %v1891
      %v1893 = vrot.slane %v1806, 2
      %v1894 = vrot.slane %v1807, 2
      %v1895 = vsel %vm362, %v1893, %v1894
      %1896 = vrot.lane.b32.xlu0 %v1826, 32
      %v1897 = vpop.permute.xlu0 %1896
      %1898 = vrot.lane.b32.xlu0 %v1829, 32
      %v1899 = vpop.permute.xlu0 %1898
      %1900 = vrot.lane.b32.xlu0 %v1832, 32
      %v1901 = vpop.permute.xlu0 %1900
      %1902 = vrot.lane.b32.xlu0 %v1835, 32
      %v1903 = vpop.permute.xlu0 %1902
      %1904 = vrot.lane.b32.xlu0 %v1838, 32
      %v1905 = vpop.permute.xlu0 %1904
      %1906 = vrot.lane.b32.xlu0 %v1841, 32
      %v1907 = vpop.permute.xlu0 %1906
      %1908 = vrot.lane.b32.xlu0 %v1844, 32
      %v1909 = vpop.permute.xlu0 %1908
      %1910 = vrot.lane.b32.xlu0 %v1847, 32
      %v1911 = vpop.permute.xlu0 %1910
      %1920 = vrot.lane.b32.xlu0 %v1850, 64
      %v1921 = vpop.permute.xlu0 %1920
      %1922 = vrot.lane.b32.xlu0 %v1853, 64
      %v1923 = vpop.permute.xlu0 %1922
      %1924 = vrot.lane.b32.xlu0 %v1856, 64
      %v1925 = vpop.permute.xlu0 %1924
      %1926 = vrot.lane.b32.xlu0 %v1859, 64
      %v1927 = vpop.permute.xlu0 %1926
      %1928 = vrot.lane.b32.xlu0 %v1862, 64
      %v1929 = vpop.permute.xlu0 %1928
      %1930 = vrot.lane.b32.xlu0 %v1865, 64
      %v1931 = vpop.permute.xlu0 %1930
      %1932 = vrot.lane.b32.xlu0 %v1868, 64
      %v1933 = vpop.permute.xlu0 %1932
      %1934 = vrot.lane.b32.xlu0 %v1871, 64
      %v1935 = vpop.permute.xlu0 %1934
      %1944 = vrot.lane.b32.xlu0 %v1790, 96
      %v1945 = vpop.permute.xlu0 %1944
      %1946 = vrot.lane.b32.xlu0 %v1792, 96
      %v1947 = vpop.permute.xlu0 %1946
      %1948 = vrot.lane.b32.xlu0 %v1794, 96
      %v1949 = vpop.permute.xlu0 %1948
      %1950 = vrot.lane.b32.xlu0 %v1796, 96
      %v1951 = vpop.permute.xlu0 %1950
      %1952 = vrot.lane.b32.xlu0 %v1798, 96
      %v1953 = vpop.permute.xlu0 %1952
      %1954 = vrot.lane.b32.xlu0 %v1800, 96
      %v1955 = vpop.permute.xlu0 %1954
      %1956 = vrot.lane.b32.xlu0 %v1802, 96
      %v1957 = vpop.permute.xlu0 %1956
      %1958 = vrot.lane.b32.xlu0 %v1804, 96
      %v1959 = vpop.permute.xlu0 %1958
      %1968 = vrot.lane.b32.xlu0 %v1853, 32
      %v1969 = vpop.permute.xlu0 %1968
      %1970 = vrot.lane.b32.xlu0 %v1856, 32
      %v1971 = vpop.permute.xlu0 %1970
      %1972 = vrot.lane.b32.xlu0 %v1859, 32
      %v1973 = vpop.permute.xlu0 %1972
      %1974 = vrot.lane.b32.xlu0 %v1862, 32
      %v1975 = vpop.permute.xlu0 %1974
      %1976 = vrot.lane.b32.xlu0 %v1865, 32
      %v1977 = vpop.permute.xlu0 %1976
      %1978 = vrot.lane.b32.xlu0 %v1868, 32
      %v1979 = vpop.permute.xlu0 %1978
      %1980 = vrot.lane.b32.xlu0 %v1871, 32
      %v1981 = vpop.permute.xlu0 %1980
      %1982 = vrot.lane.b32.xlu0 %v1887, 32
      %v1983 = vpop.permute.xlu0 %1982
      %1992 = vrot.lane.b32.xlu0 %v1792, 64
      %v1993 = vpop.permute.xlu0 %1992
      %1994 = vrot.lane.b32.xlu0 %v1794, 64
      %v1995 = vpop.permute.xlu0 %1994
      %1996 = vrot.lane.b32.xlu0 %v1796, 64
      %v1997 = vpop.permute.xlu0 %1996
      %1998 = vrot.lane.b32.xlu0 %v1798, 64
      %v1999 = vpop.permute.xlu0 %1998
      %2000 = vrot.lane.b32.xlu0 %v1800, 64
      %v2001 = vpop.permute.xlu0 %2000
      %2002 = vrot.lane.b32.xlu0 %v1802, 64
      %v2003 = vpop.permute.xlu0 %2002
      %2004 = vrot.lane.b32.xlu0 %v1804, 64
      %v2005 = vpop.permute.xlu0 %2004
      %2006 = vrot.lane.b32.xlu0 %v1806, 64
      %v2007 = vpop.permute.xlu0 %2006
      %2016 = vrot.lane.b32.xlu0 %v1832, 96
      %v2017 = vpop.permute.xlu0 %2016
      %2018 = vrot.lane.b32.xlu0 %v1835, 96
      %v2019 = vpop.permute.xlu0 %2018
      %2020 = vrot.lane.b32.xlu0 %v1838, 96
      %v2021 = vpop.permute.xlu0 %2020
      %2022 = vrot.lane.b32.xlu0 %v1841, 96
      %v2023 = vpop.permute.xlu0 %2022
      %2024 = vrot.lane.b32.xlu0 %v1844, 96
      %v2025 = vpop.permute.xlu0 %2024
      %2026 = vrot.lane.b32.xlu0 %v1847, 96
      %v2027 = vpop.permute.xlu0 %2026
      %2028 = vrot.lane.b32.xlu0 %v1876, 96
      %v2029 = vpop.permute.xlu0 %2028
      %2030 = vrot.lane.b32.xlu0 %v1892, 96
      %v2031 = vpop.permute.xlu0 %2030
      %v2040 = vsel %vm225, %v1788, %v1897
      %v2041 = vsel %vm225, %v1790, %v1899
      %v2042 = vsel %vm225, %v1792, %v1901
      %v2043 = vsel %vm225, %v1794, %v1903
      %v2044 = vsel %vm225, %v1796, %v1905
      %v2045 = vsel %vm225, %v1798, %v1907
      %v2046 = vsel %vm225, %v1800, %v1909
      %v2047 = vsel %vm225, %v1802, %v1911
      %v2048 = vsel %vm563, %v2040, %v1921
      %v2049 = vsel %vm563, %v2041, %v1923
      %v2050 = vsel %vm563, %v2042, %v1925
      %v2051 = vsel %vm563, %v2043, %v1927
      %v2052 = vsel %vm563, %v2044, %v1929
      %v2053 = vsel %vm563, %v2045, %v1931
      %v2054 = vsel %vm563, %v2046, %v1933
      %v2055 = vsel %vm563, %v2047, %v1935
      %v2056 = vsel %vm572, %v2048, %v1945
      %v2057 = vsel %vm572, %v2049, %v1947
      %v2058 = vsel %vm572, %v2050, %v1949
      %v2059 = vsel %vm572, %v2051, %v1951
      %v2060 = vsel %vm572, %v2052, %v1953
      %v2061 = vsel %vm572, %v2053, %v1955
      %v2062 = vsel %vm572, %v2054, %v1957
      %v2063 = vsel %vm572, %v2055, %v1959
      %v2064 = vsel %vm225, %v1829, %v1969
      %v2065 = vsel %vm225, %v1832, %v1971
      %v2066 = vsel %vm225, %v1835, %v1973
      %v2067 = vsel %vm225, %v1838, %v1975
      %v2068 = vsel %vm225, %v1841, %v1977
      %v2069 = vsel %vm225, %v1844, %v1979
      %v2070 = vsel %vm225, %v1847, %v1981
      %v2071 = vsel %vm225, %v1876, %v1983
      %v2072 = vsel %vm563, %v2064, %v1993
      %v2073 = vsel %vm563, %v2065, %v1995
      %v2074 = vsel %vm563, %v2066, %v1997
      %v2075 = vsel %vm563, %v2067, %v1999
      %v2076 = vsel %vm563, %v2068, %v2001
      %v2077 = vsel %vm563, %v2069, %v2003
      %v2078 = vsel %vm563, %v2070, %v2005
      %v2079 = vsel %vm563, %v2071, %v2007
      %v2080 = vsel %vm572, %v2072, %v2017
      %v2081 = vsel %vm572, %v2073, %v2019
      %v2082 = vsel %vm572, %v2074, %v2021
      %v2083 = vsel %vm572, %v2075, %v2023
      %v2084 = vsel %vm572, %v2076, %v2025
      %v2085 = vsel %vm572, %v2077, %v2027
      %v2086 = vsel %vm572, %v2078, %v2029
      %v2087 = vsel %vm572, %v2079, %v2031
      %v2089 = vperm.slane %v1779, 0
      %v2091 = vsel %vm225, %v1856, 0
      %v2093 = vsel %vm225, %v1859, 0
      %v2095 = vsel %vm225, %v1862, 0
      %v2097 = vsel %vm225, %v1865, 0
      %v2099 = vsel %vm225, %v1868, 0
      %v2101 = vsel %vm225, %v1871, 0
      %v2103 = vsel %vm225, %v1887, 0
      %v2105 = vsel %vm225, %v1895, 0
      %2107 = vmatpush.msra.mxu0 %v1757
      %2108 = vmatpush.msra.mxu0 %v1756
      %2109 = vmatpush.msra.mxu0 %v1755
      %2110 = vmatpush.msra.mxu0 %v1754
      %2111 = vmatpush.msra.mxu0 %v1753
      %2112 = vmatpush.msra.mxu0 %v1752
      %2113 = vmatpush.msra.mxu0 %v1751
      %2114 = vmatpush.msra.mxu0 %v1750
      %2115 = vmatpush.msra.mxu0 %v1749
      %2116 = vmatpush.msra.mxu0 %v1748
      %2117 = vmatpush.msra.mxu0 %v1747
      %2118 = vmatpush.msra.mxu0 %v1746
      %2119 = vmatpush.msra.mxu0 %v1745
      %2120 = vmatpush.msra.mxu0 %v1744
      %2121 = vmatpush.msra.mxu0 %v1743
      %2122 = vmatpush.msra.mxu0 %v1742
      %2123 = vmatmul.f32.gmra.mxu0 %v2056
      %v2124 = vpop.f32.mrf.mxu0
      %v2125 = vadd.f32 %v2089, %v2124
      %2126 = vmatmul.f32.gmra.mxu0 %v2057
      %v2127 = vpop.f32.mrf.mxu0
      %v2128 = vadd.f32 %v2089, %v2127
      %2129 = vmatmul.f32.gmra.mxu0 %v2058
      %v2130 = vpop.f32.mrf.mxu0
      %v2131 = vadd.f32 %v2089, %v2130
      %2132 = vmatmul.f32.gmra.mxu0 %v2059
      %v2133 = vpop.f32.mrf.mxu0
      %v2134 = vadd.f32 %v2089, %v2133
      %2135 = vmatmul.f32.gmra.mxu0 %v2060
      %v2136 = vpop.f32.mrf.mxu0
      %v2137 = vadd.f32 %v2089, %v2136
      %2138 = vmatmul.f32.gmra.mxu0 %v2061
      %v2139 = vpop.f32.mrf.mxu0
      %v2140 = vadd.f32 %v2089, %v2139
      %2141 = vmatmul.f32.gmra.mxu0 %v2062
      %v2142 = vpop.f32.mrf.mxu0
      %v2143 = vadd.f32 %v2089, %v2142
      %2144 = vmatmul.f32.gmra.mxu0 %v2063
      %v2145 = vpop.f32.mrf.mxu0
      %v2146 = vadd.f32 %v2089, %v2145
      %2147 = vdwg.mxu0
      %2148 = vmatpush.msra.mxu0 %v1773
      %2149 = vmatpush.msra.mxu0 %v1772
      %2150 = vmatpush.msra.mxu0 %v1771
      %2151 = vmatpush.msra.mxu0 %v1770
      %2152 = vmatpush.msra.mxu0 %v1769
      %2153 = vmatpush.msra.mxu0 %v1768
      %2154 = vmatpush.msra.mxu0 %v1767
      %2155 = vmatpush.msra.mxu0 %v1766
      %2156 = vmatpush.msra.mxu0 %v1765
      %2157 = vmatpush.msra.mxu0 %v1764
      %2158 = vmatpush.msra.mxu0 %v1763
      %2159 = vmatpush.msra.mxu0 %v1762
      %2160 = vmatpush.msra.mxu0 %v1761
      %2161 = vmatpush.msra.mxu0 %v1760
      %2162 = vmatpush.msra.mxu0 %v1759
      %2163 = vmatpush.msra.mxu0 %v1758
      %2164 = vmatmul.f32.gmra.mxu0 %v2080
      %v2165 = vpop.f32.mrf.mxu0
      %v2166 = vadd.f32 %v2125, %v2165
      %2167 = vmatmul.f32.gmra.mxu0 %v2081
      %v2168 = vpop.f32.mrf.mxu0
      %v2169 = vadd.f32 %v2128, %v2168
      %2170 = vmatmul.f32.gmra.mxu0 %v2082
      %v2171 = vpop.f32.mrf.mxu0
      %v2172 = vadd.f32 %v2131, %v2171
      %2173 = vmatmul.f32.gmra.mxu0 %v2083
      %v2174 = vpop.f32.mrf.mxu0
      %v2175 = vadd.f32 %v2134, %v2174
      %2176 = vmatmul.f32.gmra.mxu0 %v2084
      %v2177 = vpop.f32.mrf.mxu0
      %v2178 = vadd.f32 %v2137, %v2177
      %2179 = vmatmul.f32.gmra.mxu0 %v2085
      %v2180 = vpop.f32.mrf.mxu0
      %v2181 = vadd.f32 %v2140, %v2180
      %2182 = vmatmul.f32.gmra.mxu0 %v2086
      %v2183 = vpop.f32.mrf.mxu0
      %v2184 = vadd.f32 %v2143, %v2183
      %2185 = vmatmul.f32.gmra.mxu0 %v2087
      %v2186 = vpop.f32.mrf.mxu0
      %v2187 = vadd.f32 %v2146, %v2186
      %2188 = vdwg.mxu0
      %2189 = vmatpush.msra.mxu0 0.0
      %2190 = vmatpush.msra.mxu0 0.0
      %2191 = vmatpush.msra.mxu0 0.0
      %2192 = vmatpush.msra.mxu0 0.0
      %2193 = vmatpush.msra.mxu0 0.0
      %2194 = vmatpush.msra.mxu0 0.0
      %2195 = vmatpush.msra.mxu0 0.0
      %2196 = vmatpush.msra.mxu0 0.0
      %2197 = vmatpush.msra.mxu0 0.0
      %2198 = vmatpush.msra.mxu0 0.0
      %2199 = vmatpush.msra.mxu0 0.0
      %2200 = vmatpush.msra.mxu0 0.0
      %2201 = vmatpush.msra.mxu0 %v1777
      %2202 = vmatpush.msra.mxu0 %v1776
      %2203 = vmatpush.msra.mxu0 %v1775
      %2204 = vmatpush.msra.mxu0 %v1774
      %2205 = vmatmul.f32.gmra.mxu0 %v2091
      %v2206 = vpop.f32.mrf.mxu0
      %v2207 = vadd.f32 %v2166, %v2206
      %2208 = vmatmul.f32.gmra.mxu0 %v2093
      %v2209 = vpop.f32.mrf.mxu0
      %v2210 = vadd.f32 %v2169, %v2209
      %2211 = vmatmul.f32.gmra.mxu0 %v2095
      %v2212 = vpop.f32.mrf.mxu0
      %v2213 = vadd.f32 %v2172, %v2212
      %2214 = vmatmul.f32.gmra.mxu0 %v2097
      %v2215 = vpop.f32.mrf.mxu0
      %v2216 = vadd.f32 %v2175, %v2215
      %2217 = vmatmul.f32.gmra.mxu0 %v2099
      %v2218 = vpop.f32.mrf.mxu0
      %v2219 = vadd.f32 %v2178, %v2218
      %2220 = vmatmul.f32.gmra.mxu0 %v2101
      %v2221 = vpop.f32.mrf.mxu0
      %v2222 = vadd.f32 %v2181, %v2221
      %2223 = vmatmul.f32.gmra.mxu0 %v2103
      %v2224 = vpop.f32.mrf.mxu0
      %v2225 = vadd.f32 %v2184, %v2224
      %2226 = vmatmul.f32.gmra.mxu0 %v2105
      %v2227 = vpop.f32.mrf.mxu0
      %v2228 = vadd.f32 %v2187, %v2227
      %2229 = vdwg.mxu0
      %v2230 = vmax.f32 %v2207, 0.0
      %v2231 = vmax.f32 %v2210, 0.0
      %v2232 = vmax.f32 %v2213, 0.0
      %v2233 = vmax.f32 %v2216, 0.0
      %v2234 = vmax.f32 %v2219, 0.0
      %v2235 = vmax.f32 %v2222, 0.0
      %v2236 = vmax.f32 %v2225, 0.0
      %v2237 = vmax.f32 %v2228, 0.0
      %s2238 = scalar_lea.vmem %s1, 1152
      %v2239 = vld [vmem:[%s2238] sm:$0xff]
      %v2240 = vld [vmem:[%s2238 + $0x8] sm:$0xff]
      %v2241 = vld [vmem:[%s2238 + $0x10] sm:$0xff]
      %v2242 = vld [vmem:[%s2238 + $0x18] sm:$0xff]
      %v2243 = vld [vmem:[%s2238 + $0x20] sm:$0xff]
      %v2244 = vld [vmem:[%s2238 + $0x28] sm:$0xff]
      %v2245 = vld [vmem:[%s2238 + $0x30] sm:$0xff]
      %v2246 = vld [vmem:[%s2238 + $0x38] sm:$0xff]
      %v2247 = vld [vmem:[%s2238 + $0x40] sm:$0xff]
      %v2248 = vld [vmem:[%s2238 + $0x48] sm:$0xff]
      %v2249 = vld [vmem:[%s2238 + $0x50] sm:$0xff]
      %v2250 = vld [vmem:[%s2238 + $0x58] sm:$0xff]
      %v2251 = vld [vmem:[%s2238 + $0x60] sm:$0xff]
      %v2252 = vld [vmem:[%s2238 + $0x68] sm:$0xff]
      %v2253 = vld [vmem:[%s2238 + $0x70] sm:$0xff]
      %v2254 = vld [vmem:[%s2238 + $0x78] sm:$0xff]
      %v2255 = vld [vmem:[%s2238 + $0x80] sm:$0xff]
      %v2256 = vld [vmem:[%s2238 + $0x88] sm:$0xff]
      %v2257 = vld [vmem:[%s2238 + $0x90] sm:$0xff]
      %v2258 = vld [vmem:[%s2238 + $0x98] sm:$0xff]
      %v2259 = vld [vmem:[%s2238 + $0xa0] sm:$0xff]
      %v2260 = vld [vmem:[%s2238 + $0xa8] sm:$0xff]
      %v2261 = vld [vmem:[%s2238 + $0xb0] sm:$0xff]
      %v2262 = vld [vmem:[%s2238 + $0xb8] sm:$0xff]
      %v2263 = vld [vmem:[%s2238 + $0xc0] sm:$0xff]
      %v2264 = vld [vmem:[%s2238 + $0xc8] sm:$0xff]
      %v2265 = vld [vmem:[%s2238 + $0xd0] sm:$0xff]
      %v2266 = vld [vmem:[%s2238 + $0xd8] sm:$0xff]
      %v2267 = vld [vmem:[%s2238 + $0xe0] sm:$0xff]
      %v2268 = vld [vmem:[%s2238 + $0xe8] sm:$0xff]
      %v2269 = vld [vmem:[%s2238 + $0xf0] sm:$0xff]
      %v2270 = vld [vmem:[%s2238 + $0xf8] sm:$0xff]
      %v2271 = vld [vmem:[%s2238 + $0x100] sm:$0xff]
      %v2272 = vld [vmem:[%s2238 + $0x108] sm:$0xff]
      %v2273 = vld [vmem:[%s2238 + $0x110] sm:$0xff]
      %v2274 = vld [vmem:[%s2238 + $0x118] sm:$0xff]
      %s2275 = scalar_lea.vmem %s2, 4
      %v2276 = vld [vmem:[%s2275] sm:$0x1]
      %2277 = vst.msk [vmem:[%s292 + $0x1] sm:$0xff] %vm225, %v2230
      %2278 = vst.msk [vmem:[%s292 + $0x11] sm:$0xff] %vm225, %v2231
      %2279 = vst.msk [vmem:[%s292 + $0x21] sm:$0xff] %vm225, %v2232
      %2280 = vst.msk [vmem:[%s292 + $0x31] sm:$0xff] %vm225, %v2233
      %2281 = vst.msk [vmem:[%s292 + $0x41] sm:$0xff] %vm225, %v2234
      %2282 = vst.msk [vmem:[%s292 + $0x51] sm:$0xff] %vm225, %v2235
      %2283 = vst.msk [vmem:[%s292 + $0x61] sm:$0xff] %vm225, %v2236
      %2284 = vst.msk [vmem:[%s292 + $0x71] sm:$0xff] %vm225, %v2237
      %v2285 = vld [vmem:[#allocation2] sm:$0xff]
      %v2286 = vld [vmem:[#allocation2 + $0x8] sm:$0x3]
      %v2287 = vld [vmem:[#allocation2 + $0x10] sm:$0xff]
      %v2288 = vld [vmem:[#allocation2 + $0x18] sm:$0x3]
      %v2289 = vld [vmem:[#allocation2 + $0x20] sm:$0xff]
      %v2290 = vld [vmem:[#allocation2 + $0x28] sm:$0x3]
      %v2291 = vld [vmem:[#allocation2 + $0x30] sm:$0xff]
      %v2292 = vld [vmem:[#allocation2 + $0x38] sm:$0x3]
      %v2293 = vld [vmem:[#allocation2 + $0x40] sm:$0xff]
      %v2294 = vld [vmem:[#allocation2 + $0x48] sm:$0x3]
      %v2295 = vld [vmem:[#allocation2 + $0x50] sm:$0xff]
      %v2296 = vld [vmem:[#allocation2 + $0x58] sm:$0x3]
      %v2297 = vld [vmem:[#allocation2 + $0x60] sm:$0xff]
      %v2298 = vld [vmem:[#allocation2 + $0x68] sm:$0x3]
      %v2299 = vld [vmem:[#allocation2 + $0x70] sm:$0xff]
      %v2300 = vld [vmem:[#allocation2 + $0x78] sm:$0x3]
      %v2301 = vld [vmem:[#allocation2 + $0x80] sm:$0xff]
      %v2302 = vld [vmem:[#allocation2 + $0x88] sm:$0x3]
      %v2303 = vld [vmem:[#allocation2 + $0x90] sm:$0xff]
      %v2304 = vld [vmem:[#allocation2 + $0x98] sm:$0x3]
      %v2321 = vrot.slane %v2285, 1
      %v2322 = vrot.slane %v2286, 1
      %v2323 = vsel %vm337, %v2321, %v2322
      %v2324 = vrot.slane %v2287, 1
      %v2325 = vrot.slane %v2288, 1
      %v2326 = vsel %vm337, %v2324, %v2325
      %v2327 = vrot.slane %v2289, 1
      %v2328 = vrot.slane %v2290, 1
      %v2329 = vsel %vm337, %v2327, %v2328
      %v2330 = vrot.slane %v2291, 1
      %v2331 = vrot.slane %v2292, 1
      %v2332 = vsel %vm337, %v2330, %v2331
      %v2333 = vrot.slane %v2293, 1
      %v2334 = vrot.slane %v2294, 1
      %v2335 = vsel %vm337, %v2333, %v2334
      %v2336 = vrot.slane %v2295, 1
      %v2337 = vrot.slane %v2296, 1
      %v2338 = vsel %vm337, %v2336, %v2337
      %v2339 = vrot.slane %v2297, 1
      %v2340 = vrot.slane %v2298, 1
      %v2341 = vsel %vm337, %v2339, %v2340
      %v2342 = vrot.slane %v2299, 1
      %v2343 = vrot.slane %v2300, 1
      %v2344 = vsel %vm337, %v2342, %v2343
      %v2345 = vrot.slane %v2285, 2
      %v2346 = vrot.slane %v2286, 2
      %v2347 = vsel %vm362, %v2345, %v2346
      %v2348 = vrot.slane %v2287, 2
      %v2349 = vrot.slane %v2288, 2
      %v2350 = vsel %vm362, %v2348, %v2349
      %v2351 = vrot.slane %v2289, 2
      %v2352 = vrot.slane %v2290, 2
      %v2353 = vsel %vm362, %v2351, %v2352
      %v2354 = vrot.slane %v2291, 2
      %v2355 = vrot.slane %v2292, 2
      %v2356 = vsel %vm362, %v2354, %v2355
      %v2357 = vrot.slane %v2293, 2
      %v2358 = vrot.slane %v2294, 2
      %v2359 = vsel %vm362, %v2357, %v2358
      %v2360 = vrot.slane %v2295, 2
      %v2361 = vrot.slane %v2296, 2
      %v2362 = vsel %vm362, %v2360, %v2361
      %v2363 = vrot.slane %v2297, 2
      %v2364 = vrot.slane %v2298, 2
      %v2365 = vsel %vm362, %v2363, %v2364
      %v2366 = vrot.slane %v2299, 2
      %v2367 = vrot.slane %v2300, 2
      %v2368 = vsel %vm362, %v2366, %v2367
      %v2371 = vrot.slane %v2301, 1
      %v2372 = vrot.slane %v2302, 1
      %v2373 = vsel %vm337, %v2371, %v2372
      %v2382 = vrot.slane %v2301, 2
      %v2383 = vrot.slane %v2302, 2
      %v2384 = vsel %vm362, %v2382, %v2383
      %v2387 = vrot.slane %v2303, 1
      %v2388 = vrot.slane %v2304, 1
      %v2389 = vsel %vm337, %v2387, %v2388
      %v2390 = vrot.slane %v2303, 2
      %v2391 = vrot.slane %v2304, 2
      %v2392 = vsel %vm362, %v2390, %v2391
      %2393 = vrot.lane.b32.xlu0 %v2323, 32
      %v2394 = vpop.permute.xlu0 %2393
      %2395 = vrot.lane.b32.xlu0 %v2326, 32
      %v2396 = vpop.permute.xlu0 %2395
      %2397 = vrot.lane.b32.xlu0 %v2329, 32
      %v2398 = vpop.permute.xlu0 %2397
      %2399 = vrot.lane.b32.xlu0 %v2332, 32
      %v2400 = vpop.permute.xlu0 %2399
      %2401 = vrot.lane.b32.xlu0 %v2335, 32
      %v2402 = vpop.permute.xlu0 %2401
      %2403 = vrot.lane.b32.xlu0 %v2338, 32
      %v2404 = vpop.permute.xlu0 %2403
      %2405 = vrot.lane.b32.xlu0 %v2341, 32
      %v2406 = vpop.permute.xlu0 %2405
      %2407 = vrot.lane.b32.xlu0 %v2344, 32
      %v2408 = vpop.permute.xlu0 %2407
      %2417 = vrot.lane.b32.xlu0 %v2347, 64
      %v2418 = vpop.permute.xlu0 %2417
      %2419 = vrot.lane.b32.xlu0 %v2350, 64
      %v2420 = vpop.permute.xlu0 %2419
      %2421 = vrot.lane.b32.xlu0 %v2353, 64
      %v2422 = vpop.permute.xlu0 %2421
      %2423 = vrot.lane.b32.xlu0 %v2356, 64
      %v2424 = vpop.permute.xlu0 %2423
      %2425 = vrot.lane.b32.xlu0 %v2359, 64
      %v2426 = vpop.permute.xlu0 %2425
      %2427 = vrot.lane.b32.xlu0 %v2362, 64
      %v2428 = vpop.permute.xlu0 %2427
      %2429 = vrot.lane.b32.xlu0 %v2365, 64
      %v2430 = vpop.permute.xlu0 %2429
      %2431 = vrot.lane.b32.xlu0 %v2368, 64
      %v2432 = vpop.permute.xlu0 %2431
      %2441 = vrot.lane.b32.xlu0 %v2287, 96
      %v2442 = vpop.permute.xlu0 %2441
      %2443 = vrot.lane.b32.xlu0 %v2289, 96
      %v2444 = vpop.permute.xlu0 %2443
      %2445 = vrot.lane.b32.xlu0 %v2291, 96
      %v2446 = vpop.permute.xlu0 %2445
      %2447 = vrot.lane.b32.xlu0 %v2293, 96
      %v2448 = vpop.permute.xlu0 %2447
      %2449 = vrot.lane.b32.xlu0 %v2295, 96
      %v2450 = vpop.permute.xlu0 %2449
      %2451 = vrot.lane.b32.xlu0 %v2297, 96
      %v2452 = vpop.permute.xlu0 %2451
      %2453 = vrot.lane.b32.xlu0 %v2299, 96
      %v2454 = vpop.permute.xlu0 %2453
      %2455 = vrot.lane.b32.xlu0 %v2301, 96
      %v2456 = vpop.permute.xlu0 %2455
      %2465 = vrot.lane.b32.xlu0 %v2350, 32
      %v2466 = vpop.permute.xlu0 %2465
      %2467 = vrot.lane.b32.xlu0 %v2353, 32
      %v2468 = vpop.permute.xlu0 %2467
      %2469 = vrot.lane.b32.xlu0 %v2356, 32
      %v2470 = vpop.permute.xlu0 %2469
      %2471 = vrot.lane.b32.xlu0 %v2359, 32
      %v2472 = vpop.permute.xlu0 %2471
      %2473 = vrot.lane.b32.xlu0 %v2362, 32
      %v2474 = vpop.permute.xlu0 %2473
      %2475 = vrot.lane.b32.xlu0 %v2365, 32
      %v2476 = vpop.permute.xlu0 %2475
      %2477 = vrot.lane.b32.xlu0 %v2368, 32
      %v2478 = vpop.permute.xlu0 %2477
      %2479 = vrot.lane.b32.xlu0 %v2384, 32
      %v2480 = vpop.permute.xlu0 %2479
      %2489 = vrot.lane.b32.xlu0 %v2289, 64
      %v2490 = vpop.permute.xlu0 %2489
      %2491 = vrot.lane.b32.xlu0 %v2291, 64
      %v2492 = vpop.permute.xlu0 %2491
      %2493 = vrot.lane.b32.xlu0 %v2293, 64
      %v2494 = vpop.permute.xlu0 %2493
      %2495 = vrot.lane.b32.xlu0 %v2295, 64
      %v2496 = vpop.permute.xlu0 %2495
      %2497 = vrot.lane.b32.xlu0 %v2297, 64
      %v2498 = vpop.permute.xlu0 %2497
      %2499 = vrot.lane.b32.xlu0 %v2299, 64
      %v2500 = vpop.permute.xlu0 %2499
      %2501 = vrot.lane.b32.xlu0 %v2301, 64
      %v2502 = vpop.permute.xlu0 %2501
      %2503 = vrot.lane.b32.xlu0 %v2303, 64
      %v2504 = vpop.permute.xlu0 %2503
      %2513 = vrot.lane.b32.xlu0 %v2329, 96
      %v2514 = vpop.permute.xlu0 %2513
      %2515 = vrot.lane.b32.xlu0 %v2332, 96
      %v2516 = vpop.permute.xlu0 %2515
      %2517 = vrot.lane.b32.xlu0 %v2335, 96
      %v2518 = vpop.permute.xlu0 %2517
      %2519 = vrot.lane.b32.xlu0 %v2338, 96
      %v2520 = vpop.permute.xlu0 %2519
      %2521 = vrot.lane.b32.xlu0 %v2341, 96
      %v2522 = vpop.permute.xlu0 %2521
      %2523 = vrot.lane.b32.xlu0 %v2344, 96
      %v2524 = vpop.permute.xlu0 %2523
      %2525 = vrot.lane.b32.xlu0 %v2373, 96
      %v2526 = vpop.permute.xlu0 %2525
      %2527 = vrot.lane.b32.xlu0 %v2389, 96
      %v2528 = vpop.permute.xlu0 %2527
      %v2537 = vsel %vm225, %v2285, %v2394
      %v2538 = vsel %vm225, %v2287, %v2396
      %v2539 = vsel %vm225, %v2289, %v2398
      %v2540 = vsel %vm225, %v2291, %v2400
      %v2541 = vsel %vm225, %v2293, %v2402
      %v2542 = vsel %vm225, %v2295, %v2404
      %v2543 = vsel %vm225, %v2297, %v2406
      %v2544 = vsel %vm225, %v2299, %v2408
      %v2545 = vsel %vm563, %v2537, %v2418
      %v2546 = vsel %vm563, %v2538, %v2420
      %v2547 = vsel %vm563, %v2539, %v2422
      %v2548 = vsel %vm563, %v2540, %v2424
      %v2549 = vsel %vm563, %v2541, %v2426
      %v2550 = vsel %vm563, %v2542, %v2428
      %v2551 = vsel %vm563, %v2543, %v2430
      %v2552 = vsel %vm563, %v2544, %v2432
      %v2553 = vsel %vm572, %v2545, %v2442
      %v2554 = vsel %vm572, %v2546, %v2444
      %v2555 = vsel %vm572, %v2547, %v2446
      %v2556 = vsel %vm572, %v2548, %v2448
      %v2557 = vsel %vm572, %v2549, %v2450
      %v2558 = vsel %vm572, %v2550, %v2452
      %v2559 = vsel %vm572, %v2551, %v2454
      %v2560 = vsel %vm572, %v2552, %v2456
      %v2561 = vsel %vm225, %v2326, %v2466
      %v2562 = vsel %vm225, %v2329, %v2468
      %v2563 = vsel %vm225, %v2332, %v2470
      %v2564 = vsel %vm225, %v2335, %v2472
      %v2565 = vsel %vm225, %v2338, %v2474
      %v2566 = vsel %vm225, %v2341, %v2476
      %v2567 = vsel %vm225, %v2344, %v2478
      %v2568 = vsel %vm225, %v2373, %v2480
      %v2569 = vsel %vm563, %v2561, %v2490
      %v2570 = vsel %vm563, %v2562, %v2492
      %v2571 = vsel %vm563, %v2563, %v2494
      %v2572 = vsel %vm563, %v2564, %v2496
      %v2573 = vsel %vm563, %v2565, %v2498
      %v2574 = vsel %vm563, %v2566, %v2500
      %v2575 = vsel %vm563, %v2567, %v2502
      %v2576 = vsel %vm563, %v2568, %v2504
      %v2577 = vsel %vm572, %v2569, %v2514
      %v2578 = vsel %vm572, %v2570, %v2516
      %v2579 = vsel %vm572, %v2571, %v2518
      %v2580 = vsel %vm572, %v2572, %v2520
      %v2581 = vsel %vm572, %v2573, %v2522
      %v2582 = vsel %vm572, %v2574, %v2524
      %v2583 = vsel %vm572, %v2575, %v2526
      %v2584 = vsel %vm572, %v2576, %v2528
      %v2586 = vperm.slane %v2276, 0
      %v2588 = vsel %vm225, %v2353, 0
      %v2590 = vsel %vm225, %v2356, 0
      %v2592 = vsel %vm225, %v2359, 0
      %v2594 = vsel %vm225, %v2362, 0
      %v2596 = vsel %vm225, %v2365, 0
      %v2598 = vsel %vm225, %v2368, 0
      %v2600 = vsel %vm225, %v2384, 0
      %v2602 = vsel %vm225, %v2392, 0
      %2604 = vmatpush.msra.mxu0 %v2254
      %2605 = vmatpush.msra.mxu0 %v2253
      %2606 = vmatpush.msra.mxu0 %v2252
      %2607 = vmatpush.msra.mxu0 %v2251
      %2608 = vmatpush.msra.mxu0 %v2250
      %2609 = vmatpush.msra.mxu0 %v2249
      %2610 = vmatpush.msra.mxu0 %v2248
      %2611 = vmatpush.msra.mxu0 %v2247
      %2612 = vmatpush.msra.mxu0 %v2246
      %2613 = vmatpush.msra.mxu0 %v2245
      %2614 = vmatpush.msra.mxu0 %v2244
      %2615 = vmatpush.msra.mxu0 %v2243
      %2616 = vmatpush.msra.mxu0 %v2242
      %2617 = vmatpush.msra.mxu0 %v2241
      %2618 = vmatpush.msra.mxu0 %v2240
      %2619 = vmatpush.msra.mxu0 %v2239
      %2620 = vmatmul.f32.gmra.mxu0 %v2553
      %v2621 = vpop.f32.mrf.mxu0
      %v2622 = vadd.f32 %v2586, %v2621
      %2623 = vmatmul.f32.gmra.mxu0 %v2554
      %v2624 = vpop.f32.mrf.mxu0
      %v2625 = vadd.f32 %v2586, %v2624
      %2626 = vmatmul.f32.gmra.mxu0 %v2555
      %v2627 = vpop.f32.mrf.mxu0
      %v2628 = vadd.f32 %v2586, %v2627
      %2629 = vmatmul.f32.gmra.mxu0 %v2556
      %v2630 = vpop.f32.mrf.mxu0
      %v2631 = vadd.f32 %v2586, %v2630
      %2632 = vmatmul.f32.gmra.mxu0 %v2557
      %v2633 = vpop.f32.mrf.mxu0
      %v2634 = vadd.f32 %v2586, %v2633
      %2635 = vmatmul.f32.gmra.mxu0 %v2558
      %v2636 = vpop.f32.mrf.mxu0
      %v2637 = vadd.f32 %v2586, %v2636
      %2638 = vmatmul.f32.gmra.mxu0 %v2559
      %v2639 = vpop.f32.mrf.mxu0
      %v2640 = vadd.f32 %v2586, %v2639
      %2641 = vmatmul.f32.gmra.mxu0 %v2560
      %v2642 = vpop.f32.mrf.mxu0
      %v2643 = vadd.f32 %v2586, %v2642
      %2644 = vdwg.mxu0
      %2645 = vmatpush.msra.mxu0 %v2270
      %2646 = vmatpush.msra.mxu0 %v2269
      %2647 = vmatpush.msra.mxu0 %v2268
      %2648 = vmatpush.msra.mxu0 %v2267
      %2649 = vmatpush.msra.mxu0 %v2266
      %2650 = vmatpush.msra.mxu0 %v2265
      %2651 = vmatpush.msra.mxu0 %v2264
      %2652 = vmatpush.msra.mxu0 %v2263
      %2653 = vmatpush.msra.mxu0 %v2262
      %2654 = vmatpush.msra.mxu0 %v2261
      %2655 = vmatpush.msra.mxu0 %v2260
      %2656 = vmatpush.msra.mxu0 %v2259
      %2657 = vmatpush.msra.mxu0 %v2258
      %2658 = vmatpush.msra.mxu0 %v2257
      %2659 = vmatpush.msra.mxu0 %v2256
      %2660 = vmatpush.msra.mxu0 %v2255
      %2661 = vmatmul.f32.gmra.mxu0 %v2577
      %v2662 = vpop.f32.mrf.mxu0
      %v2663 = vadd.f32 %v2622, %v2662
      %2664 = vmatmul.f32.gmra.mxu0 %v2578
      %v2665 = vpop.f32.mrf.mxu0
      %v2666 = vadd.f32 %v2625, %v2665
      %2667 = vmatmul.f32.gmra.mxu0 %v2579
      %v2668 = vpop.f32.mrf.mxu0
      %v2669 = vadd.f32 %v2628, %v2668
      %2670 = vmatmul.f32.gmra.mxu0 %v2580
      %v2671 = vpop.f32.mrf.mxu0
      %v2672 = vadd.f32 %v2631, %v2671
      %2673 = vmatmul.f32.gmra.mxu0 %v2581
      %v2674 = vpop.f32.mrf.mxu0
      %v2675 = vadd.f32 %v2634, %v2674
      %2676 = vmatmul.f32.gmra.mxu0 %v2582
      %v2677 = vpop.f32.mrf.mxu0
      %v2678 = vadd.f32 %v2637, %v2677
      %2679 = vmatmul.f32.gmra.mxu0 %v2583
      %v2680 = vpop.f32.mrf.mxu0
      %v2681 = vadd.f32 %v2640, %v2680
      %2682 = vmatmul.f32.gmra.mxu0 %v2584
      %v2683 = vpop.f32.mrf.mxu0
      %v2684 = vadd.f32 %v2643, %v2683
      %2685 = vdwg.mxu0
      %2686 = vmatpush.msra.mxu0 0.0
      %2687 = vmatpush.msra.mxu0 0.0
      %2688 = vmatpush.msra.mxu0 0.0
      %2689 = vmatpush.msra.mxu0 0.0
      %2690 = vmatpush.msra.mxu0 0.0
      %2691 = vmatpush.msra.mxu0 0.0
      %2692 = vmatpush.msra.mxu0 0.0
      %2693 = vmatpush.msra.mxu0 0.0
      %2694 = vmatpush.msra.mxu0 0.0
      %2695 = vmatpush.msra.mxu0 0.0
      %2696 = vmatpush.msra.mxu0 0.0
      %2697 = vmatpush.msra.mxu0 0.0
      %2698 = vmatpush.msra.mxu0 %v2274
      %2699 = vmatpush.msra.mxu0 %v2273
      %2700 = vmatpush.msra.mxu0 %v2272
      %2701 = vmatpush.msra.mxu0 %v2271
      %2702 = vmatmul.f32.gmra.mxu0 %v2588
      %v2703 = vpop.f32.mrf.mxu0
      %v2704 = vadd.f32 %v2663, %v2703
      %2705 = vmatmul.f32.gmra.mxu0 %v2590
      %v2706 = vpop.f32.mrf.mxu0
      %v2707 = vadd.f32 %v2666, %v2706
      %2708 = vmatmul.f32.gmra.mxu0 %v2592
      %v2709 = vpop.f32.mrf.mxu0
      %v2710 = vadd.f32 %v2669, %v2709
      %2711 = vmatmul.f32.gmra.mxu0 %v2594
      %v2712 = vpop.f32.mrf.mxu0
      %v2713 = vadd.f32 %v2672, %v2712
      %2714 = vmatmul.f32.gmra.mxu0 %v2596
      %v2715 = vpop.f32.mrf.mxu0
      %v2716 = vadd.f32 %v2675, %v2715
      %2717 = vmatmul.f32.gmra.mxu0 %v2598
      %v2718 = vpop.f32.mrf.mxu0
      %v2719 = vadd.f32 %v2678, %v2718
      %2720 = vmatmul.f32.gmra.mxu0 %v2600
      %v2721 = vpop.f32.mrf.mxu0
      %v2722 = vadd.f32 %v2681, %v2721
      %2723 = vmatmul.f32.gmra.mxu0 %v2602
      %v2724 = vpop.f32.mrf.mxu0
      %v2725 = vadd.f32 %v2684, %v2724
      %2726 = vdwg.mxu0
      %v2727 = vadd.f32 %v2704, %v1733
      %v2728 = vadd.f32 %v2707, %v1734
      %v2729 = vadd.f32 %v2710, %v1735
      %v2730 = vadd.f32 %v2713, %v1736
      %v2731 = vadd.f32 %v2716, %v1737
      %v2732 = vadd.f32 %v2719, %v1738
      %v2733 = vadd.f32 %v2722, %v1739
      %v2734 = vadd.f32 %v2725, %v1740
      %s2735 = scalar_lea.vmem %s1, 1440
      %v2736 = vld [vmem:[%s2735] sm:$0xff]
      %v2737 = vld [vmem:[%s2735 + $0x8] sm:$0xff]
      %v2738 = vld [vmem:[%s2735 + $0x10] sm:$0xff]
      %v2739 = vld [vmem:[%s2735 + $0x18] sm:$0xff]
      %v2740 = vld [vmem:[%s2735 + $0x20] sm:$0xff]
      %v2741 = vld [vmem:[%s2735 + $0x28] sm:$0xff]
      %v2742 = vld [vmem:[%s2735 + $0x30] sm:$0xff]
      %v2743 = vld [vmem:[%s2735 + $0x38] sm:$0xff]
      %v2744 = vld [vmem:[%s2735 + $0x40] sm:$0xff]
      %v2745 = vld [vmem:[%s2735 + $0x48] sm:$0xff]
      %v2746 = vld [vmem:[%s2735 + $0x50] sm:$0xff]
      %v2747 = vld [vmem:[%s2735 + $0x58] sm:$0xff]
      %v2748 = vld [vmem:[%s2735 + $0x60] sm:$0xff]
      %v2749 = vld [vmem:[%s2735 + $0x68] sm:$0xff]
      %v2750 = vld [vmem:[%s2735 + $0x70] sm:$0xff]
      %v2751 = vld [vmem:[%s2735 + $0x78] sm:$0xff]
      %v2752 = vld [vmem:[%s2735 + $0x80] sm:$0xff]
      %v2753 = vld [vmem:[%s2735 + $0x88] sm:$0xff]
      %v2754 = vld [vmem:[%s2735 + $0x90] sm:$0xff]
      %v2755 = vld [vmem:[%s2735 + $0x98] sm:$0xff]
      %v2756 = vld [vmem:[%s2735 + $0xa0] sm:$0xff]
      %v2757 = vld [vmem:[%s2735 + $0xa8] sm:$0xff]
      %v2758 = vld [vmem:[%s2735 + $0xb0] sm:$0xff]
      %v2759 = vld [vmem:[%s2735 + $0xb8] sm:$0xff]
      %v2760 = vld [vmem:[%s2735 + $0xc0] sm:$0xff]
      %v2761 = vld [vmem:[%s2735 + $0xc8] sm:$0xff]
      %v2762 = vld [vmem:[%s2735 + $0xd0] sm:$0xff]
      %v2763 = vld [vmem:[%s2735 + $0xd8] sm:$0xff]
      %v2764 = vld [vmem:[%s2735 + $0xe0] sm:$0xff]
      %v2765 = vld [vmem:[%s2735 + $0xe8] sm:$0xff]
      %v2766 = vld [vmem:[%s2735 + $0xf0] sm:$0xff]
      %v2767 = vld [vmem:[%s2735 + $0xf8] sm:$0xff]
      %v2768 = vld [vmem:[%s2735 + $0x100] sm:$0xff]
      %v2769 = vld [vmem:[%s2735 + $0x108] sm:$0xff]
      %v2770 = vld [vmem:[%s2735 + $0x110] sm:$0xff]
      %v2771 = vld [vmem:[%s2735 + $0x118] sm:$0xff]
      %s2772 = scalar_lea.vmem %s2, 5
      %v2773 = vld [vmem:[%s2772] sm:$0x1]
      %2774 = vst.msk [vmem:[%s292 + $0x1] sm:$0xff] %vm225, %v2727
      %2775 = vst.msk [vmem:[%s292 + $0x11] sm:$0xff] %vm225, %v2728
      %2776 = vst.msk [vmem:[%s292 + $0x21] sm:$0xff] %vm225, %v2729
      %2777 = vst.msk [vmem:[%s292 + $0x31] sm:$0xff] %vm225, %v2730
      %2778 = vst.msk [vmem:[%s292 + $0x41] sm:$0xff] %vm225, %v2731
      %2779 = vst.msk [vmem:[%s292 + $0x51] sm:$0xff] %vm225, %v2732
      %2780 = vst.msk [vmem:[%s292 + $0x61] sm:$0xff] %vm225, %v2733
      %2781 = vst.msk [vmem:[%s292 + $0x71] sm:$0xff] %vm225, %v2734
      %v2782 = vld [vmem:[#allocation2] sm:$0xff]
      %v2783 = vld [vmem:[#allocation2 + $0x8] sm:$0x3]
      %v2784 = vld [vmem:[#allocation2 + $0x10] sm:$0xff]
      %v2785 = vld [vmem:[#allocation2 + $0x18] sm:$0x3]
      %v2786 = vld [vmem:[#allocation2 + $0x20] sm:$0xff]
      %v2787 = vld [vmem:[#allocation2 + $0x28] sm:$0x3]
      %v2788 = vld [vmem:[#allocation2 + $0x30] sm:$0xff]
      %v2789 = vld [vmem:[#allocation2 + $0x38] sm:$0x3]
      %v2790 = vld [vmem:[#allocation2 + $0x40] sm:$0xff]
      %v2791 = vld [vmem:[#allocation2 + $0x48] sm:$0x3]
      %v2792 = vld [vmem:[#allocation2 + $0x50] sm:$0xff]
      %v2793 = vld [vmem:[#allocation2 + $0x58] sm:$0x3]
      %v2794 = vld [vmem:[#allocation2 + $0x60] sm:$0xff]
      %v2795 = vld [vmem:[#allocation2 + $0x68] sm:$0x3]
      %v2796 = vld [vmem:[#allocation2 + $0x70] sm:$0xff]
      %v2797 = vld [vmem:[#allocation2 + $0x78] sm:$0x3]
      %v2798 = vld [vmem:[#allocation2 + $0x80] sm:$0xff]
      %v2799 = vld [vmem:[#allocation2 + $0x88] sm:$0x3]
      %v2800 = vld [vmem:[#allocation2 + $0x90] sm:$0xff]
      %v2801 = vld [vmem:[#allocation2 + $0x98] sm:$0x3]
      %v2818 = vrot.slane %v2782, 1
      %v2819 = vrot.slane %v2783, 1
      %v2820 = vsel %vm337, %v2818, %v2819
      %v2821 = vrot.slane %v2784, 1
      %v2822 = vrot.slane %v2785, 1
      %v2823 = vsel %vm337, %v2821, %v2822
      %v2824 = vrot.slane %v2786, 1
      %v2825 = vrot.slane %v2787, 1
      %v2826 = vsel %vm337, %v2824, %v2825
      %v2827 = vrot.slane %v2788, 1
      %v2828 = vrot.slane %v2789, 1
      %v2829 = vsel %vm337, %v2827, %v2828
      %v2830 = vrot.slane %v2790, 1
      %v2831 = vrot.slane %v2791, 1
      %v2832 = vsel %vm337, %v2830, %v2831
      %v2833 = vrot.slane %v2792, 1
      %v2834 = vrot.slane %v2793, 1
      %v2835 = vsel %vm337, %v2833, %v2834
      %v2836 = vrot.slane %v2794, 1
      %v2837 = vrot.slane %v2795, 1
      %v2838 = vsel %vm337, %v2836, %v2837
      %v2839 = vrot.slane %v2796, 1
      %v2840 = vrot.slane %v2797, 1
      %v2841 = vsel %vm337, %v2839, %v2840
      %v2842 = vrot.slane %v2782, 2
      %v2843 = vrot.slane %v2783, 2
      %v2844 = vsel %vm362, %v2842, %v2843
      %v2845 = vrot.slane %v2784, 2
      %v2846 = vrot.slane %v2785, 2
      %v2847 = vsel %vm362, %v2845, %v2846
      %v2848 = vrot.slane %v2786, 2
      %v2849 = vrot.slane %v2787, 2
      %v2850 = vsel %vm362, %v2848, %v2849
      %v2851 = vrot.slane %v2788, 2
      %v2852 = vrot.slane %v2789, 2
      %v2853 = vsel %vm362, %v2851, %v2852
      %v2854 = vrot.slane %v2790, 2
      %v2855 = vrot.slane %v2791, 2
      %v2856 = vsel %vm362, %v2854, %v2855
      %v2857 = vrot.slane %v2792, 2
      %v2858 = vrot.slane %v2793, 2
      %v2859 = vsel %vm362, %v2857, %v2858
      %v2860 = vrot.slane %v2794, 2
      %v2861 = vrot.slane %v2795, 2
      %v2862 = vsel %vm362, %v2860, %v2861
      %v2863 = vrot.slane %v2796, 2
      %v2864 = vrot.slane %v2797, 2
      %v2865 = vsel %vm362, %v2863, %v2864
      %v2868 = vrot.slane %v2798, 1
      %v2869 = vrot.slane %v2799, 1
      %v2870 = vsel %vm337, %v2868, %v2869
      %v2879 = vrot.slane %v2798, 2
      %v2880 = vrot.slane %v2799, 2
      %v2881 = vsel %vm362, %v2879, %v2880
      %v2884 = vrot.slane %v2800, 1
      %v2885 = vrot.slane %v2801, 1
      %v2886 = vsel %vm337, %v2884, %v2885
      %v2887 = vrot.slane %v2800, 2
      %v2888 = vrot.slane %v2801, 2
      %v2889 = vsel %vm362, %v2887, %v2888
      %2890 = vrot.lane.b32.xlu0 %v2820, 32
      %v2891 = vpop.permute.xlu0 %2890
      %2892 = vrot.lane.b32.xlu0 %v2823, 32
      %v2893 = vpop.permute.xlu0 %2892
      %2894 = vrot.lane.b32.xlu0 %v2826, 32
      %v2895 = vpop.permute.xlu0 %2894
      %2896 = vrot.lane.b32.xlu0 %v2829, 32
      %v2897 = vpop.permute.xlu0 %2896
      %2898 = vrot.lane.b32.xlu0 %v2832, 32
      %v2899 = vpop.permute.xlu0 %2898
      %2900 = vrot.lane.b32.xlu0 %v2835, 32
      %v2901 = vpop.permute.xlu0 %2900
      %2902 = vrot.lane.b32.xlu0 %v2838, 32
      %v2903 = vpop.permute.xlu0 %2902
      %2904 = vrot.lane.b32.xlu0 %v2841, 32
      %v2905 = vpop.permute.xlu0 %2904
      %2914 = vrot.lane.b32.xlu0 %v2844, 64
      %v2915 = vpop.permute.xlu0 %2914
      %2916 = vrot.lane.b32.xlu0 %v2847, 64
      %v2917 = vpop.permute.xlu0 %2916
      %2918 = vrot.lane.b32.xlu0 %v2850, 64
      %v2919 = vpop.permute.xlu0 %2918
      %2920 = vrot.lane.b32.xlu0 %v2853, 64
      %v2921 = vpop.permute.xlu0 %2920
      %2922 = vrot.lane.b32.xlu0 %v2856, 64
      %v2923 = vpop.permute.xlu0 %2922
      %2924 = vrot.lane.b32.xlu0 %v2859, 64
      %v2925 = vpop.permute.xlu0 %2924
      %2926 = vrot.lane.b32.xlu0 %v2862, 64
      %v2927 = vpop.permute.xlu0 %2926
      %2928 = vrot.lane.b32.xlu0 %v2865, 64
      %v2929 = vpop.permute.xlu0 %2928
      %2938 = vrot.lane.b32.xlu0 %v2784, 96
      %v2939 = vpop.permute.xlu0 %2938
      %2940 = vrot.lane.b32.xlu0 %v2786, 96
      %v2941 = vpop.permute.xlu0 %2940
      %2942 = vrot.lane.b32.xlu0 %v2788, 96
      %v2943 = vpop.permute.xlu0 %2942
      %2944 = vrot.lane.b32.xlu0 %v2790, 96
      %v2945 = vpop.permute.xlu0 %2944
      %2946 = vrot.lane.b32.xlu0 %v2792, 96
      %v2947 = vpop.permute.xlu0 %2946
      %2948 = vrot.lane.b32.xlu0 %v2794, 96
      %v2949 = vpop.permute.xlu0 %2948
      %2950 = vrot.lane.b32.xlu0 %v2796, 96
      %v2951 = vpop.permute.xlu0 %2950
      %2952 = vrot.lane.b32.xlu0 %v2798, 96
      %v2953 = vpop.permute.xlu0 %2952
      %2962 = vrot.lane.b32.xlu0 %v2847, 32
      %v2963 = vpop.permute.xlu0 %2962
      %2964 = vrot.lane.b32.xlu0 %v2850, 32
      %v2965 = vpop.permute.xlu0 %2964
      %2966 = vrot.lane.b32.xlu0 %v2853, 32
      %v2967 = vpop.permute.xlu0 %2966
      %2968 = vrot.lane.b32.xlu0 %v2856, 32
      %v2969 = vpop.permute.xlu0 %2968
      %2970 = vrot.lane.b32.xlu0 %v2859, 32
      %v2971 = vpop.permute.xlu0 %2970
      %2972 = vrot.lane.b32.xlu0 %v2862, 32
      %v2973 = vpop.permute.xlu0 %2972
      %2974 = vrot.lane.b32.xlu0 %v2865, 32
      %v2975 = vpop.permute.xlu0 %2974
      %2976 = vrot.lane.b32.xlu0 %v2881, 32
      %v2977 = vpop.permute.xlu0 %2976
      %2986 = vrot.lane.b32.xlu0 %v2786, 64
      %v2987 = vpop.permute.xlu0 %2986
      %2988 = vrot.lane.b32.xlu0 %v2788, 64
      %v2989 = vpop.permute.xlu0 %2988
      %2990 = vrot.lane.b32.xlu0 %v2790, 64
      %v2991 = vpop.permute.xlu0 %2990
      %2992 = vrot.lane.b32.xlu0 %v2792, 64
      %v2993 = vpop.permute.xlu0 %2992
      %2994 = vrot.lane.b32.xlu0 %v2794, 64
      %v2995 = vpop.permute.xlu0 %2994
      %2996 = vrot.lane.b32.xlu0 %v2796, 64
      %v2997 = vpop.permute.xlu0 %2996
      %2998 = vrot.lane.b32.xlu0 %v2798, 64
      %v2999 = vpop.permute.xlu0 %2998
      %3000 = vrot.lane.b32.xlu0 %v2800, 64
      %v3001 = vpop.permute.xlu0 %3000
      %3010 = vrot.lane.b32.xlu0 %v2826, 96
      %v3011 = vpop.permute.xlu0 %3010
      %3012 = vrot.lane.b32.xlu0 %v2829, 96
      %v3013 = vpop.permute.xlu0 %3012
      %3014 = vrot.lane.b32.xlu0 %v2832, 96
      %v3015 = vpop.permute.xlu0 %3014
      %3016 = vrot.lane.b32.xlu0 %v2835, 96
      %v3017 = vpop.permute.xlu0 %3016
      %3018 = vrot.lane.b32.xlu0 %v2838, 96
      %v3019 = vpop.permute.xlu0 %3018
      %3020 = vrot.lane.b32.xlu0 %v2841, 96
      %v3021 = vpop.permute.xlu0 %3020
      %3022 = vrot.lane.b32.xlu0 %v2870, 96
      %v3023 = vpop.permute.xlu0 %3022
      %3024 = vrot.lane.b32.xlu0 %v2886, 96
      %v3025 = vpop.permute.xlu0 %3024
      %v3034 = vsel %vm225, %v2782, %v2891
      %v3035 = vsel %vm225, %v2784, %v2893
      %v3036 = vsel %vm225, %v2786, %v2895
      %v3037 = vsel %vm225, %v2788, %v2897
      %v3038 = vsel %vm225, %v2790, %v2899
      %v3039 = vsel %vm225, %v2792, %v2901
      %v3040 = vsel %vm225, %v2794, %v2903
      %v3041 = vsel %vm225, %v2796, %v2905
      %v3042 = vsel %vm563, %v3034, %v2915
      %v3043 = vsel %vm563, %v3035, %v2917
      %v3044 = vsel %vm563, %v3036, %v2919
      %v3045 = vsel %vm563, %v3037, %v2921
      %v3046 = vsel %vm563, %v3038, %v2923
      %v3047 = vsel %vm563, %v3039, %v2925
      %v3048 = vsel %vm563, %v3040, %v2927
      %v3049 = vsel %vm563, %v3041, %v2929
      %v3050 = vsel %vm572, %v3042, %v2939
      %v3051 = vsel %vm572, %v3043, %v2941
      %v3052 = vsel %vm572, %v3044, %v2943
      %v3053 = vsel %vm572, %v3045, %v2945
      %v3054 = vsel %vm572, %v3046, %v2947
      %v3055 = vsel %vm572, %v3047, %v2949
      %v3056 = vsel %vm572, %v3048, %v2951
      %v3057 = vsel %vm572, %v3049, %v2953
      %v3058 = vsel %vm225, %v2823, %v2963
      %v3059 = vsel %vm225, %v2826, %v2965
      %v3060 = vsel %vm225, %v2829, %v2967
      %v3061 = vsel %vm225, %v2832, %v2969
      %v3062 = vsel %vm225, %v2835, %v2971
      %v3063 = vsel %vm225, %v2838, %v2973
      %v3064 = vsel %vm225, %v2841, %v2975
      %v3065 = vsel %vm225, %v2870, %v2977
      %v3066 = vsel %vm563, %v3058, %v2987
      %v3067 = vsel %vm563, %v3059, %v2989
      %v3068 = vsel %vm563, %v3060, %v2991
      %v3069 = vsel %vm563, %v3061, %v2993
      %v3070 = vsel %vm563, %v3062, %v2995
      %v3071 = vsel %vm563, %v3063, %v2997
      %v3072 = vsel %vm563, %v3064, %v2999
      %v3073 = vsel %vm563, %v3065, %v3001
      %v3074 = vsel %vm572, %v3066, %v3011
      %v3075 = vsel %vm572, %v3067, %v3013
      %v3076 = vsel %vm572, %v3068, %v3015
      %v3077 = vsel %vm572, %v3069, %v3017
      %v3078 = vsel %vm572, %v3070, %v3019
      %v3079 = vsel %vm572, %v3071, %v3021
      %v3080 = vsel %vm572, %v3072, %v3023
      %v3081 = vsel %vm572, %v3073, %v3025
      %v3083 = vperm.slane %v2773, 0
      %v3085 = vsel %vm225, %v2850, 0
      %v3087 = vsel %vm225, %v2853, 0
      %v3089 = vsel %vm225, %v2856, 0
      %v3091 = vsel %vm225, %v2859, 0
      %v3093 = vsel %vm225, %v2862, 0
      %v3095 = vsel %vm225, %v2865, 0
      %v3097 = vsel %vm225, %v2881, 0
      %v3099 = vsel %vm225, %v2889, 0
      %3101 = vmatpush.msra.mxu0 %v2751
      %3102 = vmatpush.msra.mxu0 %v2750
      %3103 = vmatpush.msra.mxu0 %v2749
      %3104 = vmatpush.msra.mxu0 %v2748
      %3105 = vmatpush.msra.mxu0 %v2747
      %3106 = vmatpush.msra.mxu0 %v2746
      %3107 = vmatpush.msra.mxu0 %v2745
      %3108 = vmatpush.msra.mxu0 %v2744
      %3109 = vmatpush.msra.mxu0 %v2743
      %3110 = vmatpush.msra.mxu0 %v2742
      %3111 = vmatpush.msra.mxu0 %v2741
      %3112 = vmatpush.msra.mxu0 %v2740
      %3113 = vmatpush.msra.mxu0 %v2739
      %3114 = vmatpush.msra.mxu0 %v2738
      %3115 = vmatpush.msra.mxu0 %v2737
      %3116 = vmatpush.msra.mxu0 %v2736
      %3117 = vmatmul.f32.gmra.mxu0 %v3050
      %v3118 = vpop.f32.mrf.mxu0
      %v3119 = vadd.f32 %v3083, %v3118
      %3120 = vmatmul.f32.gmra.mxu0 %v3051
      %v3121 = vpop.f32.mrf.mxu0
      %v3122 = vadd.f32 %v3083, %v3121
      %3123 = vmatmul.f32.gmra.mxu0 %v3052
      %v3124 = vpop.f32.mrf.mxu0
      %v3125 = vadd.f32 %v3083, %v3124
      %3126 = vmatmul.f32.gmra.mxu0 %v3053
      %v3127 = vpop.f32.mrf.mxu0
      %v3128 = vadd.f32 %v3083, %v3127
      %3129 = vmatmul.f32.gmra.mxu0 %v3054
      %v3130 = vpop.f32.mrf.mxu0
      %v3131 = vadd.f32 %v3083, %v3130
      %3132 = vmatmul.f32.gmra.mxu0 %v3055
      %v3133 = vpop.f32.mrf.mxu0
      %v3134 = vadd.f32 %v3083, %v3133
      %3135 = vmatmul.f32.gmra.mxu0 %v3056
      %v3136 = vpop.f32.mrf.mxu0
      %v3137 = vadd.f32 %v3083, %v3136
      %3138 = vmatmul.f32.gmra.mxu0 %v3057
      %v3139 = vpop.f32.mrf.mxu0
      %v3140 = vadd.f32 %v3083, %v3139
      %3141 = vdwg.mxu0
      %3142 = vmatpush.msra.mxu0 %v2767
      %3143 = vmatpush.msra.mxu0 %v2766
      %3144 = vmatpush.msra.mxu0 %v2765
      %3145 = vmatpush.msra.mxu0 %v2764
      %3146 = vmatpush.msra.mxu0 %v2763
      %3147 = vmatpush.msra.mxu0 %v2762
      %3148 = vmatpush.msra.mxu0 %v2761
      %3149 = vmatpush.msra.mxu0 %v2760
      %3150 = vmatpush.msra.mxu0 %v2759
      %3151 = vmatpush.msra.mxu0 %v2758
      %3152 = vmatpush.msra.mxu0 %v2757
      %3153 = vmatpush.msra.mxu0 %v2756
      %3154 = vmatpush.msra.mxu0 %v2755
      %3155 = vmatpush.msra.mxu0 %v2754
      %3156 = vmatpush.msra.mxu0 %v2753
      %3157 = vmatpush.msra.mxu0 %v2752
      %3158 = vmatmul.f32.gmra.mxu0 %v3074
      %v3159 = vpop.f32.mrf.mxu0
      %v3160 = vadd.f32 %v3119, %v3159
      %3161 = vmatmul.f32.gmra.mxu0 %v3075
      %v3162 = vpop.f32.mrf.mxu0
      %v3163 = vadd.f32 %v3122, %v3162
      %3164 = vmatmul.f32.gmra.mxu0 %v3076
      %v3165 = vpop.f32.mrf.mxu0
      %v3166 = vadd.f32 %v3125, %v3165
      %3167 = vmatmul.f32.gmra.mxu0 %v3077
      %v3168 = vpop.f32.mrf.mxu0
      %v3169 = vadd.f32 %v3128, %v3168
      %3170 = vmatmul.f32.gmra.mxu0 %v3078
      %v3171 = vpop.f32.mrf.mxu0
      %v3172 = vadd.f32 %v3131, %v3171
      %3173 = vmatmul.f32.gmra.mxu0 %v3079
      %v3174 = vpop.f32.mrf.mxu0
      %v3175 = vadd.f32 %v3134, %v3174
      %3176 = vmatmul.f32.gmra.mxu0 %v3080
      %v3177 = vpop.f32.mrf.mxu0
      %v3178 = vadd.f32 %v3137, %v3177
      %3179 = vmatmul.f32.gmra.mxu0 %v3081
      %v3180 = vpop.f32.mrf.mxu0
      %v3181 = vadd.f32 %v3140, %v3180
      %3182 = vdwg.mxu0
      %3183 = vmatpush.msra.mxu0 0.0
      %3184 = vmatpush.msra.mxu0 0.0
      %3185 = vmatpush.msra.mxu0 0.0
      %3186 = vmatpush.msra.mxu0 0.0
      %3187 = vmatpush.msra.mxu0 0.0
      %3188 = vmatpush.msra.mxu0 0.0
      %3189 = vmatpush.msra.mxu0 0.0
      %3190 = vmatpush.msra.mxu0 0.0
      %3191 = vmatpush.msra.mxu0 0.0
      %3192 = vmatpush.msra.mxu0 0.0
      %3193 = vmatpush.msra.mxu0 0.0
      %3194 = vmatpush.msra.mxu0 0.0
      %3195 = vmatpush.msra.mxu0 %v2771
      %3196 = vmatpush.msra.mxu0 %v2770
      %3197 = vmatpush.msra.mxu0 %v2769
      %3198 = vmatpush.msra.mxu0 %v2768
      %3199 = vmatmul.f32.gmra.mxu0 %v3085
      %v3200 = vpop.f32.mrf.mxu0
      %v3201 = vadd.f32 %v3160, %v3200
      %3202 = vmatmul.f32.gmra.mxu0 %v3087
      %v3203 = vpop.f32.mrf.mxu0
      %v3204 = vadd.f32 %v3163, %v3203
      %3205 = vmatmul.f32.gmra.mxu0 %v3089
      %v3206 = vpop.f32.mrf.mxu0
      %v3207 = vadd.f32 %v3166, %v3206
      %3208 = vmatmul.f32.gmra.mxu0 %v3091
      %v3209 = vpop.f32.mrf.mxu0
      %v3210 = vadd.f32 %v3169, %v3209
      %3211 = vmatmul.f32.gmra.mxu0 %v3093
      %v3212 = vpop.f32.mrf.mxu0
      %v3213 = vadd.f32 %v3172, %v3212
      %3214 = vmatmul.f32.gmra.mxu0 %v3095
      %v3215 = vpop.f32.mrf.mxu0
      %v3216 = vadd.f32 %v3175, %v3215
      %3217 = vmatmul.f32.gmra.mxu0 %v3097
      %v3218 = vpop.f32.mrf.mxu0
      %v3219 = vadd.f32 %v3178, %v3218
      %3220 = vmatmul.f32.gmra.mxu0 %v3099
      %v3221 = vpop.f32.mrf.mxu0
      %v3222 = vadd.f32 %v3181, %v3221
      %3223 = vdwg.mxu0
      %v3224 = vadd.f32 %v3201, %v724
      %v3225 = vadd.f32 %v3204, %v727
      %v3226 = vadd.f32 %v3207, %v730
      %v3227 = vadd.f32 %v3210, %v733
      %v3228 = vadd.f32 %v3213, %v736
      %v3229 = vadd.f32 %v3216, %v739
      %v3230 = vadd.f32 %v3219, %v742
      %v3231 = vadd.f32 %v3222, %v745
      %3232 = vst.msk [vmem:[%s292 + $0x1] sm:$0xff] %vm225, %v3224
      %3233 = vst.msk [vmem:[%s292 + $0x11] sm:$0xff] %vm225, %v3225
      %3234 = vst.msk [vmem:[%s292 + $0x21] sm:$0xff] %vm225, %v3226
      %3235 = vst.msk [vmem:[%s292 + $0x31] sm:$0xff] %vm225, %v3227
      %3236 = vst.msk [vmem:[%s292 + $0x41] sm:$0xff] %vm225, %v3228
      %3237 = vst.msk [vmem:[%s292 + $0x51] sm:$0xff] %vm225, %v3229
      %3238 = vst.msk [vmem:[%s292 + $0x61] sm:$0xff] %vm225, %v3230
      %3239 = vst.msk [vmem:[%s292 + $0x71] sm:$0xff] %vm225, %v3231
      %v3240 = vld [vmem:[#allocation2] sm:$0xff]
      %v3241 = vld [vmem:[#allocation2 + $0x8] sm:$0x3]
      %v3242 = vld [vmem:[#allocation2 + $0x10] sm:$0xff]
      %v3243 = vld [vmem:[#allocation2 + $0x18] sm:$0x3]
      %v3244 = vld [vmem:[#allocation2 + $0x20] sm:$0xff]
      %v3245 = vld [vmem:[#allocation2 + $0x28] sm:$0x3]
      %v3246 = vld [vmem:[#allocation2 + $0x30] sm:$0xff]
      %v3247 = vld [vmem:[#allocation2 + $0x38] sm:$0x3]
      %v3248 = vld [vmem:[#allocation2 + $0x40] sm:$0xff]
      %v3249 = vld [vmem:[#allocation2 + $0x48] sm:$0x3]
      %v3250 = vld [vmem:[#allocation2 + $0x50] sm:$0xff]
      %v3251 = vld [vmem:[#allocation2 + $0x58] sm:$0x3]
      %v3252 = vld [vmem:[#allocation2 + $0x60] sm:$0xff]
      %v3253 = vld [vmem:[#allocation2 + $0x68] sm:$0x3]
      %v3254 = vld [vmem:[#allocation2 + $0x70] sm:$0xff]
      %v3255 = vld [vmem:[#allocation2 + $0x78] sm:$0x3]
      %v3256 = vld [vmem:[#allocation2 + $0x80] sm:$0xff]
      %v3257 = vld [vmem:[#allocation2 + $0x88] sm:$0x3]
      %v3258 = vld [vmem:[#allocation2 + $0x90] sm:$0xff]
      %v3259 = vld [vmem:[#allocation2 + $0x98] sm:$0x3]
      %v3276 = vrot.slane %v3240, 1
      %v3277 = vrot.slane %v3241, 1
      %v3278 = vsel %vm337, %v3276, %v3277
      %v3279 = vrot.slane %v3242, 1
      %v3280 = vrot.slane %v3243, 1
      %v3281 = vsel %vm337, %v3279, %v3280
      %v3282 = vrot.slane %v3244, 1
      %v3283 = vrot.slane %v3245, 1
      %v3284 = vsel %vm337, %v3282, %v3283
      %v3285 = vrot.slane %v3246, 1
      %v3286 = vrot.slane %v3247, 1
      %v3287 = vsel %vm337, %v3285, %v3286
      %v3288 = vrot.slane %v3248, 1
      %v3289 = vrot.slane %v3249, 1
      %v3290 = vsel %vm337, %v3288, %v3289
      %v3291 = vrot.slane %v3250, 1
      %v3292 = vrot.slane %v3251, 1
      %v3293 = vsel %vm337, %v3291, %v3292
      %v3294 = vrot.slane %v3252, 1
      %v3295 = vrot.slane %v3253, 1
      %v3296 = vsel %vm337, %v3294, %v3295
      %v3297 = vrot.slane %v3254, 1
      %v3298 = vrot.slane %v3255, 1
      %v3299 = vsel %vm337, %v3297, %v3298
      %v3300 = vrot.slane %v3240, 2
      %v3301 = vrot.slane %v3241, 2
      %v3302 = vsel %vm362, %v3300, %v3301
      %v3303 = vrot.slane %v3242, 2
      %v3304 = vrot.slane %v3243, 2
      %v3305 = vsel %vm362, %v3303, %v3304
      %v3306 = vrot.slane %v3244, 2
      %v3307 = vrot.slane %v3245, 2
      %v3308 = vsel %vm362, %v3306, %v3307
      %v3309 = vrot.slane %v3246, 2
      %v3310 = vrot.slane %v3247, 2
      %v3311 = vsel %vm362, %v3309, %v3310
      %v3312 = vrot.slane %v3248, 2
      %v3313 = vrot.slane %v3249, 2
      %v3314 = vsel %vm362, %v3312, %v3313
      %v3315 = vrot.slane %v3250, 2
      %v3316 = vrot.slane %v3251, 2
      %v3317 = vsel %vm362, %v3315, %v3316
      %v3318 = vrot.slane %v3252, 2
      %v3319 = vrot.slane %v3253, 2
      %v3320 = vsel %vm362, %v3318, %v3319
      %v3321 = vrot.slane %v3254, 2
      %v3322 = vrot.slane %v3255, 2
      %v3323 = vsel %vm362, %v3321, %v3322
      %v3326 = vrot.slane %v3256, 1
      %v3327 = vrot.slane %v3257, 1
      %v3328 = vsel %vm337, %v3326, %v3327
      %v3337 = vrot.slane %v3256, 2
      %v3338 = vrot.slane %v3257, 2
      %v3339 = vsel %vm362, %v3337, %v3338
      %v3342 = vrot.slane %v3258, 1
      %v3343 = vrot.slane %v3259, 1
      %v3344 = vsel %vm337, %v3342, %v3343
      %v3345 = vrot.slane %v3258, 2
      %v3346 = vrot.slane %v3259, 2
      %v3347 = vsel %vm362, %v3345, %v3346
      %3348 = vrot.lane.b32.xlu0 %v3278, 32
      %v3349 = vpop.permute.xlu0 %3348
      %3350 = vrot.lane.b32.xlu0 %v3281, 32
      %v3351 = vpop.permute.xlu0 %3350
      %3352 = vrot.lane.b32.xlu0 %v3284, 32
      %v3353 = vpop.permute.xlu0 %3352
      %3354 = vrot.lane.b32.xlu0 %v3287, 32
      %v3355 = vpop.permute.xlu0 %3354
      %3356 = vrot.lane.b32.xlu0 %v3290, 32
      %v3357 = vpop.permute.xlu0 %3356
      %3358 = vrot.lane.b32.xlu0 %v3293, 32
      %v3359 = vpop.permute.xlu0 %3358
      %3360 = vrot.lane.b32.xlu0 %v3296, 32
      %v3361 = vpop.permute.xlu0 %3360
      %3362 = vrot.lane.b32.xlu0 %v3299, 32
      %v3363 = vpop.permute.xlu0 %3362
      %3372 = vrot.lane.b32.xlu0 %v3302, 64
      %v3373 = vpop.permute.xlu0 %3372
      %3374 = vrot.lane.b32.xlu0 %v3305, 64
      %v3375 = vpop.permute.xlu0 %3374
      %3376 = vrot.lane.b32.xlu0 %v3308, 64
      %v3377 = vpop.permute.xlu0 %3376
      %3378 = vrot.lane.b32.xlu0 %v3311, 64
      %v3379 = vpop.permute.xlu0 %3378
      %3380 = vrot.lane.b32.xlu0 %v3314, 64
      %v3381 = vpop.permute.xlu0 %3380
      %3382 = vrot.lane.b32.xlu0 %v3317, 64
      %v3383 = vpop.permute.xlu0 %3382
      %3384 = vrot.lane.b32.xlu0 %v3320, 64
      %v3385 = vpop.permute.xlu0 %3384
      %3386 = vrot.lane.b32.xlu0 %v3323, 64
      %v3387 = vpop.permute.xlu0 %3386
      %3396 = vrot.lane.b32.xlu0 %v3242, 96
      %v3397 = vpop.permute.xlu0 %3396
      %3398 = vrot.lane.b32.xlu0 %v3244, 96
      %v3399 = vpop.permute.xlu0 %3398
      %3400 = vrot.lane.b32.xlu0 %v3246, 96
      %v3401 = vpop.permute.xlu0 %3400
      %3402 = vrot.lane.b32.xlu0 %v3248, 96
      %v3403 = vpop.permute.xlu0 %3402
      %3404 = vrot.lane.b32.xlu0 %v3250, 96
      %v3405 = vpop.permute.xlu0 %3404
      %3406 = vrot.lane.b32.xlu0 %v3252, 96
      %v3407 = vpop.permute.xlu0 %3406
      %3408 = vrot.lane.b32.xlu0 %v3254, 96
      %v3409 = vpop.permute.xlu0 %3408
      %3410 = vrot.lane.b32.xlu0 %v3256, 96
      %v3411 = vpop.permute.xlu0 %3410
      %3420 = vrot.lane.b32.xlu0 %v3305, 32
      %v3421 = vpop.permute.xlu0 %3420
      %3422 = vrot.lane.b32.xlu0 %v3308, 32
      %v3423 = vpop.permute.xlu0 %3422
      %3424 = vrot.lane.b32.xlu0 %v3311, 32
      %v3425 = vpop.permute.xlu0 %3424
      %3426 = vrot.lane.b32.xlu0 %v3314, 32
      %v3427 = vpop.permute.xlu0 %3426
      %3428 = vrot.lane.b32.xlu0 %v3317, 32
      %v3429 = vpop.permute.xlu0 %3428
      %3430 = vrot.lane.b32.xlu0 %v3320, 32
      %v3431 = vpop.permute.xlu0 %3430
      %3432 = vrot.lane.b32.xlu0 %v3323, 32
      %v3433 = vpop.permute.xlu0 %3432
      %3434 = vrot.lane.b32.xlu0 %v3339, 32
      %v3435 = vpop.permute.xlu0 %3434
      %3444 = vrot.lane.b32.xlu0 %v3244, 64
      %v3445 = vpop.permute.xlu0 %3444
      %3446 = vrot.lane.b32.xlu0 %v3246, 64
      %v3447 = vpop.permute.xlu0 %3446
      %3448 = vrot.lane.b32.xlu0 %v3248, 64
      %v3449 = vpop.permute.xlu0 %3448
      %3450 = vrot.lane.b32.xlu0 %v3250, 64
      %v3451 = vpop.permute.xlu0 %3450
      %3452 = vrot.lane.b32.xlu0 %v3252, 64
      %v3453 = vpop.permute.xlu0 %3452
      %3454 = vrot.lane.b32.xlu0 %v3254, 64
      %v3455 = vpop.permute.xlu0 %3454
      %3456 = vrot.lane.b32.xlu0 %v3256, 64
      %v3457 = vpop.permute.xlu0 %3456
      %3458 = vrot.lane.b32.xlu0 %v3258, 64
      %v3459 = vpop.permute.xlu0 %3458
      %3468 = vrot.lane.b32.xlu0 %v3284, 96
      %v3469 = vpop.permute.xlu0 %3468
      %3470 = vrot.lane.b32.xlu0 %v3287, 96
      %v3471 = vpop.permute.xlu0 %3470
      %3472 = vrot.lane.b32.xlu0 %v3290, 96
      %v3473 = vpop.permute.xlu0 %3472
      %3474 = vrot.lane.b32.xlu0 %v3293, 96
      %v3475 = vpop.permute.xlu0 %3474
      %3476 = vrot.lane.b32.xlu0 %v3296, 96
      %v3477 = vpop.permute.xlu0 %3476
      %3478 = vrot.lane.b32.xlu0 %v3299, 96
      %v3479 = vpop.permute.xlu0 %3478
      %3480 = vrot.lane.b32.xlu0 %v3328, 96
      %v3481 = vpop.permute.xlu0 %3480
      %3482 = vrot.lane.b32.xlu0 %v3344, 96
      %v3483 = vpop.permute.xlu0 %3482
      %v3492 = vsel %vm225, %v3240, %v3349
      %v3493 = vsel %vm225, %v3242, %v3351
      %v3494 = vsel %vm225, %v3244, %v3353
      %v3495 = vsel %vm225, %v3246, %v3355
      %v3496 = vsel %vm225, %v3248, %v3357
      %v3497 = vsel %vm225, %v3250, %v3359
      %v3498 = vsel %vm225, %v3252, %v3361
      %v3499 = vsel %vm225, %v3254, %v3363
      %v3500 = vsel %vm563, %v3492, %v3373
      %v3501 = vsel %vm563, %v3493, %v3375
      %v3502 = vsel %vm563, %v3494, %v3377
      %v3503 = vsel %vm563, %v3495, %v3379
      %v3504 = vsel %vm563, %v3496, %v3381
      %v3505 = vsel %vm563, %v3497, %v3383
      %v3506 = vsel %vm563, %v3498, %v3385
      %v3507 = vsel %vm563, %v3499, %v3387
      %v3508 = vsel %vm572, %v3500, %v3397
      %v3509 = vsel %vm572, %v3501, %v3399
      %v3510 = vsel %vm572, %v3502, %v3401
      %v3511 = vsel %vm572, %v3503, %v3403
      %v3512 = vsel %vm572, %v3504, %v3405
      %v3513 = vsel %vm572, %v3505, %v3407
      %v3514 = vsel %vm572, %v3506, %v3409
      %v3515 = vsel %vm572, %v3507, %v3411
      %v3516 = vsel %vm225, %v3281, %v3421
      %v3517 = vsel %vm225, %v3284, %v3423
      %v3518 = vsel %vm225, %v3287, %v3425
      %v3519 = vsel %vm225, %v3290, %v3427
      %v3520 = vsel %vm225, %v3293, %v3429
      %v3521 = vsel %vm225, %v3296, %v3431
      %v3522 = vsel %vm225, %v3299, %v3433
      %v3523 = vsel %vm225, %v3328, %v3435
      %v3524 = vsel %vm563, %v3516, %v3445
      %v3525 = vsel %vm563, %v3517, %v3447
      %v3526 = vsel %vm563, %v3518, %v3449
      %v3527 = vsel %vm563, %v3519, %v3451
      %v3528 = vsel %vm563, %v3520, %v3453
      %v3529 = vsel %vm563, %v3521, %v3455
      %v3530 = vsel %vm563, %v3522, %v3457
      %v3531 = vsel %vm563, %v3523, %v3459
      %v3532 = vsel %vm572, %v3524, %v3469
      %v3533 = vsel %vm572, %v3525, %v3471
      %v3534 = vsel %vm572, %v3526, %v3473
      %v3535 = vsel %vm572, %v3527, %v3475
      %v3536 = vsel %vm572, %v3528, %v3477
      %v3537 = vsel %vm572, %v3529, %v3479
      %v3538 = vsel %vm572, %v3530, %v3481
      %v3539 = vsel %vm572, %v3531, %v3483
      %v3540 = vld [vmem:[%s3] sm:$0xff]
      %v3541 = vld [vmem:[%s3 + $0x8] sm:$0xff]
      %v3542 = vld [vmem:[%s3 + $0x10] sm:$0xff]
      %v3543 = vld [vmem:[%s3 + $0x18] sm:$0xff]
      %v3544 = vld [vmem:[%s3 + $0x20] sm:$0xff]
      %v3545 = vld [vmem:[%s3 + $0x28] sm:$0xff]
      %v3546 = vld [vmem:[%s3 + $0x30] sm:$0xff]
      %v3547 = vld [vmem:[%s3 + $0x38] sm:$0xff]
      %v3548 = vld [vmem:[%s3 + $0x40] sm:$0xff]
      %v3549 = vld [vmem:[%s3 + $0x48] sm:$0xff]
      %v3550 = vld [vmem:[%s3 + $0x50] sm:$0xff]
      %v3551 = vld [vmem:[%s3 + $0x58] sm:$0xff]
      %v3552 = vld [vmem:[%s3 + $0x60] sm:$0xff]
      %v3553 = vld [vmem:[%s3 + $0x68] sm:$0xff]
      %v3554 = vld [vmem:[%s3 + $0x70] sm:$0xff]
      %v3555 = vld [vmem:[%s3 + $0x78] sm:$0xff]
      %v3556 = vld [vmem:[%s3 + $0x80] sm:$0xff]
      %v3557 = vld [vmem:[%s3 + $0x88] sm:$0xff]
      %v3558 = vld [vmem:[%s3 + $0x90] sm:$0xff]
      %v3559 = vld [vmem:[%s3 + $0x98] sm:$0xff]
      %v3560 = vld [vmem:[%s3 + $0xa0] sm:$0xff]
      %v3561 = vld [vmem:[%s3 + $0xa8] sm:$0xff]
      %v3562 = vld [vmem:[%s3 + $0xb0] sm:$0xff]
      %v3563 = vld [vmem:[%s3 + $0xb8] sm:$0xff]
      %v3564 = vld [vmem:[%s3 + $0xc0] sm:$0xff]
      %v3565 = vld [vmem:[%s3 + $0xc8] sm:$0xff]
      %v3566 = vld [vmem:[%s3 + $0xd0] sm:$0xff]
      %v3567 = vld [vmem:[%s3 + $0xd8] sm:$0xff]
      %v3568 = vld [vmem:[%s3 + $0xe0] sm:$0xff]
      %v3569 = vld [vmem:[%s3 + $0xe8] sm:$0xff]
      %v3570 = vld [vmem:[%s3 + $0xf0] sm:$0xff]
      %v3571 = vld [vmem:[%s3 + $0xf8] sm:$0xff]
      %v3572 = vld [vmem:[%s3 + $0x100] sm:$0xff]
      %v3573 = vld [vmem:[%s3 + $0x108] sm:$0xff]
      %v3574 = vld [vmem:[%s3 + $0x110] sm:$0xff]
      %v3575 = vld [vmem:[%s3 + $0x118] sm:$0xff]
      %v3576 = vld [vmem:[%s3 + $0x120] sm:$0xff]
      %v3577 = vld [vmem:[%s3 + $0x128] sm:$0xff]
      %v3578 = vld [vmem:[%s3 + $0x130] sm:$0xff]
      %v3579 = vld [vmem:[%s3 + $0x138] sm:$0xff]
      %v3580 = vld [vmem:[%s3 + $0x140] sm:$0xff]
      %v3581 = vld [vmem:[%s3 + $0x148] sm:$0xff]
      %v3582 = vld [vmem:[%s3 + $0x150] sm:$0xff]
      %v3583 = vld [vmem:[%s3 + $0x158] sm:$0xff]
      %v3584 = vld [vmem:[%s3 + $0x160] sm:$0xff]
      %v3585 = vld [vmem:[%s3 + $0x168] sm:$0xff]
      %v3586 = vld [vmem:[%s3 + $0x170] sm:$0xff]
      %v3587 = vld [vmem:[%s3 + $0x178] sm:$0xff]
      %v3588 = vld [vmem:[%s3 + $0x180] sm:$0xff]
      %v3589 = vld [vmem:[%s3 + $0x188] sm:$0xff]
      %v3590 = vld [vmem:[%s3 + $0x190] sm:$0xff]
      %v3591 = vld [vmem:[%s3 + $0x198] sm:$0xff]
      %v3592 = vld [vmem:[%s3 + $0x1a0] sm:$0xff]
      %v3593 = vld [vmem:[%s3 + $0x1a8] sm:$0xff]
      %v3594 = vld [vmem:[%s3 + $0x1b0] sm:$0xff]
      %v3595 = vld [vmem:[%s3 + $0x1b8] sm:$0xff]
      %v3596 = vld [vmem:[%s3 + $0x1c0] sm:$0xff]
      %v3597 = vld [vmem:[%s3 + $0x1c8] sm:$0xff]
      %v3598 = vld [vmem:[%s3 + $0x1d0] sm:$0xff]
      %v3599 = vld [vmem:[%s3 + $0x1d8] sm:$0xff]
      %v3600 = vld [vmem:[%s3 + $0x1e0] sm:$0xff]
      %v3601 = vld [vmem:[%s3 + $0x1e8] sm:$0xff]
      %v3602 = vld [vmem:[%s3 + $0x1f0] sm:$0xff]
      %v3603 = vld [vmem:[%s3 + $0x1f8] sm:$0xff]
      %v3604 = vld [vmem:[%s3 + $0x200] sm:$0xff]
      %v3605 = vld [vmem:[%s3 + $0x208] sm:$0xff]
      %v3606 = vld [vmem:[%s3 + $0x210] sm:$0xff]
      %v3607 = vld [vmem:[%s3 + $0x218] sm:$0xff]
      %v3608 = vld [vmem:[%s3 + $0x220] sm:$0xff]
      %v3609 = vld [vmem:[%s3 + $0x228] sm:$0xff]
      %v3610 = vld [vmem:[%s3 + $0x230] sm:$0xff]
      %v3611 = vld [vmem:[%s3 + $0x238] sm:$0xff]
      %v3612 = vld [vmem:[%s3 + $0x240] sm:$0xff]
      %v3613 = vld [vmem:[%s3 + $0x248] sm:$0xff]
      %v3614 = vld [vmem:[%s3 + $0x250] sm:$0xff]
      %v3615 = vld [vmem:[%s3 + $0x258] sm:$0xff]
      %v3616 = vld [vmem:[%s3 + $0x260] sm:$0xff]
      %v3617 = vld [vmem:[%s3 + $0x268] sm:$0xff]
      %v3618 = vld [vmem:[%s3 + $0x270] sm:$0xff]
      %v3619 = vld [vmem:[%s3 + $0x278] sm:$0xff]
      %v3620 = vld [vmem:[%s3 + $0x280] sm:$0xff]
      %v3621 = vld [vmem:[%s3 + $0x288] sm:$0xff]
      %v3622 = vld [vmem:[%s3 + $0x290] sm:$0xff]
      %v3623 = vld [vmem:[%s3 + $0x298] sm:$0xff]
      %v3624 = vld [vmem:[%s3 + $0x2a0] sm:$0xff]
      %v3625 = vld [vmem:[%s3 + $0x2a8] sm:$0xff]
      %v3626 = vld [vmem:[%s3 + $0x2b0] sm:$0xff]
      %v3627 = vld [vmem:[%s3 + $0x2b8] sm:$0xff]
      %v3628 = vld [vmem:[%s3 + $0x2c0] sm:$0xff]
      %v3629 = vld [vmem:[%s3 + $0x2c8] sm:$0xff]
      %v3630 = vld [vmem:[%s3 + $0x2d0] sm:$0xff]
      %v3631 = vld [vmem:[%s3 + $0x2d8] sm:$0xff]
      %v3632 = vld [vmem:[%s3 + $0x2e0] sm:$0xff]
      %v3633 = vld [vmem:[%s3 + $0x2e8] sm:$0xff]
      %v3634 = vld [vmem:[%s3 + $0x2f0] sm:$0xff]
      %v3635 = vld [vmem:[%s3 + $0x2f8] sm:$0xff]
      %v3636 = vld [vmem:[%s3 + $0x300] sm:$0xff]
      %v3637 = vld [vmem:[%s3 + $0x308] sm:$0xff]
      %v3638 = vld [vmem:[%s3 + $0x310] sm:$0xff]
      %v3639 = vld [vmem:[%s3 + $0x318] sm:$0xff]
      %v3640 = vld [vmem:[%s3 + $0x320] sm:$0xff]
      %v3641 = vld [vmem:[%s3 + $0x328] sm:$0xff]
      %v3642 = vld [vmem:[%s3 + $0x330] sm:$0xff]
      %v3643 = vld [vmem:[%s3 + $0x338] sm:$0xff]
      %v3644 = vld [vmem:[%s3 + $0x340] sm:$0xff]
      %v3645 = vld [vmem:[%s3 + $0x348] sm:$0xff]
      %v3646 = vld [vmem:[%s3 + $0x350] sm:$0xff]
      %v3647 = vld [vmem:[%s3 + $0x358] sm:$0xff]
      %v3648 = vld [vmem:[%s3 + $0x360] sm:$0xff]
      %v3649 = vld [vmem:[%s3 + $0x368] sm:$0xff]
      %v3650 = vld [vmem:[%s3 + $0x370] sm:$0xff]
      %v3651 = vld [vmem:[%s3 + $0x378] sm:$0xff]
      %v3652 = vld [vmem:[%s3 + $0x380] sm:$0xff]
      %v3653 = vld [vmem:[%s3 + $0x388] sm:$0xff]
      %v3654 = vld [vmem:[%s3 + $0x390] sm:$0xff]
      %v3655 = vld [vmem:[%s3 + $0x398] sm:$0xff]
      %v3656 = vld [vmem:[%s3 + $0x3a0] sm:$0xff]
      %v3657 = vld [vmem:[%s3 + $0x3a8] sm:$0xff]
      %v3658 = vld [vmem:[%s3 + $0x3b0] sm:$0xff]
      %v3659 = vld [vmem:[%s3 + $0x3b8] sm:$0xff]
      %v3660 = vld [vmem:[%s3 + $0x3c0] sm:$0xff]
      %v3661 = vld [vmem:[%s3 + $0x3c8] sm:$0xff]
      %v3662 = vld [vmem:[%s3 + $0x3d0] sm:$0xff]
      %v3663 = vld [vmem:[%s3 + $0x3d8] sm:$0xff]
      %v3664 = vld [vmem:[%s3 + $0x3e0] sm:$0xff]
      %v3665 = vld [vmem:[%s3 + $0x3e8] sm:$0xff]
      %v3666 = vld [vmem:[%s3 + $0x3f0] sm:$0xff]
      %v3667 = vld [vmem:[%s3 + $0x3f8] sm:$0xff]
      %v3668 = vld [vmem:[%s3 + $0x400] sm:$0xff]
      %v3669 = vld [vmem:[%s3 + $0x408] sm:$0xff]
      %v3670 = vld [vmem:[%s3 + $0x410] sm:$0xff]
      %v3671 = vld [vmem:[%s3 + $0x418] sm:$0xff]
      %v3672 = vld [vmem:[%s3 + $0x420] sm:$0xff]
      %v3673 = vld [vmem:[%s3 + $0x428] sm:$0xff]
      %v3674 = vld [vmem:[%s3 + $0x430] sm:$0xff]
      %v3675 = vld [vmem:[%s3 + $0x438] sm:$0xff]
      %v3676 = vld [vmem:[%s3 + $0x440] sm:$0xff]
      %v3677 = vld [vmem:[%s3 + $0x448] sm:$0xff]
      %v3678 = vld [vmem:[%s3 + $0x450] sm:$0xff]
      %v3679 = vld [vmem:[%s3 + $0x458] sm:$0xff]
      %v3680 = vld [vmem:[%s3 + $0x460] sm:$0xff]
      %v3681 = vld [vmem:[%s3 + $0x468] sm:$0xff]
      %v3682 = vld [vmem:[%s3 + $0x470] sm:$0xff]
      %v3683 = vld [vmem:[%s3 + $0x478] sm:$0xff]
      %v3684 = vld [vmem:[%s4] sm:$0xf]
      %v3686 = vperm.slane %v3684, 0
      %v3687 = vperm.slane %v3684, 1
      %v3688 = vperm.slane %v3684, 2
      %v3689 = vperm.slane %v3684, 3
      %v3694 = vsel %vm225, %v3308, 0
      %v3696 = vsel %vm225, %v3311, 0
      %v3698 = vsel %vm225, %v3314, 0
      %v3700 = vsel %vm225, %v3317, 0
      %v3702 = vsel %vm225, %v3320, 0
      %v3704 = vsel %vm225, %v3323, 0
      %v3706 = vsel %vm225, %v3339, 0
      %v3708 = vsel %vm225, %v3347, 0
      %3710 = vmatpush.msra.mxu0 %v3600
      %3711 = vmatpush.msra.mxu0 %v3596
      %3712 = vmatpush.msra.mxu0 %v3592
      %3713 = vmatpush.msra.mxu0 %v3588
      %3714 = vmatpush.msra.mxu0 %v3584
      %3715 = vmatpush.msra.mxu0 %v3580
      %3716 = vmatpush.msra.mxu0 %v3576
      %3717 = vmatpush.msra.mxu0 %v3572
      %3718 = vmatpush.msra.mxu0 %v3568
      %3719 = vmatpush.msra.mxu0 %v3564
      %3720 = vmatpush.msra.mxu0 %v3560
      %3721 = vmatpush.msra.mxu0 %v3556
      %3722 = vmatpush.msra.mxu0 %v3552
      %3723 = vmatpush.msra.mxu0 %v3548
      %3724 = vmatpush.msra.mxu0 %v3544
      %3725 = vmatpush.msra.mxu0 %v3540
      %3726 = vmatmul.f32.gmra.mxu0 %v3508
      %v3727 = vpop.f32.mrf.mxu0
      %v3728 = vadd.f32 %v3686, %v3727
      %3729 = vmatmul.f32.gmra.mxu0 %v3509
      %v3730 = vpop.f32.mrf.mxu0
      %v3731 = vadd.f32 %v3686, %v3730
      %3732 = vmatmul.f32.gmra.mxu0 %v3510
      %v3733 = vpop.f32.mrf.mxu0
      %v3734 = vadd.f32 %v3686, %v3733
      %3735 = vmatmul.f32.gmra.mxu0 %v3511
      %v3736 = vpop.f32.mrf.mxu0
      %v3737 = vadd.f32 %v3686, %v3736
      %3738 = vmatmul.f32.gmra.mxu0 %v3512
      %v3739 = vpop.f32.mrf.mxu0
      %v3740 = vadd.f32 %v3686, %v3739
      %3741 = vmatmul.f32.gmra.mxu0 %v3513
      %v3742 = vpop.f32.mrf.mxu0
      %v3743 = vadd.f32 %v3686, %v3742
      %3744 = vmatmul.f32.gmra.mxu0 %v3514
      %v3745 = vpop.f32.mrf.mxu0
      %v3746 = vadd.f32 %v3686, %v3745
      %3747 = vmatmul.f32.gmra.mxu0 %v3515
      %v3748 = vpop.f32.mrf.mxu0
      %v3749 = vadd.f32 %v3686, %v3748
      %3750 = vdwg.mxu0
      %3751 = vmatpush.msra.mxu0 %v3664
      %3752 = vmatpush.msra.mxu0 %v3660
      %3753 = vmatpush.msra.mxu0 %v3656
      %3754 = vmatpush.msra.mxu0 %v3652
      %3755 = vmatpush.msra.mxu0 %v3648
      %3756 = vmatpush.msra.mxu0 %v3644
      %3757 = vmatpush.msra.mxu0 %v3640
      %3758 = vmatpush.msra.mxu0 %v3636
      %3759 = vmatpush.msra.mxu0 %v3632
      %3760 = vmatpush.msra.mxu0 %v3628
      %3761 = vmatpush.msra.mxu0 %v3624
      %3762 = vmatpush.msra.mxu0 %v3620
      %3763 = vmatpush.msra.mxu0 %v3616
      %3764 = vmatpush.msra.mxu0 %v3612
      %3765 = vmatpush.msra.mxu0 %v3608
      %3766 = vmatpush.msra.mxu0 %v3604
      %3767 = vmatmul.f32.gmra.mxu0 %v3532
      %v3768 = vpop.f32.mrf.mxu0
      %v3769 = vadd.f32 %v3728, %v3768
      %3770 = vmatmul.f32.gmra.mxu0 %v3533
      %v3771 = vpop.f32.mrf.mxu0
      %v3772 = vadd.f32 %v3731, %v3771
      %3773 = vmatmul.f32.gmra.mxu0 %v3534
      %v3774 = vpop.f32.mrf.mxu0
      %v3775 = vadd.f32 %v3734, %v3774
      %3776 = vmatmul.f32.gmra.mxu0 %v3535
      %v3777 = vpop.f32.mrf.mxu0
      %v3778 = vadd.f32 %v3737, %v3777
      %3779 = vmatmul.f32.gmra.mxu0 %v3536
      %v3780 = vpop.f32.mrf.mxu0
      %v3781 = vadd.f32 %v3740, %v3780
      %3782 = vmatmul.f32.gmra.mxu0 %v3537
      %v3783 = vpop.f32.mrf.mxu0
      %v3784 = vadd.f32 %v3743, %v3783
      %3785 = vmatmul.f32.gmra.mxu0 %v3538
      %v3786 = vpop.f32.mrf.mxu0
      %v3787 = vadd.f32 %v3746, %v3786
      %3788 = vmatmul.f32.gmra.mxu0 %v3539
      %v3789 = vpop.f32.mrf.mxu0
      %v3790 = vadd.f32 %v3749, %v3789
      %3791 = vdwg.mxu0
      %3792 = vmatpush.msra.mxu0 0.0
      %3793 = vmatpush.msra.mxu0 0.0
      %3794 = vmatpush.msra.mxu0 0.0
      %3795 = vmatpush.msra.mxu0 0.0
      %3796 = vmatpush.msra.mxu0 0.0
      %3797 = vmatpush.msra.mxu0 0.0
      %3798 = vmatpush.msra.mxu0 0.0
      %3799 = vmatpush.msra.mxu0 0.0
      %3800 = vmatpush.msra.mxu0 0.0
      %3801 = vmatpush.msra.mxu0 0.0
      %3802 = vmatpush.msra.mxu0 0.0
      %3803 = vmatpush.msra.mxu0 0.0
      %3804 = vmatpush.msra.mxu0 %v3680
      %3805 = vmatpush.msra.mxu0 %v3676
      %3806 = vmatpush.msra.mxu0 %v3672
      %3807 = vmatpush.msra.mxu0 %v3668
      %3808 = vmatmul.f32.gmra.mxu0 %v3694
      %v3809 = vpop.f32.mrf.mxu0
      %v3810 = vadd.f32 %v3769, %v3809
      %3811 = vmatmul.f32.gmra.mxu0 %v3696
      %v3812 = vpop.f32.mrf.mxu0
      %v3813 = vadd.f32 %v3772, %v3812
      %3814 = vmatmul.f32.gmra.mxu0 %v3698
      %v3815 = vpop.f32.mrf.mxu0
      %v3816 = vadd.f32 %v3775, %v3815
      %3817 = vmatmul.f32.gmra.mxu0 %v3700
      %v3818 = vpop.f32.mrf.mxu0
      %v3819 = vadd.f32 %v3778, %v3818
      %3820 = vmatmul.f32.gmra.mxu0 %v3702
      %v3821 = vpop.f32.mrf.mxu0
      %v3822 = vadd.f32 %v3781, %v3821
      %3823 = vmatmul.f32.gmra.mxu0 %v3704
      %v3824 = vpop.f32.mrf.mxu0
      %v3825 = vadd.f32 %v3784, %v3824
      %3826 = vmatmul.f32.gmra.mxu0 %v3706
      %v3827 = vpop.f32.mrf.mxu0
      %v3828 = vadd.f32 %v3787, %v3827
      %3829 = vmatmul.f32.gmra.mxu0 %v3708
      %v3830 = vpop.f32.mrf.mxu0
      %v3831 = vadd.f32 %v3790, %v3830
      %3832 = vdwg.mxu0
      %3833 = vmatpush.msra.mxu0 %v3601
      %3834 = vmatpush.msra.mxu0 %v3597
      %3835 = vmatpush.msra.mxu0 %v3593
      %3836 = vmatpush.msra.mxu0 %v3589
      %3837 = vmatpush.msra.mxu0 %v3585
      %3838 = vmatpush.msra.mxu0 %v3581
      %3839 = vmatpush.msra.mxu0 %v3577
      %3840 = vmatpush.msra.mxu0 %v3573
      %3841 = vmatpush.msra.mxu0 %v3569
      %3842 = vmatpush.msra.mxu0 %v3565
      %3843 = vmatpush.msra.mxu0 %v3561
      %3844 = vmatpush.msra.mxu0 %v3557
      %3845 = vmatpush.msra.mxu0 %v3553
      %3846 = vmatpush.msra.mxu0 %v3549
      %3847 = vmatpush.msra.mxu0 %v3545
      %3848 = vmatpush.msra.mxu0 %v3541
      %3849 = vmatmul.f32.gmra.mxu0 %v3508
      %v3850 = vpop.f32.mrf.mxu0
      %v3851 = vadd.f32 %v3687, %v3850
      %3852 = vmatmul.f32.gmra.mxu0 %v3509
      %v3853 = vpop.f32.mrf.mxu0
      %v3854 = vadd.f32 %v3687, %v3853
      %3855 = vmatmul.f32.gmra.mxu0 %v3510
      %v3856 = vpop.f32.mrf.mxu0
      %v3857 = vadd.f32 %v3687, %v3856
      %3858 = vmatmul.f32.gmra.mxu0 %v3511
      %v3859 = vpop.f32.mrf.mxu0
      %v3860 = vadd.f32 %v3687, %v3859
      %3861 = vmatmul.f32.gmra.mxu0 %v3512
      %v3862 = vpop.f32.mrf.mxu0
      %v3863 = vadd.f32 %v3687, %v3862
      %3864 = vmatmul.f32.gmra.mxu0 %v3513
      %v3865 = vpop.f32.mrf.mxu0
      %v3866 = vadd.f32 %v3687, %v3865
      %3867 = vmatmul.f32.gmra.mxu0 %v3514
      %v3868 = vpop.f32.mrf.mxu0
      %v3869 = vadd.f32 %v3687, %v3868
      %3870 = vmatmul.f32.gmra.mxu0 %v3515
      %v3871 = vpop.f32.mrf.mxu0
      %v3872 = vadd.f32 %v3687, %v3871
      %3873 = vdwg.mxu0
      %3874 = vmatpush.msra.mxu0 %v3665
      %3875 = vmatpush.msra.mxu0 %v3661
      %3876 = vmatpush.msra.mxu0 %v3657
      %3877 = vmatpush.msra.mxu0 %v3653
      %3878 = vmatpush.msra.mxu0 %v3649
      %3879 = vmatpush.msra.mxu0 %v3645
      %3880 = vmatpush.msra.mxu0 %v3641
      %3881 = vmatpush.msra.mxu0 %v3637
      %3882 = vmatpush.msra.mxu0 %v3633
      %3883 = vmatpush.msra.mxu0 %v3629
      %3884 = vmatpush.msra.mxu0 %v3625
      %3885 = vmatpush.msra.mxu0 %v3621
      %3886 = vmatpush.msra.mxu0 %v3617
      %3887 = vmatpush.msra.mxu0 %v3613
      %3888 = vmatpush.msra.mxu0 %v3609
      %3889 = vmatpush.msra.mxu0 %v3605
      %3890 = vmatmul.f32.gmra.mxu0 %v3532
      %v3891 = vpop.f32.mrf.mxu0
      %v3892 = vadd.f32 %v3851, %v3891
      %3893 = vmatmul.f32.gmra.mxu0 %v3533
      %v3894 = vpop.f32.mrf.mxu0
      %v3895 = vadd.f32 %v3854, %v3894
      %3896 = vmatmul.f32.gmra.mxu0 %v3534
      %v3897 = vpop.f32.mrf.mxu0
      %v3898 = vadd.f32 %v3857, %v3897
      %3899 = vmatmul.f32.gmra.mxu0 %v3535
      %v3900 = vpop.f32.mrf.mxu0
      %v3901 = vadd.f32 %v3860, %v3900
      %3902 = vmatmul.f32.gmra.mxu0 %v3536
      %v3903 = vpop.f32.mrf.mxu0
      %v3904 = vadd.f32 %v3863, %v3903
      %3905 = vmatmul.f32.gmra.mxu0 %v3537
      %v3906 = vpop.f32.mrf.mxu0
      %v3907 = vadd.f32 %v3866, %v3906
      %3908 = vmatmul.f32.gmra.mxu0 %v3538
      %v3909 = vpop.f32.mrf.mxu0
      %v3910 = vadd.f32 %v3869, %v3909
      %3911 = vmatmul.f32.gmra.mxu0 %v3539
      %v3912 = vpop.f32.mrf.mxu0
      %v3913 = vadd.f32 %v3872, %v3912
      %3914 = vdwg.mxu0
      %3915 = vmatpush.msra.mxu0 0.0
      %3916 = vmatpush.msra.mxu0 0.0
      %3917 = vmatpush.msra.mxu0 0.0
      %3918 = vmatpush.msra.mxu0 0.0
      %3919 = vmatpush.msra.mxu0 0.0
      %3920 = vmatpush.msra.mxu0 0.0
      %3921 = vmatpush.msra.mxu0 0.0
      %3922 = vmatpush.msra.mxu0 0.0
      %3923 = vmatpush.msra.mxu0 0.0
      %3924 = vmatpush.msra.mxu0 0.0
      %3925 = vmatpush.msra.mxu0 0.0
      %3926 = vmatpush.msra.mxu0 0.0
      %3927 = vmatpush.msra.mxu0 %v3681
      %3928 = vmatpush.msra.mxu0 %v3677
      %3929 = vmatpush.msra.mxu0 %v3673
      %3930 = vmatpush.msra.mxu0 %v3669
      %3931 = vmatmul.f32.gmra.mxu0 %v3694
      %v3932 = vpop.f32.mrf.mxu0
      %v3933 = vadd.f32 %v3892, %v3932
      %3934 = vmatmul.f32.gmra.mxu0 %v3696
      %v3935 = vpop.f32.mrf.mxu0
      %v3936 = vadd.f32 %v3895, %v3935
      %3937 = vmatmul.f32.gmra.mxu0 %v3698
      %v3938 = vpop.f32.mrf.mxu0
      %v3939 = vadd.f32 %v3898, %v3938
      %3940 = vmatmul.f32.gmra.mxu0 %v3700
      %v3941 = vpop.f32.mrf.mxu0
      %v3942 = vadd.f32 %v3901, %v3941
      %3943 = vmatmul.f32.gmra.mxu0 %v3702
      %v3944 = vpop.f32.mrf.mxu0
      %v3945 = vadd.f32 %v3904, %v3944
      %3946 = vmatmul.f32.gmra.mxu0 %v3704
      %v3947 = vpop.f32.mrf.mxu0
      %v3948 = vadd.f32 %v3907, %v3947
      %3949 = vmatmul.f32.gmra.mxu0 %v3706
      %v3950 = vpop.f32.mrf.mxu0
      %v3951 = vadd.f32 %v3910, %v3950
      %3952 = vmatmul.f32.gmra.mxu0 %v3708
      %v3953 = vpop.f32.mrf.mxu0
      %v3954 = vadd.f32 %v3913, %v3953
      %3955 = vdwg.mxu0
      %3956 = vmatpush.msra.mxu0 %v3602
      %3957 = vmatpush.msra.mxu0 %v3598
      %3958 = vmatpush.msra.mxu0 %v3594
      %3959 = vmatpush.msra.mxu0 %v3590
      %3960 = vmatpush.msra.mxu0 %v3586
      %3961 = vmatpush.msra.mxu0 %v3582
      %3962 = vmatpush.msra.mxu0 %v3578
      %3963 = vmatpush.msra.mxu0 %v3574
      %3964 = vmatpush.msra.mxu0 %v3570
      %3965 = vmatpush.msra.mxu0 %v3566
      %3966 = vmatpush.msra.mxu0 %v3562
      %3967 = vmatpush.msra.mxu0 %v3558
      %3968 = vmatpush.msra.mxu0 %v3554
      %3969 = vmatpush.msra.mxu0 %v3550
      %3970 = vmatpush.msra.mxu0 %v3546
      %3971 = vmatpush.msra.mxu0 %v3542
      %3972 = vmatmul.f32.gmra.mxu0 %v3508
      %v3973 = vpop.f32.mrf.mxu0
      %v3974 = vadd.f32 %v3688, %v3973
      %3975 = vmatmul.f32.gmra.mxu0 %v3509
      %v3976 = vpop.f32.mrf.mxu0
      %v3977 = vadd.f32 %v3688, %v3976
      %3978 = vmatmul.f32.gmra.mxu0 %v3510
      %v3979 = vpop.f32.mrf.mxu0
      %v3980 = vadd.f32 %v3688, %v3979
      %3981 = vmatmul.f32.gmra.mxu0 %v3511
      %v3982 = vpop.f32.mrf.mxu0
      %v3983 = vadd.f32 %v3688, %v3982
      %3984 = vmatmul.f32.gmra.mxu0 %v3512
      %v3985 = vpop.f32.mrf.mxu0
      %v3986 = vadd.f32 %v3688, %v3985
      %3987 = vmatmul.f32.gmra.mxu0 %v3513
      %v3988 = vpop.f32.mrf.mxu0
      %v3989 = vadd.f32 %v3688, %v3988
      %3990 = vmatmul.f32.gmra.mxu0 %v3514
      %v3991 = vpop.f32.mrf.mxu0
      %v3992 = vadd.f32 %v3688, %v3991
      %3993 = vmatmul.f32.gmra.mxu0 %v3515
      %v3994 = vpop.f32.mrf.mxu0
      %v3995 = vadd.f32 %v3688, %v3994
      %3996 = vdwg.mxu0
      %3997 = vmatpush.msra.mxu0 %v3666
      %3998 = vmatpush.msra.mxu0 %v3662
      %3999 = vmatpush.msra.mxu0 %v3658
      %4000 = vmatpush.msra.mxu0 %v3654
      %4001 = vmatpush.msra.mxu0 %v3650
      %4002 = vmatpush.msra.mxu0 %v3646
      %4003 = vmatpush.msra.mxu0 %v3642
      %4004 = vmatpush.msra.mxu0 %v3638
      %4005 = vmatpush.msra.mxu0 %v3634
      %4006 = vmatpush.msra.mxu0 %v3630
      %4007 = vmatpush.msra.mxu0 %v3626
      %4008 = vmatpush.msra.mxu0 %v3622
      %4009 = vmatpush.msra.mxu0 %v3618
      %4010 = vmatpush.msra.mxu0 %v3614
      %4011 = vmatpush.msra.mxu0 %v3610
      %4012 = vmatpush.msra.mxu0 %v3606
      %4013 = vmatmul.f32.gmra.mxu0 %v3532
      %v4014 = vpop.f32.mrf.mxu0
      %v4015 = vadd.f32 %v3974, %v4014
      %4016 = vmatmul.f32.gmra.mxu0 %v3533
      %v4017 = vpop.f32.mrf.mxu0
      %v4018 = vadd.f32 %v3977, %v4017
      %4019 = vmatmul.f32.gmra.mxu0 %v3534
      %v4020 = vpop.f32.mrf.mxu0
      %v4021 = vadd.f32 %v3980, %v4020
      %4022 = vmatmul.f32.gmra.mxu0 %v3535
      %v4023 = vpop.f32.mrf.mxu0
      %v4024 = vadd.f32 %v3983, %v4023
      %4025 = vmatmul.f32.gmra.mxu0 %v3536
      %v4026 = vpop.f32.mrf.mxu0
      %v4027 = vadd.f32 %v3986, %v4026
      %4028 = vmatmul.f32.gmra.mxu0 %v3537
      %v4029 = vpop.f32.mrf.mxu0
      %v4030 = vadd.f32 %v3989, %v4029
      %4031 = vmatmul.f32.gmra.mxu0 %v3538
      %v4032 = vpop.f32.mrf.mxu0
      %v4033 = vadd.f32 %v3992, %v4032
      %4034 = vmatmul.f32.gmra.mxu0 %v3539
      %v4035 = vpop.f32.mrf.mxu0
      %v4036 = vadd.f32 %v3995, %v4035
      %4037 = vdwg.mxu0
      %4038 = vmatpush.msra.mxu0 0.0
      %4039 = vmatpush.msra.mxu0 0.0
      %4040 = vmatpush.msra.mxu0 0.0
      %4041 = vmatpush.msra.mxu0 0.0
      %4042 = vmatpush.msra.mxu0 0.0
      %4043 = vmatpush.msra.mxu0 0.0
      %4044 = vmatpush.msra.mxu0 0.0
      %4045 = vmatpush.msra.mxu0 0.0
      %4046 = vmatpush.msra.mxu0 0.0
      %4047 = vmatpush.msra.mxu0 0.0
      %4048 = vmatpush.msra.mxu0 0.0
      %4049 = vmatpush.msra.mxu0 0.0
      %4050 = vmatpush.msra.mxu0 %v3682
      %4051 = vmatpush.msra.mxu0 %v3678
      %4052 = vmatpush.msra.mxu0 %v3674
      %4053 = vmatpush.msra.mxu0 %v3670
      %4054 = vmatmul.f32.gmra.mxu0 %v3694
      %v4055 = vpop.f32.mrf.mxu0
      %v4056 = vadd.f32 %v4015, %v4055
      %4057 = vmatmul.f32.gmra.mxu0 %v3696
      %v4058 = vpop.f32.mrf.mxu0
      %v4059 = vadd.f32 %v4018, %v4058
      %4060 = vmatmul.f32.gmra.mxu0 %v3698
      %v4061 = vpop.f32.mrf.mxu0
      %v4062 = vadd.f32 %v4021, %v4061
      %4063 = vmatmul.f32.gmra.mxu0 %v3700
      %v4064 = vpop.f32.mrf.mxu0
      %v4065 = vadd.f32 %v4024, %v4064
      %4066 = vmatmul.f32.gmra.mxu0 %v3702
      %v4067 = vpop.f32.mrf.mxu0
      %v4068 = vadd.f32 %v4027, %v4067
      %4069 = vmatmul.f32.gmra.mxu0 %v3704
      %v4070 = vpop.f32.mrf.mxu0
      %v4071 = vadd.f32 %v4030, %v4070
      %4072 = vmatmul.f32.gmra.mxu0 %v3706
      %v4073 = vpop.f32.mrf.mxu0
      %v4074 = vadd.f32 %v4033, %v4073
      %4075 = vmatmul.f32.gmra.mxu0 %v3708
      %v4076 = vpop.f32.mrf.mxu0
      %v4077 = vadd.f32 %v4036, %v4076
      %4078 = vdwg.mxu0
      %4079 = vmatpush.msra.mxu0 %v3603
      %4080 = vmatpush.msra.mxu0 %v3599
      %4081 = vmatpush.msra.mxu0 %v3595
      %4082 = vmatpush.msra.mxu0 %v3591
      %4083 = vmatpush.msra.mxu0 %v3587
      %4084 = vmatpush.msra.mxu0 %v3583
      %4085 = vmatpush.msra.mxu0 %v3579
      %4086 = vmatpush.msra.mxu0 %v3575
      %4087 = vmatpush.msra.mxu0 %v3571
      %4088 = vmatpush.msra.mxu0 %v3567
      %4089 = vmatpush.msra.mxu0 %v3563
      %4090 = vmatpush.msra.mxu0 %v3559
      %4091 = vmatpush.msra.mxu0 %v3555
      %4092 = vmatpush.msra.mxu0 %v3551
      %4093 = vmatpush.msra.mxu0 %v3547
      %4094 = vmatpush.msra.mxu0 %v3543
      %4095 = vmatmul.f32.gmra.mxu0 %v3508
      %v4096 = vpop.f32.mrf.mxu0
      %v4097 = vadd.f32 %v3689, %v4096
      %4098 = vmatmul.f32.gmra.mxu0 %v3509
      %v4099 = vpop.f32.mrf.mxu0
      %v4100 = vadd.f32 %v3689, %v4099
      %4101 = vmatmul.f32.gmra.mxu0 %v3510
      %v4102 = vpop.f32.mrf.mxu0
      %v4103 = vadd.f32 %v3689, %v4102
      %4104 = vmatmul.f32.gmra.mxu0 %v3511
      %v4105 = vpop.f32.mrf.mxu0
      %v4106 = vadd.f32 %v3689, %v4105
      %4107 = vmatmul.f32.gmra.mxu0 %v3512
      %v4108 = vpop.f32.mrf.mxu0
      %v4109 = vadd.f32 %v3689, %v4108
      %4110 = vmatmul.f32.gmra.mxu0 %v3513
      %v4111 = vpop.f32.mrf.mxu0
      %v4112 = vadd.f32 %v3689, %v4111
      %4113 = vmatmul.f32.gmra.mxu0 %v3514
      %v4114 = vpop.f32.mrf.mxu0
      %v4115 = vadd.f32 %v3689, %v4114
      %4116 = vmatmul.f32.gmra.mxu0 %v3515
      %v4117 = vpop.f32.mrf.mxu0
      %v4118 = vadd.f32 %v3689, %v4117
      %4119 = vdwg.mxu0
      %4120 = vmatpush.msra.mxu0 %v3667
      %4121 = vmatpush.msra.mxu0 %v3663
      %4122 = vmatpush.msra.mxu0 %v3659
      %4123 = vmatpush.msra.mxu0 %v3655
      %4124 = vmatpush.msra.mxu0 %v3651
      %4125 = vmatpush.msra.mxu0 %v3647
      %4126 = vmatpush.msra.mxu0 %v3643
      %4127 = vmatpush.msra.mxu0 %v3639
      %4128 = vmatpush.msra.mxu0 %v3635
      %4129 = vmatpush.msra.mxu0 %v3631
      %4130 = vmatpush.msra.mxu0 %v3627
      %4131 = vmatpush.msra.mxu0 %v3623
      %4132 = vmatpush.msra.mxu0 %v3619
      %4133 = vmatpush.msra.mxu0 %v3615
      %4134 = vmatpush.msra.mxu0 %v3611
      %4135 = vmatpush.msra.mxu0 %v3607
      %4136 = vmatmul.f32.gmra.mxu0 %v3532
      %v4137 = vpop.f32.mrf.mxu0
      %v4138 = vadd.f32 %v4097, %v4137
      %4139 = vmatmul.f32.gmra.mxu0 %v3533
      %v4140 = vpop.f32.mrf.mxu0
      %v4141 = vadd.f32 %v4100, %v4140
      %4142 = vmatmul.f32.gmra.mxu0 %v3534
      %v4143 = vpop.f32.mrf.mxu0
      %v4144 = vadd.f32 %v4103, %v4143
      %4145 = vmatmul.f32.gmra.mxu0 %v3535
      %v4146 = vpop.f32.mrf.mxu0
      %v4147 = vadd.f32 %v4106, %v4146
      %4148 = vmatmul.f32.gmra.mxu0 %v3536
      %v4149 = vpop.f32.mrf.mxu0
      %v4150 = vadd.f32 %v4109, %v4149
      %4151 = vmatmul.f32.gmra.mxu0 %v3537
      %v4152 = vpop.f32.mrf.mxu0
      %v4153 = vadd.f32 %v4112, %v4152
      %4154 = vmatmul.f32.gmra.mxu0 %v3538
      %v4155 = vpop.f32.mrf.mxu0
      %v4156 = vadd.f32 %v4115, %v4155
      %4157 = vmatmul.f32.gmra.mxu0 %v3539
      %v4158 = vpop.f32.mrf.mxu0
      %v4159 = vadd.f32 %v4118, %v4158
      %4160 = vdwg.mxu0
      %4161 = vmatpush.msra.mxu0 0.0
      %4162 = vmatpush.msra.mxu0 0.0
      %4163 = vmatpush.msra.mxu0 0.0
      %4164 = vmatpush.msra.mxu0 0.0
      %4165 = vmatpush.msra.mxu0 0.0
      %4166 = vmatpush.msra.mxu0 0.0
      %4167 = vmatpush.msra.mxu0 0.0
      %4168 = vmatpush.msra.mxu0 0.0
      %4169 = vmatpush.msra.mxu0 0.0
      %4170 = vmatpush.msra.mxu0 0.0
      %4171 = vmatpush.msra.mxu0 0.0
      %4172 = vmatpush.msra.mxu0 0.0
      %4173 = vmatpush.msra.mxu0 %v3683
      %4174 = vmatpush.msra.mxu0 %v3679
      %4175 = vmatpush.msra.mxu0 %v3675
      %4176 = vmatpush.msra.mxu0 %v3671
      %4177 = vmatmul.f32.gmra.mxu0 %v3694
      %v4178 = vpop.f32.mrf.mxu0
      %v4179 = vadd.f32 %v4138, %v4178
      %4180 = vmatmul.f32.gmra.mxu0 %v3696
      %v4181 = vpop.f32.mrf.mxu0
      %v4182 = vadd.f32 %v4141, %v4181
      %4183 = vmatmul.f32.gmra.mxu0 %v3698
      %v4184 = vpop.f32.mrf.mxu0
      %v4185 = vadd.f32 %v4144, %v4184
      %4186 = vmatmul.f32.gmra.mxu0 %v3700
      %v4187 = vpop.f32.mrf.mxu0
      %v4188 = vadd.f32 %v4147, %v4187
      %4189 = vmatmul.f32.gmra.mxu0 %v3702
      %v4190 = vpop.f32.mrf.mxu0
      %v4191 = vadd.f32 %v4150, %v4190
      %4192 = vmatmul.f32.gmra.mxu0 %v3704
      %v4193 = vpop.f32.mrf.mxu0
      %v4194 = vadd.f32 %v4153, %v4193
      %4195 = vmatmul.f32.gmra.mxu0 %v3706
      %v4196 = vpop.f32.mrf.mxu0
      %v4197 = vadd.f32 %v4156, %v4196
      %4198 = vmatmul.f32.gmra.mxu0 %v3708
      %v4199 = vpop.f32.mrf.mxu0
      %v4200 = vadd.f32 %v4159, %v4199
      %4201 = vdwg.mxu0
      %4202 = vst [vmem:[%s224] sm:$0xff] %v3810
      %4203 = vst [vmem:[%s224 + $0x8] sm:$0xff] %v3933
      %4204 = vst [vmem:[%s224 + $0x10] sm:$0xff] %v4056
      %4205 = vst [vmem:[%s224 + $0x18] sm:$0xff] %v4179
      %4206 = vst [vmem:[%s224 + $0x20] sm:$0xff] %v3813
      %4207 = vst [vmem:[%s224 + $0x28] sm:$0xff] %v3936
      %4208 = vst [vmem:[%s224 + $0x30] sm:$0xff] %v4059
      %4209 = vst [vmem:[%s224 + $0x38] sm:$0xff] %v4182
      %4210 = vst [vmem:[%s224 + $0x40] sm:$0xff] %v3816
      %4211 = vst [vmem:[%s224 + $0x48] sm:$0xff] %v3939
      %4212 = vst [vmem:[%s224 + $0x50] sm:$0xff] %v4062
      %4213 = vst [vmem:[%s224 + $0x58] sm:$0xff] %v4185
      %4214 = vst [vmem:[%s224 + $0x60] sm:$0xff] %v3819
      %4215 = vst [vmem:[%s224 + $0x68] sm:$0xff] %v3942
      %4216 = vst [vmem:[%s224 + $0x70] sm:$0xff] %v4065
      %4217 = vst [vmem:[%s224 + $0x78] sm:$0xff] %v4188
      %4218 = vst [vmem:[%s224 + $0x80] sm:$0xff] %v3822
      %4219 = vst [vmem:[%s224 + $0x88] sm:$0xff] %v3945
      %4220 = vst [vmem:[%s224 + $0x90] sm:$0xff] %v4068
      %4221 = vst [vmem:[%s224 + $0x98] sm:$0xff] %v4191
      %4222 = vst [vmem:[%s224 + $0xa0] sm:$0xff] %v3825
      %4223 = vst [vmem:[%s224 + $0xa8] sm:$0xff] %v3948
      %4224 = vst [vmem:[%s224 + $0xb0] sm:$0xff] %v4071
      %4225 = vst [vmem:[%s224 + $0xb8] sm:$0xff] %v4194
      %4226 = vst [vmem:[%s224 + $0xc0] sm:$0xff] %v3828
      %4227 = vst [vmem:[%s224 + $0xc8] sm:$0xff] %v3951
      %4228 = vst [vmem:[%s224 + $0xd0] sm:$0xff] %v4074
      %4229 = vst [vmem:[%s224 + $0xd8] sm:$0xff] %v4197
      %4230 = vst [vmem:[%s224 + $0xe0] sm:$0xff] %v3831
      %4231 = vst [vmem:[%s224 + $0xe8] sm:$0xff] %v3954
      %4232 = vst [vmem:[%s224 + $0xf0] sm:$0xff] %v4077
      %4233 = vst [vmem:[%s224 + $0xf8] sm:$0xff] %v4200
      %p4234 = scmp.lt.s32.totalorder %s16, 1
      %s4235 = scalar_select %p4234, %s16, 1
      %s4236 = smul.addr %s4235, 32
      %s4237 = smul.addr %s4236, 8
      %s4238 = scalar_lea.vmem %s5, %s4237
      // Predicated region
      $region41: #{_edsr_forward.1} parent=39 // pred_check
        %p4239 = pneg %p144
      $region42: #{_edsr_forward.1} parent=39 // pred_check_branch
        %4241 = sbr.rel (%p4239) target = $region44
      $region43: #{_edsr_forward.1} parent=39 // pred_region
        _
      $region44: #{_edsr_forward.1} parent=39 // pred_fallthru
        _
    $region40: #{_edsr_forward.1} parent=5 // pred_fallthru
      _
    %p4242 = scmp.le.s32.totalorder 2, %s11
    // Predicated region
    $region45: #{_edsr_forward.1} parent=5 // pred_check
      %p4243 = pneg %p4242
    $region46: #{_edsr_forward.1} parent=5 // pred_check_branch
      %4245 = sbr.rel (%p4243) target = $region48
    $region47: #{_edsr_forward.1} parent=5 // pred_region
      %s4246 = ssub.s32 %s11, 2
      // Predicated region
      $region49: #{_edsr_forward.1} parent=47 // pred_check
        %p4247 = pneg %p150
      $region50: #{_edsr_forward.1} parent=47 // pred_check_branch
        %4249 = sbr.rel (%p4247) target = $region52
      $region51: #{_edsr_forward.1} parent=47 // pred_region
        %p4250 = scmp.lt.s32.totalorder %s17, 1
        %s4251 = scalar_select %p4250, %s17, 1
        %s4252 = smul.addr %s4251, 32
        %s4253 = smul.addr %s4252, 8
        %s4254 = scalar_lea.vmem %s5, %s4253
      $region52: #{_edsr_forward.1} parent=47 // pred_fallthru
        _
    $region48: #{_edsr_forward.1} parent=5 // pred_fallthru
      _
  $region6: #{_edsr_forward.1} parent=0 // loop_footer
    %s15 = sadd.s32 1, %s11
  $region7: #{_edsr_forward.1} parent=0 // loop_footer_branch
    %10 = sbr.rel target = $region3
  $region8: #{_edsr_forward.1} parent=0 // loop_exit
    _

</llo_original>
